<compile_context>
chip_gen: v5e
topology: v5e:2x2
jax: 0.10.0
libtpu: 0.0.40
codegen_flags: <defaults>
</compile_context>

<pallas_src>
import jax
import jax.numpy as jnp
from jax import lax
from jax.experimental import pallas as pl
from jax.experimental.pallas import tpu as pltpu


def _make_kernel(td, ho, wo, cin, cout, kd_, kh_, kw_):
    tq = td * ho * wo
    taps = [(kd, kh, kw) for kd in range(kd_) for kh in range(kh_) for kw in range(kw_)]

    def kernel(mids_ref, x_ref, w_ref, b_ref, o_ref):
        # mids_ref : (B,) int32 SMEM       member id per example (used by the index_maps)
        # x_ref    : (1, Dp, Hp, Wp, Cin)  padded slab of one example (bf16 stream)
        # w_ref    : (1, K3, Cin, Cout) f32  per-member weight with alpha/gamma folded in
        # b_ref    : (1, 1, Cout)       f32  per-member bias
        # o_ref    : (1, Cout, TQ)           lane-dense output tile (spatial on lanes)
        del mids_ref
        d0 = pl.program_id(1) * td

        acc = jnp.zeros((tq, cout), jnp.float32)
        # Sum over kernel taps: each tap is a static window slice of the VMEM-resident
        # slab, reshaped (layout no-op since wo % 8 == 0) and fed to a small MXU matmul.
        for idx, (kd, kh, kw) in enumerate(taps):
            xt = x_ref[0, pl.ds(d0 + kd, td), kh:kh + ho, kw:kw + wo, :]
            xt = xt.astype(jnp.float32).reshape(tq, cin)
            acc = acc + jnp.dot(xt, w_ref[0, idx],
                                preferred_element_type=jnp.float32)

        res = acc + b_ref[0]                      # (TQ, Cout) + (1, Cout)
        o_ref[0] = res.T.astype(o_ref.dtype)      # one transpose -> lane-dense store

    return kernel


def batch_ensemble_conv3d(x, weight, alpha, gamma, bias, *, num_members,
                          padding=1, stride=1, d_tile=None,
                          stream_dtype=jnp.bfloat16,
                          vmem_limit_bytes=None):
    """x: (B, Cin, D, H, W) NCDHW. weight: (Cout, Cin, KD, KH, KW) (PyTorch OIDHW)."""
    assert stride == 1, "only stride=1 implemented"
    B, Cin, D, H, W = x.shape
    Cout, Cin_w, KD, KH, KW = weight.shape
    assert Cin_w == Cin
    M = num_members
    n = B // M
    assert n >= 1, "need at least one example per ensemble member"
    extra = B - n * M

    # Per-example member id.  Matches torch.cat([p]*n, dim=1).view(-1, C); the `extra`
    # trailing examples re-use the first `extra` per-example rows, like the module.
    mids = jnp.repeat(jnp.arange(M, dtype=jnp.int32), n)
    if extra:
        mids = jnp.concatenate([mids, mids[:extra]])

    p = padding
    Do = D + 2 * p - KD + 1
    Ho = H + 2 * p - KH + 1
    Wo = W + 2 * p - KW + 1
    # Pad the output width to a sublane multiple so the in-kernel reshape is free; the
    # extra (zero-input) output columns are sliced off in the wrapper.
    Wo_pad = max(8, ((Wo + 7) // 8) * 8)
    Dp, Hp = D + 2 * p, H + 2 * p
    Wp = Wo_pad + KW - 1                       # >= W + 2p

    # Pad once in channels-last layout; stream the big volume in bf16.
    x_l = jnp.transpose(x, (0, 2, 3, 4, 1))
    xp = jnp.pad(x_l, ((0, 0), (p, p), (p, p), (p, Wp - W - p), (0, 0))).astype(stream_dtype)

    K3 = KD * KH * KW
    # Fold alpha (input-channel scale) and gamma (output-channel scale) into per-member
    # weights: conv(x * alpha) * gamma == conv_with(W * alpha[ci] * gamma[co])(x). Exact.
    # Tap order (kd, kh, kw) row-major matches the kernel's tap loop.
    w_perm = jnp.transpose(weight, (2, 3, 4, 1, 0)).reshape(K3, Cin, Cout).astype(jnp.float32)
    w_fold = (w_perm[None, :, :, :]
              * alpha.astype(jnp.float32)[:, None, :, None]
              * gamma.astype(jnp.float32)[:, None, None, :])          # (M, K3, Cin, Cout)
    bias3 = bias.astype(jnp.float32).reshape(M, 1, Cout)

    HW = Ho * Wo_pad
    DHW = Do * HW

    # Spatial tiling along D: pick the smallest divisor of Do whose tile is a 128-lane
    # multiple (keeps the f32 accumulator small); fall back to a single full-depth tile
    # (block == full output axis is always legal).
    if d_tile is None:
        d_tile = Do
        for cand in range(1, Do + 1):
            if Do % cand == 0 and (cand * HW) % 128 == 0:
                d_tile = cand
                break
    assert Do % d_tile == 0, "d_tile must divide the output depth"
    n_dt = Do // d_tile
    TQ = d_tile * HW
    assert TQ % 128 == 0 or n_dt == 1, "output tile must be lane-aligned (128 multiple)"

    kernel = _make_kernel(d_tile, Ho, Wo_pad, Cin, Cout, KD, KH, KW)

    cparams = dict(dimension_semantics=("parallel", "parallel"))
    if vmem_limit_bytes is not None:
        cparams["vmem_limit_bytes"] = vmem_limit_bytes

    out = pl.pallas_call(
        kernel,
        out_shape=jax.ShapeDtypeStruct((B, Cout, DHW), x.dtype),
        grid_spec=pltpu.PrefetchScalarGridSpec(
            num_scalar_prefetch=1,
            grid=(B, n_dt),
            in_specs=[
                # Full padded slab of one example; re-used (no re-DMA) across its D tiles.
                pl.BlockSpec((1, Dp, Hp, Wp, Cin), lambda b, t, m: (b, 0, 0, 0, 0)),
                # Folded per-member weight / bias selected by member id (monotone ids ->
                # the weight block is fetched only M times over the whole grid).
                pl.BlockSpec((1, K3, Cin, Cout), lambda b, t, m: (m[b], 0, 0, 0)),
                pl.BlockSpec((1, 1, Cout), lambda b, t, m: (m[b], 0, 0)),
            ],
            out_specs=pl.BlockSpec((1, Cout, TQ), lambda b, t, m: (b, 0, t)),
        ),
        compiler_params=pltpu.CompilerParams(**cparams),
    )(mids, xp, w_fold, bias3)

    # (B, Cout, Do*Ho*Wo_pad) -> NCDHW is a reshape (+ W slice if padded): no transpose.
    out = out.reshape(B, Cout, Do, Ho, Wo_pad)
    if Wo_pad != Wo:
        out = out[..., :Wo]
    return out


def _reference(x, weight, alpha, gamma, bias, num_members, padding):
    B = x.shape[0]
    n = B // num_members
    a = jnp.repeat(alpha, n, axis=0)[:, :, None, None, None]
    g = jnp.repeat(gamma, n, axis=0)[:, :, None, None, None]
    b = jnp.repeat(bias, n, axis=0)[:, :, None, None, None]
    y = lax.conv_general_dilated(
        x * a, weight, window_strides=(1, 1, 1),
        padding=[(padding, padding)] * 3,
        dimension_numbers=("NCDHW", "OIDHW", "NCDHW"),
        precision=lax.Precision.HIGHEST)
    return y * g + b


# TODO(synk): mixup=True forward branch (host-side np.random per-example member mixing)
# has no clean static-Pallas equivalent and is not implemented (module default: mixup=False).
# TODO(synk): transpose=True (ConvTranspose3d) and stride>1 variants are not kernelized.
# TODO(synk): for very large volumes where one padded example slab exceeds VMEM, the input
# would need halo-tiled manual DMA (pltpu.make_async_copy) instead of a full-slab block,
# and large Cout would want an output-channel tile and/or VMEM-resident accumulator.

if __name__ == "__main__":
    M = 4          # num_members
    B = 8          # batch (2 examples per member)
    Cin, Cout = 4, 8
    D = H = W = 8
    K, pad = 3, 1

    key = jax.random.PRNGKey(0)
    ks = jax.random.split(key, 7)

    x = jax.random.normal(ks[0], (B, Cin, D, H, W), jnp.float32)

    # deterministic "reset_parameters"-style init (synthetic weights)
    fan_in = Cin * K * K * K
    bound = 1.0 / (fan_in ** 0.5)
    weight = jax.random.uniform(ks[1], (Cout, Cin, K, K, K), jnp.float32,
                                minval=-bound, maxval=bound)
    alpha = 1.0 + 0.5 * jax.random.normal(ks[2], (M, Cin), jnp.float32)
    gamma = 1.0 + 0.5 * jax.random.normal(ks[3], (M, Cout), jnp.float32)
    alpha = alpha * jnp.where(jax.random.bernoulli(ks[4], 0.5, (M, Cin)), 1.0, -1.0)
    gamma = gamma * jnp.where(jax.random.bernoulli(ks[5], 0.5, (M, Cout)), 1.0, -1.0)
    bias = jax.random.uniform(ks[6], (M, Cout), jnp.float32,
                              minval=-bound, maxval=bound)

    out = batch_ensemble_conv3d(x, weight, alpha, gamma, bias,
                                num_members=M, padding=pad)
    out = jax.block_until_ready(out)

    ref = _reference(x, weight, alpha, gamma, bias, M, pad)
    assert out.shape == (B, Cout, D, H, W)
    assert bool(jnp.all(jnp.isfinite(out)))
    # Activations are streamed in bf16 (f32 accumulation) vs. an all-f32 HIGHEST-precision
    # reference, so compare with a tolerance that covers bf16 input rounding.
    max_err = float(jnp.max(jnp.abs(out - ref)))
    assert jnp.allclose(out, ref, atol=3e-2, rtol=3e-2), max_err

    print("KERNEL_OK")
</pallas_src>

<mosaic_0001>
module attributes {stable_mosaic.version = 11 : i64} {
  func.func @kernel(%arg0: i32, %arg1: i32, %arg2: memref<8xi32, #tpu.memory_space<smem>>, %arg3: memref<1x10x10x10x4xbf16, #tpu.memory_space<vmem>>, %arg4: memref<1x27x4x8xf32, #tpu.memory_space<vmem>>, %arg5: memref<1x1x8xf32, #tpu.memory_space<vmem>>, %arg6: memref<1x8x128xf32, #tpu.memory_space<vmem>>) attributes {dimension_semantics = [#tpu.dimension_semantics<parallel>, #tpu.dimension_semantics<parallel>], iteration_bounds = array<i64: 8, 4>, scalar_prefetch = 1 : i64, scratch_operands = 0 : i64, tpu.core_type = #tpu.core_type<tc>, window_params = [{transform_indices = @transform_0, window_bounds = array<i64: 1, 10, 10, 10, 4>}, {transform_indices = @transform_1, window_bounds = array<i64: 1, 27, 4, 8>}, {transform_indices = @transform_2, window_bounds = array<i64: 1, 1, 8>}, {transform_indices = @transform_3, window_bounds = array<i64: 1, 8, 128>}]} {
    %c2_i32 = arith.constant 2 : i32
    %0 = arith.muli %arg1, %c2_i32 : i32
    %cst = arith.constant 0.000000e+00 : f32
    %1 = vector.broadcast %cst : f32 to vector<128x8xf32>
    %c0_i32 = arith.constant 0 : i32
    %2 = arith.addi %0, %c0_i32 : i32
    %c0 = arith.constant 0 : index
    %3 = arith.index_cast %2 : i32 to index
    %c0_0 = arith.constant 0 : index
    %c0_1 = arith.constant 0 : index
    %c0_2 = arith.constant 0 : index
    %4 = vector.load %arg3[%c0, %3, %c0_0, %c0_1, %c0_2] : memref<1x10x10x10x4xbf16, #tpu.memory_space<vmem>>, vector<1x2x8x8x4xbf16>
    %5 = vector.shape_cast %4 : vector<1x2x8x8x4xbf16> to vector<2x8x8x4xbf16>
    %6 = arith.extf %5 : vector<2x8x8x4xbf16> to vector<2x8x8x4xf32>
    %7 = vector.shape_cast %6 : vector<2x8x8x4xf32> to vector<128x4xf32>
    %c0_3 = arith.constant 0 : index
    %c0_4 = arith.constant 0 : index
    %c0_5 = arith.constant 0 : index
    %c0_6 = arith.constant 0 : index
    %8 = vector.load %arg4[%c0_3, %c0_4, %c0_5, %c0_6] : memref<1x27x4x8xf32, #tpu.memory_space<vmem>>, vector<1x1x4x8xf32>
    %9 = vector.shape_cast %8 : vector<1x1x4x8xf32> to vector<4x8xf32>
    %cst_7 = arith.constant dense<0.000000e+00> : vector<128x8xf32>
    %10 = tpu.matmul %7, %9, %cst_7 {dimension_numbers = #tpu.dot_dimension_numbers<[1], [0], [0], [1], [0, 0, 1, 1], [], []>} : vector<128x4xf32>, vector<4x8xf32>, vector<128x8xf32> -> vector<128x8xf32>
    %11 = arith.addf %1, %10 : vector<128x8xf32>
    %c0_i32_8 = arith.constant 0 : i32
    %12 = arith.addi %0, %c0_i32_8 : i32
    %c0_9 = arith.constant 0 : index
    %13 = arith.index_cast %12 : i32 to index
    %c0_10 = arith.constant 0 : index
    %c1 = arith.constant 1 : index
    %c0_11 = arith.constant 0 : index
    %14 = vector.load %arg3[%c0_9, %13, %c0_10, %c1, %c0_11] : memref<1x10x10x10x4xbf16, #tpu.memory_space<vmem>>, vector<1x2x8x8x4xbf16>
    %15 = vector.shape_cast %14 : vector<1x2x8x8x4xbf16> to vector<2x8x8x4xbf16>
    %16 = arith.extf %15 : vector<2x8x8x4xbf16> to vector<2x8x8x4xf32>
    %17 = vector.shape_cast %16 : vector<2x8x8x4xf32> to vector<128x4xf32>
    %c0_12 = arith.constant 0 : index
    %c1_13 = arith.constant 1 : index
    %c0_14 = arith.constant 0 : index
    %c0_15 = arith.constant 0 : index
    %18 = vector.load %arg4[%c0_12, %c1_13, %c0_14, %c0_15] : memref<1x27x4x8xf32, #tpu.memory_space<vmem>>, vector<1x1x4x8xf32>
    %19 = vector.shape_cast %18 : vector<1x1x4x8xf32> to vector<4x8xf32>
    %cst_16 = arith.constant dense<0.000000e+00> : vector<128x8xf32>
    %20 = tpu.matmul %17, %19, %cst_16 {dimension_numbers = #tpu.dot_dimension_numbers<[1], [0], [0], [1], [0, 0, 1, 1], [], []>} : vector<128x4xf32>, vector<4x8xf32>, vector<128x8xf32> -> vector<128x8xf32>
    %21 = arith.addf %11, %20 : vector<128x8xf32>
    %c0_i32_17 = arith.constant 0 : i32
    %22 = arith.addi %0, %c0_i32_17 : i32
    %c0_18 = arith.constant 0 : index
    %23 = arith.index_cast %22 : i32 to index
    %c0_19 = arith.constant 0 : index
    %c2 = arith.constant 2 : index
    %c0_20 = arith.constant 0 : index
    %24 = vector.load %arg3[%c0_18, %23, %c0_19, %c2, %c0_20] : memref<1x10x10x10x4xbf16, #tpu.memory_space<vmem>>, vector<1x2x8x8x4xbf16>
    %25 = vector.shape_cast %24 : vector<1x2x8x8x4xbf16> to vector<2x8x8x4xbf16>
    %26 = arith.extf %25 : vector<2x8x8x4xbf16> to vector<2x8x8x4xf32>
    %27 = vector.shape_cast %26 : vector<2x8x8x4xf32> to vector<128x4xf32>
    %c0_21 = arith.constant 0 : index
    %c2_22 = arith.constant 2 : index
    %c0_23 = arith.constant 0 : index
    %c0_24 = arith.constant 0 : index
    %28 = vector.load %arg4[%c0_21, %c2_22, %c0_23, %c0_24] : memref<1x27x4x8xf32, #tpu.memory_space<vmem>>, vector<1x1x4x8xf32>
    %29 = vector.shape_cast %28 : vector<1x1x4x8xf32> to vector<4x8xf32>
    %cst_25 = arith.constant dense<0.000000e+00> : vector<128x8xf32>
    %30 = tpu.matmul %27, %29, %cst_25 {dimension_numbers = #tpu.dot_dimension_numbers<[1], [0], [0], [1], [0, 0, 1, 1], [], []>} : vector<128x4xf32>, vector<4x8xf32>, vector<128x8xf32> -> vector<128x8xf32>
    %31 = arith.addf %21, %30 : vector<128x8xf32>
    %c0_i32_26 = arith.constant 0 : i32
    %32 = arith.addi %0, %c0_i32_26 : i32
    %c0_27 = arith.constant 0 : index
    %33 = arith.index_cast %32 : i32 to index
    %c1_28 = arith.constant 1 : index
    %c0_29 = arith.constant 0 : index
    %c0_30 = arith.constant 0 : index
    %34 = vector.load %arg3[%c0_27, %33, %c1_28, %c0_29, %c0_30] : memref<1x10x10x10x4xbf16, #tpu.memory_space<vmem>>, vector<1x2x8x8x4xbf16>
    %35 = vector.shape_cast %34 : vector<1x2x8x8x4xbf16> to vector<2x8x8x4xbf16>
    %36 = arith.extf %35 : vector<2x8x8x4xbf16> to vector<2x8x8x4xf32>
    %37 = vector.shape_cast %36 : vector<2x8x8x4xf32> to vector<128x4xf32>
    %c0_31 = arith.constant 0 : index
    %c3 = arith.constant 3 : index
    %c0_32 = arith.constant 0 : index
    %c0_33 = arith.constant 0 : index
    %38 = vector.load %arg4[%c0_31, %c3, %c0_32, %c0_33] : memref<1x27x4x8xf32, #tpu.memory_space<vmem>>, vector<1x1x4x8xf32>
    %39 = vector.shape_cast %38 : vector<1x1x4x8xf32> to vector<4x8xf32>
    %cst_34 = arith.constant dense<0.000000e+00> : vector<128x8xf32>
    %40 = tpu.matmul %37, %39, %cst_34 {dimension_numbers = #tpu.dot_dimension_numbers<[1], [0], [0], [1], [0, 0, 1, 1], [], []>} : vector<128x4xf32>, vector<4x8xf32>, vector<128x8xf32> -> vector<128x8xf32>
    %41 = arith.addf %31, %40 : vector<128x8xf32>
    %c0_i32_35 = arith.constant 0 : i32
    %42 = arith.addi %0, %c0_i32_35 : i32
    %c0_36 = arith.constant 0 : index
    %43 = arith.index_cast %42 : i32 to index
    %c1_37 = arith.constant 1 : index
    %c1_38 = arith.constant 1 : index
    %c0_39 = arith.constant 0 : index
    %44 = vector.load %arg3[%c0_36, %43, %c1_37, %c1_38, %c0_39] : memref<1x10x10x10x4xbf16, #tpu.memory_space<vmem>>, vector<1x2x8x8x4xbf16>
    %45 = vector.shape_cast %44 : vector<1x2x8x8x4xbf16> to vector<2x8x8x4xbf16>
    %46 = arith.extf %45 : vector<2x8x8x4xbf16> to vector<2x8x8x4xf32>
    %47 = vector.shape_cast %46 : vector<2x8x8x4xf32> to vector<128x4xf32>
    %c0_40 = arith.constant 0 : index
    %c4 = arith.constant 4 : index
    %c0_41 = arith.constant 0 : index
    %c0_42 = arith.constant 0 : index
    %48 = vector.load %arg4[%c0_40, %c4, %c0_41, %c0_42] : memref<1x27x4x8xf32, #tpu.memory_space<vmem>>, vector<1x1x4x8xf32>
    %49 = vector.shape_cast %48 : vector<1x1x4x8xf32> to vector<4x8xf32>
    %cst_43 = arith.constant dense<0.000000e+00> : vector<128x8xf32>
    %50 = tpu.matmul %47, %49, %cst_43 {dimension_numbers = #tpu.dot_dimension_numbers<[1], [0], [0], [1], [0, 0, 1, 1], [], []>} : vector<128x4xf32>, vector<4x8xf32>, vector<128x8xf32> -> vector<128x8xf32>
    %51 = arith.addf %41, %50 : vector<128x8xf32>
    %c0_i32_44 = arith.constant 0 : i32
    %52 = arith.addi %0, %c0_i32_44 : i32
    %c0_45 = arith.constant 0 : index
    %53 = arith.index_cast %52 : i32 to index
    %c1_46 = arith.constant 1 : index
    %c2_47 = arith.constant 2 : index
    %c0_48 = arith.constant 0 : index
    %54 = vector.load %arg3[%c0_45, %53, %c1_46, %c2_47, %c0_48] : memref<1x10x10x10x4xbf16, #tpu.memory_space<vmem>>, vector<1x2x8x8x4xbf16>
    %55 = vector.shape_cast %54 : vector<1x2x8x8x4xbf16> to vector<2x8x8x4xbf16>
    %56 = arith.extf %55 : vector<2x8x8x4xbf16> to vector<2x8x8x4xf32>
    %57 = vector.shape_cast %56 : vector<2x8x8x4xf32> to vector<128x4xf32>
    %c0_49 = arith.constant 0 : index
    %c5 = arith.constant 5 : index
    %c0_50 = arith.constant 0 : index
    %c0_51 = arith.constant 0 : index
    %58 = vector.load %arg4[%c0_49, %c5, %c0_50, %c0_51] : memref<1x27x4x8xf32, #tpu.memory_space<vmem>>, vector<1x1x4x8xf32>
    %59 = vector.shape_cast %58 : vector<1x1x4x8xf32> to vector<4x8xf32>
    %cst_52 = arith.constant dense<0.000000e+00> : vector<128x8xf32>
    %60 = tpu.matmul %57, %59, %cst_52 {dimension_numbers = #tpu.dot_dimension_numbers<[1], [0], [0], [1], [0, 0, 1, 1], [], []>} : vector<128x4xf32>, vector<4x8xf32>, vector<128x8xf32> -> vector<128x8xf32>
    %61 = arith.addf %51, %60 : vector<128x8xf32>
    %c0_i32_53 = arith.constant 0 : i32
    %62 = arith.addi %0, %c0_i32_53 : i32
    %c0_54 = arith.constant 0 : index
    %63 = arith.index_cast %62 : i32 to index
    %c2_55 = arith.constant 2 : index
    %c0_56 = arith.constant 0 : index
    %c0_57 = arith.constant 0 : index
    %64 = vector.load %arg3[%c0_54, %63, %c2_55, %c0_56, %c0_57] : memref<1x10x10x10x4xbf16, #tpu.memory_space<vmem>>, vector<1x2x8x8x4xbf16>
    %65 = vector.shape_cast %64 : vector<1x2x8x8x4xbf16> to vector<2x8x8x4xbf16>
    %66 = arith.extf %65 : vector<2x8x8x4xbf16> to vector<2x8x8x4xf32>
    %67 = vector.shape_cast %66 : vector<2x8x8x4xf32> to vector<128x4xf32>
    %c0_58 = arith.constant 0 : index
    %c6 = arith.constant 6 : index
    %c0_59 = arith.constant 0 : index
    %c0_60 = arith.constant 0 : index
    %68 = vector.load %arg4[%c0_58, %c6, %c0_59, %c0_60] : memref<1x27x4x8xf32, #tpu.memory_space<vmem>>, vector<1x1x4x8xf32>
    %69 = vector.shape_cast %68 : vector<1x1x4x8xf32> to vector<4x8xf32>
    %cst_61 = arith.constant dense<0.000000e+00> : vector<128x8xf32>
    %70 = tpu.matmul %67, %69, %cst_61 {dimension_numbers = #tpu.dot_dimension_numbers<[1], [0], [0], [1], [0, 0, 1, 1], [], []>} : vector<128x4xf32>, vector<4x8xf32>, vector<128x8xf32> -> vector<128x8xf32>
    %71 = arith.addf %61, %70 : vector<128x8xf32>
    %c0_i32_62 = arith.constant 0 : i32
    %72 = arith.addi %0, %c0_i32_62 : i32
    %c0_63 = arith.constant 0 : index
    %73 = arith.index_cast %72 : i32 to index
    %c2_64 = arith.constant 2 : index
    %c1_65 = arith.constant 1 : index
    %c0_66 = arith.constant 0 : index
    %74 = vector.load %arg3[%c0_63, %73, %c2_64, %c1_65, %c0_66] : memref<1x10x10x10x4xbf16, #tpu.memory_space<vmem>>, vector<1x2x8x8x4xbf16>
    %75 = vector.shape_cast %74 : vector<1x2x8x8x4xbf16> to vector<2x8x8x4xbf16>
    %76 = arith.extf %75 : vector<2x8x8x4xbf16> to vector<2x8x8x4xf32>
    %77 = vector.shape_cast %76 : vector<2x8x8x4xf32> to vector<128x4xf32>
    %c0_67 = arith.constant 0 : index
    %c7 = arith.constant 7 : index
    %c0_68 = arith.constant 0 : index
    %c0_69 = arith.constant 0 : index
    %78 = vector.load %arg4[%c0_67, %c7, %c0_68, %c0_69] : memref<1x27x4x8xf32, #tpu.memory_space<vmem>>, vector<1x1x4x8xf32>
    %79 = vector.shape_cast %78 : vector<1x1x4x8xf32> to vector<4x8xf32>
    %cst_70 = arith.constant dense<0.000000e+00> : vector<128x8xf32>
    %80 = tpu.matmul %77, %79, %cst_70 {dimension_numbers = #tpu.dot_dimension_numbers<[1], [0], [0], [1], [0, 0, 1, 1], [], []>} : vector<128x4xf32>, vector<4x8xf32>, vector<128x8xf32> -> vector<128x8xf32>
    %81 = arith.addf %71, %80 : vector<128x8xf32>
    %c0_i32_71 = arith.constant 0 : i32
    %82 = arith.addi %0, %c0_i32_71 : i32
    %c0_72 = arith.constant 0 : index
    %83 = arith.index_cast %82 : i32 to index
    %c2_73 = arith.constant 2 : index
    %c2_74 = arith.constant 2 : index
    %c0_75 = arith.constant 0 : index
    %84 = vector.load %arg3[%c0_72, %83, %c2_73, %c2_74, %c0_75] : memref<1x10x10x10x4xbf16, #tpu.memory_space<vmem>>, vector<1x2x8x8x4xbf16>
    %85 = vector.shape_cast %84 : vector<1x2x8x8x4xbf16> to vector<2x8x8x4xbf16>
    %86 = arith.extf %85 : vector<2x8x8x4xbf16> to vector<2x8x8x4xf32>
    %87 = vector.shape_cast %86 : vector<2x8x8x4xf32> to vector<128x4xf32>
    %c0_76 = arith.constant 0 : index
    %c8 = arith.constant 8 : index
    %c0_77 = arith.constant 0 : index
    %c0_78 = arith.constant 0 : index
    %88 = vector.load %arg4[%c0_76, %c8, %c0_77, %c0_78] : memref<1x27x4x8xf32, #tpu.memory_space<vmem>>, vector<1x1x4x8xf32>
    %89 = vector.shape_cast %88 : vector<1x1x4x8xf32> to vector<4x8xf32>
    %cst_79 = arith.constant dense<0.000000e+00> : vector<128x8xf32>
    %90 = tpu.matmul %87, %89, %cst_79 {dimension_numbers = #tpu.dot_dimension_numbers<[1], [0], [0], [1], [0, 0, 1, 1], [], []>} : vector<128x4xf32>, vector<4x8xf32>, vector<128x8xf32> -> vector<128x8xf32>
    %91 = arith.addf %81, %90 : vector<128x8xf32>
    %c1_i32 = arith.constant 1 : i32
    %92 = arith.addi %0, %c1_i32 : i32
    %c0_80 = arith.constant 0 : index
    %93 = arith.index_cast %92 : i32 to index
    %c0_81 = arith.constant 0 : index
    %c0_82 = arith.constant 0 : index
    %c0_83 = arith.constant 0 : index
    %94 = vector.load %arg3[%c0_80, %93, %c0_81, %c0_82, %c0_83] : memref<1x10x10x10x4xbf16, #tpu.memory_space<vmem>>, vector<1x2x8x8x4xbf16>
    %95 = vector.shape_cast %94 : vector<1x2x8x8x4xbf16> to vector<2x8x8x4xbf16>
    %96 = arith.extf %95 : vector<2x8x8x4xbf16> to vector<2x8x8x4xf32>
    %97 = vector.shape_cast %96 : vector<2x8x8x4xf32> to vector<128x4xf32>
    %c0_84 = arith.constant 0 : index
    %c9 = arith.constant 9 : index
    %c0_85 = arith.constant 0 : index
    %c0_86 = arith.constant 0 : index
    %98 = vector.load %arg4[%c0_84, %c9, %c0_85, %c0_86] : memref<1x27x4x8xf32, #tpu.memory_space<vmem>>, vector<1x1x4x8xf32>
    %99 = vector.shape_cast %98 : vector<1x1x4x8xf32> to vector<4x8xf32>
    %cst_87 = arith.constant dense<0.000000e+00> : vector<128x8xf32>
    %100 = tpu.matmul %97, %99, %cst_87 {dimension_numbers = #tpu.dot_dimension_numbers<[1], [0], [0], [1], [0, 0, 1, 1], [], []>} : vector<128x4xf32>, vector<4x8xf32>, vector<128x8xf32> -> vector<128x8xf32>
    %101 = arith.addf %91, %100 : vector<128x8xf32>
    %c1_i32_88 = arith.constant 1 : i32
    %102 = arith.addi %0, %c1_i32_88 : i32
    %c0_89 = arith.constant 0 : index
    %103 = arith.index_cast %102 : i32 to index
    %c0_90 = arith.constant 0 : index
    %c1_91 = arith.constant 1 : index
    %c0_92 = arith.constant 0 : index
    %104 = vector.load %arg3[%c0_89, %103, %c0_90, %c1_91, %c0_92] : memref<1x10x10x10x4xbf16, #tpu.memory_space<vmem>>, vector<1x2x8x8x4xbf16>
    %105 = vector.shape_cast %104 : vector<1x2x8x8x4xbf16> to vector<2x8x8x4xbf16>
    %106 = arith.extf %105 : vector<2x8x8x4xbf16> to vector<2x8x8x4xf32>
    %107 = vector.shape_cast %106 : vector<2x8x8x4xf32> to vector<128x4xf32>
    %c0_93 = arith.constant 0 : index
    %c10 = arith.constant 10 : index
    %c0_94 = arith.constant 0 : index
    %c0_95 = arith.constant 0 : index
    %108 = vector.load %arg4[%c0_93, %c10, %c0_94, %c0_95] : memref<1x27x4x8xf32, #tpu.memory_space<vmem>>, vector<1x1x4x8xf32>
    %109 = vector.shape_cast %108 : vector<1x1x4x8xf32> to vector<4x8xf32>
    %cst_96 = arith.constant dense<0.000000e+00> : vector<128x8xf32>
    %110 = tpu.matmul %107, %109, %cst_96 {dimension_numbers = #tpu.dot_dimension_numbers<[1], [0], [0], [1], [0, 0, 1, 1], [], []>} : vector<128x4xf32>, vector<4x8xf32>, vector<128x8xf32> -> vector<128x8xf32>
    %111 = arith.addf %101, %110 : vector<128x8xf32>
    %c1_i32_97 = arith.constant 1 : i32
    %112 = arith.addi %0, %c1_i32_97 : i32
    %c0_98 = arith.constant 0 : index
    %113 = arith.index_cast %112 : i32 to index
    %c0_99 = arith.constant 0 : index
    %c2_100 = arith.constant 2 : index
    %c0_101 = arith.constant 0 : index
    %114 = vector.load %arg3[%c0_98, %113, %c0_99, %c2_100, %c0_101] : memref<1x10x10x10x4xbf16, #tpu.memory_space<vmem>>, vector<1x2x8x8x4xbf16>
    %115 = vector.shape_cast %114 : vector<1x2x8x8x4xbf16> to vector<2x8x8x4xbf16>
    %116 = arith.extf %115 : vector<2x8x8x4xbf16> to vector<2x8x8x4xf32>
    %117 = vector.shape_cast %116 : vector<2x8x8x4xf32> to vector<128x4xf32>
    %c0_102 = arith.constant 0 : index
    %c11 = arith.constant 11 : index
    %c0_103 = arith.constant 0 : index
    %c0_104 = arith.constant 0 : index
    %118 = vector.load %arg4[%c0_102, %c11, %c0_103, %c0_104] : memref<1x27x4x8xf32, #tpu.memory_space<vmem>>, vector<1x1x4x8xf32>
    %119 = vector.shape_cast %118 : vector<1x1x4x8xf32> to vector<4x8xf32>
    %cst_105 = arith.constant dense<0.000000e+00> : vector<128x8xf32>
    %120 = tpu.matmul %117, %119, %cst_105 {dimension_numbers = #tpu.dot_dimension_numbers<[1], [0], [0], [1], [0, 0, 1, 1], [], []>} : vector<128x4xf32>, vector<4x8xf32>, vector<128x8xf32> -> vector<128x8xf32>
    %121 = arith.addf %111, %120 : vector<128x8xf32>
    %c1_i32_106 = arith.constant 1 : i32
    %122 = arith.addi %0, %c1_i32_106 : i32
    %c0_107 = arith.constant 0 : index
    %123 = arith.index_cast %122 : i32 to index
    %c1_108 = arith.constant 1 : index
    %c0_109 = arith.constant 0 : index
    %c0_110 = arith.constant 0 : index
    %124 = vector.load %arg3[%c0_107, %123, %c1_108, %c0_109, %c0_110] : memref<1x10x10x10x4xbf16, #tpu.memory_space<vmem>>, vector<1x2x8x8x4xbf16>
    %125 = vector.shape_cast %124 : vector<1x2x8x8x4xbf16> to vector<2x8x8x4xbf16>
    %126 = arith.extf %125 : vector<2x8x8x4xbf16> to vector<2x8x8x4xf32>
    %127 = vector.shape_cast %126 : vector<2x8x8x4xf32> to vector<128x4xf32>
    %c0_111 = arith.constant 0 : index
    %c12 = arith.constant 12 : index
    %c0_112 = arith.constant 0 : index
    %c0_113 = arith.constant 0 : index
    %128 = vector.load %arg4[%c0_111, %c12, %c0_112, %c0_113] : memref<1x27x4x8xf32, #tpu.memory_space<vmem>>, vector<1x1x4x8xf32>
    %129 = vector.shape_cast %128 : vector<1x1x4x8xf32> to vector<4x8xf32>
    %cst_114 = arith.constant dense<0.000000e+00> : vector<128x8xf32>
    %130 = tpu.matmul %127, %129, %cst_114 {dimension_numbers = #tpu.dot_dimension_numbers<[1], [0], [0], [1], [0, 0, 1, 1], [], []>} : vector<128x4xf32>, vector<4x8xf32>, vector<128x8xf32> -> vector<128x8xf32>
    %131 = arith.addf %121, %130 : vector<128x8xf32>
    %c1_i32_115 = arith.constant 1 : i32
    %132 = arith.addi %0, %c1_i32_115 : i32
    %c0_116 = arith.constant 0 : index
    %133 = arith.index_cast %132 : i32 to index
    %c1_117 = arith.constant 1 : index
    %c1_118 = arith.constant 1 : index
    %c0_119 = arith.constant 0 : index
    %134 = vector.load %arg3[%c0_116, %133, %c1_117, %c1_118, %c0_119] : memref<1x10x10x10x4xbf16, #tpu.memory_space<vmem>>, vector<1x2x8x8x4xbf16>
    %135 = vector.shape_cast %134 : vector<1x2x8x8x4xbf16> to vector<2x8x8x4xbf16>
    %136 = arith.extf %135 : vector<2x8x8x4xbf16> to vector<2x8x8x4xf32>
    %137 = vector.shape_cast %136 : vector<2x8x8x4xf32> to vector<128x4xf32>
    %c0_120 = arith.constant 0 : index
    %c13 = arith.constant 13 : index
    %c0_121 = arith.constant 0 : index
    %c0_122 = arith.constant 0 : index
    %138 = vector.load %arg4[%c0_120, %c13, %c0_121, %c0_122] : memref<1x27x4x8xf32, #tpu.memory_space<vmem>>, vector<1x1x4x8xf32>
    %139 = vector.shape_cast %138 : vector<1x1x4x8xf32> to vector<4x8xf32>
    %cst_123 = arith.constant dense<0.000000e+00> : vector<128x8xf32>
    %140 = tpu.matmul %137, %139, %cst_123 {dimension_numbers = #tpu.dot_dimension_numbers<[1], [0], [0], [1], [0, 0, 1, 1], [], []>} : vector<128x4xf32>, vector<4x8xf32>, vector<128x8xf32> -> vector<128x8xf32>
    %141 = arith.addf %131, %140 : vector<128x8xf32>
    %c1_i32_124 = arith.constant 1 : i32
    %142 = arith.addi %0, %c1_i32_124 : i32
    %c0_125 = arith.constant 0 : index
    %143 = arith.index_cast %142 : i32 to index
    %c1_126 = arith.constant 1 : index
    %c2_127 = arith.constant 2 : index
    %c0_128 = arith.constant 0 : index
    %144 = vector.load %arg3[%c0_125, %143, %c1_126, %c2_127, %c0_128] : memref<1x10x10x10x4xbf16, #tpu.memory_space<vmem>>, vector<1x2x8x8x4xbf16>
    %145 = vector.shape_cast %144 : vector<1x2x8x8x4xbf16> to vector<2x8x8x4xbf16>
    %146 = arith.extf %145 : vector<2x8x8x4xbf16> to vector<2x8x8x4xf32>
    %147 = vector.shape_cast %146 : vector<2x8x8x4xf32> to vector<128x4xf32>
    %c0_129 = arith.constant 0 : index
    %c14 = arith.constant 14 : index
    %c0_130 = arith.constant 0 : index
    %c0_131 = arith.constant 0 : index
    %148 = vector.load %arg4[%c0_129, %c14, %c0_130, %c0_131] : memref<1x27x4x8xf32, #tpu.memory_space<vmem>>, vector<1x1x4x8xf32>
    %149 = vector.shape_cast %148 : vector<1x1x4x8xf32> to vector<4x8xf32>
    %cst_132 = arith.constant dense<0.000000e+00> : vector<128x8xf32>
    %150 = tpu.matmul %147, %149, %cst_132 {dimension_numbers = #tpu.dot_dimension_numbers<[1], [0], [0], [1], [0, 0, 1, 1], [], []>} : vector<128x4xf32>, vector<4x8xf32>, vector<128x8xf32> -> vector<128x8xf32>
    %151 = arith.addf %141, %150 : vector<128x8xf32>
    %c1_i32_133 = arith.constant 1 : i32
    %152 = arith.addi %0, %c1_i32_133 : i32
    %c0_134 = arith.constant 0 : index
    %153 = arith.index_cast %152 : i32 to index
    %c2_135 = arith.constant 2 : index
    %c0_136 = arith.constant 0 : index
    %c0_137 = arith.constant 0 : index
    %154 = vector.load %arg3[%c0_134, %153, %c2_135, %c0_136, %c0_137] : memref<1x10x10x10x4xbf16, #tpu.memory_space<vmem>>, vector<1x2x8x8x4xbf16>
    %155 = vector.shape_cast %154 : vector<1x2x8x8x4xbf16> to vector<2x8x8x4xbf16>
    %156 = arith.extf %155 : vector<2x8x8x4xbf16> to vector<2x8x8x4xf32>
    %157 = vector.shape_cast %156 : vector<2x8x8x4xf32> to vector<128x4xf32>
    %c0_138 = arith.constant 0 : index
    %c15 = arith.constant 15 : index
    %c0_139 = arith.constant 0 : index
    %c0_140 = arith.constant 0 : index
    %158 = vector.load %arg4[%c0_138, %c15, %c0_139, %c0_140] : memref<1x27x4x8xf32, #tpu.memory_space<vmem>>, vector<1x1x4x8xf32>
    %159 = vector.shape_cast %158 : vector<1x1x4x8xf32> to vector<4x8xf32>
    %cst_141 = arith.constant dense<0.000000e+00> : vector<128x8xf32>
    %160 = tpu.matmul %157, %159, %cst_141 {dimension_numbers = #tpu.dot_dimension_numbers<[1], [0], [0], [1], [0, 0, 1, 1], [], []>} : vector<128x4xf32>, vector<4x8xf32>, vector<128x8xf32> -> vector<128x8xf32>
    %161 = arith.addf %151, %160 : vector<128x8xf32>
    %c1_i32_142 = arith.constant 1 : i32
    %162 = arith.addi %0, %c1_i32_142 : i32
    %c0_143 = arith.constant 0 : index
    %163 = arith.index_cast %162 : i32 to index
    %c2_144 = arith.constant 2 : index
    %c1_145 = arith.constant 1 : index
    %c0_146 = arith.constant 0 : index
    %164 = vector.load %arg3[%c0_143, %163, %c2_144, %c1_145, %c0_146] : memref<1x10x10x10x4xbf16, #tpu.memory_space<vmem>>, vector<1x2x8x8x4xbf16>
    %165 = vector.shape_cast %164 : vector<1x2x8x8x4xbf16> to vector<2x8x8x4xbf16>
    %166 = arith.extf %165 : vector<2x8x8x4xbf16> to vector<2x8x8x4xf32>
    %167 = vector.shape_cast %166 : vector<2x8x8x4xf32> to vector<128x4xf32>
    %c0_147 = arith.constant 0 : index
    %c16 = arith.constant 16 : index
    %c0_148 = arith.constant 0 : index
    %c0_149 = arith.constant 0 : index
    %168 = vector.load %arg4[%c0_147, %c16, %c0_148, %c0_149] : memref<1x27x4x8xf32, #tpu.memory_space<vmem>>, vector<1x1x4x8xf32>
    %169 = vector.shape_cast %168 : vector<1x1x4x8xf32> to vector<4x8xf32>
    %cst_150 = arith.constant dense<0.000000e+00> : vector<128x8xf32>
    %170 = tpu.matmul %167, %169, %cst_150 {dimension_numbers = #tpu.dot_dimension_numbers<[1], [0], [0], [1], [0, 0, 1, 1], [], []>} : vector<128x4xf32>, vector<4x8xf32>, vector<128x8xf32> -> vector<128x8xf32>
    %171 = arith.addf %161, %170 : vector<128x8xf32>
    %c1_i32_151 = arith.constant 1 : i32
    %172 = arith.addi %0, %c1_i32_151 : i32
    %c0_152 = arith.constant 0 : index
    %173 = arith.index_cast %172 : i32 to index
    %c2_153 = arith.constant 2 : index
    %c2_154 = arith.constant 2 : index
    %c0_155 = arith.constant 0 : index
    %174 = vector.load %arg3[%c0_152, %173, %c2_153, %c2_154, %c0_155] : memref<1x10x10x10x4xbf16, #tpu.memory_space<vmem>>, vector<1x2x8x8x4xbf16>
    %175 = vector.shape_cast %174 : vector<1x2x8x8x4xbf16> to vector<2x8x8x4xbf16>
    %176 = arith.extf %175 : vector<2x8x8x4xbf16> to vector<2x8x8x4xf32>
    %177 = vector.shape_cast %176 : vector<2x8x8x4xf32> to vector<128x4xf32>
    %c0_156 = arith.constant 0 : index
    %c17 = arith.constant 17 : index
    %c0_157 = arith.constant 0 : index
    %c0_158 = arith.constant 0 : index
    %178 = vector.load %arg4[%c0_156, %c17, %c0_157, %c0_158] : memref<1x27x4x8xf32, #tpu.memory_space<vmem>>, vector<1x1x4x8xf32>
    %179 = vector.shape_cast %178 : vector<1x1x4x8xf32> to vector<4x8xf32>
    %cst_159 = arith.constant dense<0.000000e+00> : vector<128x8xf32>
    %180 = tpu.matmul %177, %179, %cst_159 {dimension_numbers = #tpu.dot_dimension_numbers<[1], [0], [0], [1], [0, 0, 1, 1], [], []>} : vector<128x4xf32>, vector<4x8xf32>, vector<128x8xf32> -> vector<128x8xf32>
    %181 = arith.addf %171, %180 : vector<128x8xf32>
    %c2_i32_160 = arith.constant 2 : i32
    %182 = arith.addi %0, %c2_i32_160 : i32
    %c0_161 = arith.constant 0 : index
    %183 = arith.index_cast %182 : i32 to index
    %c0_162 = arith.constant 0 : index
    %c0_163 = arith.constant 0 : index
    %c0_164 = arith.constant 0 : index
    %184 = vector.load %arg3[%c0_161, %183, %c0_162, %c0_163, %c0_164] : memref<1x10x10x10x4xbf16, #tpu.memory_space<vmem>>, vector<1x2x8x8x4xbf16>
    %185 = vector.shape_cast %184 : vector<1x2x8x8x4xbf16> to vector<2x8x8x4xbf16>
    %186 = arith.extf %185 : vector<2x8x8x4xbf16> to vector<2x8x8x4xf32>
    %187 = vector.shape_cast %186 : vector<2x8x8x4xf32> to vector<128x4xf32>
    %c0_165 = arith.constant 0 : index
    %c18 = arith.constant 18 : index
    %c0_166 = arith.constant 0 : index
    %c0_167 = arith.constant 0 : index
    %188 = vector.load %arg4[%c0_165, %c18, %c0_166, %c0_167] : memref<1x27x4x8xf32, #tpu.memory_space<vmem>>, vector<1x1x4x8xf32>
    %189 = vector.shape_cast %188 : vector<1x1x4x8xf32> to vector<4x8xf32>
    %cst_168 = arith.constant dense<0.000000e+00> : vector<128x8xf32>
    %190 = tpu.matmul %187, %189, %cst_168 {dimension_numbers = #tpu.dot_dimension_numbers<[1], [0], [0], [1], [0, 0, 1, 1], [], []>} : vector<128x4xf32>, vector<4x8xf32>, vector<128x8xf32> -> vector<128x8xf32>
    %191 = arith.addf %181, %190 : vector<128x8xf32>
    %c2_i32_169 = arith.constant 2 : i32
    %192 = arith.addi %0, %c2_i32_169 : i32
    %c0_170 = arith.constant 0 : index
    %193 = arith.index_cast %192 : i32 to index
    %c0_171 = arith.constant 0 : index
    %c1_172 = arith.constant 1 : index
    %c0_173 = arith.constant 0 : index
    %194 = vector.load %arg3[%c0_170, %193, %c0_171, %c1_172, %c0_173] : memref<1x10x10x10x4xbf16, #tpu.memory_space<vmem>>, vector<1x2x8x8x4xbf16>
    %195 = vector.shape_cast %194 : vector<1x2x8x8x4xbf16> to vector<2x8x8x4xbf16>
    %196 = arith.extf %195 : vector<2x8x8x4xbf16> to vector<2x8x8x4xf32>
    %197 = vector.shape_cast %196 : vector<2x8x8x4xf32> to vector<128x4xf32>
    %c0_174 = arith.constant 0 : index
    %c19 = arith.constant 19 : index
    %c0_175 = arith.constant 0 : index
    %c0_176 = arith.constant 0 : index
    %198 = vector.load %arg4[%c0_174, %c19, %c0_175, %c0_176] : memref<1x27x4x8xf32, #tpu.memory_space<vmem>>, vector<1x1x4x8xf32>
    %199 = vector.shape_cast %198 : vector<1x1x4x8xf32> to vector<4x8xf32>
    %cst_177 = arith.constant dense<0.000000e+00> : vector<128x8xf32>
    %200 = tpu.matmul %197, %199, %cst_177 {dimension_numbers = #tpu.dot_dimension_numbers<[1], [0], [0], [1], [0, 0, 1, 1], [], []>} : vector<128x4xf32>, vector<4x8xf32>, vector<128x8xf32> -> vector<128x8xf32>
    %201 = arith.addf %191, %200 : vector<128x8xf32>
    %c2_i32_178 = arith.constant 2 : i32
    %202 = arith.addi %0, %c2_i32_178 : i32
    %c0_179 = arith.constant 0 : index
    %203 = arith.index_cast %202 : i32 to index
    %c0_180 = arith.constant 0 : index
    %c2_181 = arith.constant 2 : index
    %c0_182 = arith.constant 0 : index
    %204 = vector.load %arg3[%c0_179, %203, %c0_180, %c2_181, %c0_182] : memref<1x10x10x10x4xbf16, #tpu.memory_space<vmem>>, vector<1x2x8x8x4xbf16>
    %205 = vector.shape_cast %204 : vector<1x2x8x8x4xbf16> to vector<2x8x8x4xbf16>
    %206 = arith.extf %205 : vector<2x8x8x4xbf16> to vector<2x8x8x4xf32>
    %207 = vector.shape_cast %206 : vector<2x8x8x4xf32> to vector<128x4xf32>
    %c0_183 = arith.constant 0 : index
    %c20 = arith.constant 20 : index
    %c0_184 = arith.constant 0 : index
    %c0_185 = arith.constant 0 : index
    %208 = vector.load %arg4[%c0_183, %c20, %c0_184, %c0_185] : memref<1x27x4x8xf32, #tpu.memory_space<vmem>>, vector<1x1x4x8xf32>
    %209 = vector.shape_cast %208 : vector<1x1x4x8xf32> to vector<4x8xf32>
    %cst_186 = arith.constant dense<0.000000e+00> : vector<128x8xf32>
    %210 = tpu.matmul %207, %209, %cst_186 {dimension_numbers = #tpu.dot_dimension_numbers<[1], [0], [0], [1], [0, 0, 1, 1], [], []>} : vector<128x4xf32>, vector<4x8xf32>, vector<128x8xf32> -> vector<128x8xf32>
    %211 = arith.addf %201, %210 : vector<128x8xf32>
    %c2_i32_187 = arith.constant 2 : i32
    %212 = arith.addi %0, %c2_i32_187 : i32
    %c0_188 = arith.constant 0 : index
    %213 = arith.index_cast %212 : i32 to index
    %c1_189 = arith.constant 1 : index
    %c0_190 = arith.constant 0 : index
    %c0_191 = arith.constant 0 : index
    %214 = vector.load %arg3[%c0_188, %213, %c1_189, %c0_190, %c0_191] : memref<1x10x10x10x4xbf16, #tpu.memory_space<vmem>>, vector<1x2x8x8x4xbf16>
    %215 = vector.shape_cast %214 : vector<1x2x8x8x4xbf16> to vector<2x8x8x4xbf16>
    %216 = arith.extf %215 : vector<2x8x8x4xbf16> to vector<2x8x8x4xf32>
    %217 = vector.shape_cast %216 : vector<2x8x8x4xf32> to vector<128x4xf32>
    %c0_192 = arith.constant 0 : index
    %c21 = arith.constant 21 : index
    %c0_193 = arith.constant 0 : index
    %c0_194 = arith.constant 0 : index
    %218 = vector.load %arg4[%c0_192, %c21, %c0_193, %c0_194] : memref<1x27x4x8xf32, #tpu.memory_space<vmem>>, vector<1x1x4x8xf32>
    %219 = vector.shape_cast %218 : vector<1x1x4x8xf32> to vector<4x8xf32>
    %cst_195 = arith.constant dense<0.000000e+00> : vector<128x8xf32>
    %220 = tpu.matmul %217, %219, %cst_195 {dimension_numbers = #tpu.dot_dimension_numbers<[1], [0], [0], [1], [0, 0, 1, 1], [], []>} : vector<128x4xf32>, vector<4x8xf32>, vector<128x8xf32> -> vector<128x8xf32>
    %221 = arith.addf %211, %220 : vector<128x8xf32>
    %c2_i32_196 = arith.constant 2 : i32
    %222 = arith.addi %0, %c2_i32_196 : i32
    %c0_197 = arith.constant 0 : index
    %223 = arith.index_cast %222 : i32 to index
    %c1_198 = arith.constant 1 : index
    %c1_199 = arith.constant 1 : index
    %c0_200 = arith.constant 0 : index
    %224 = vector.load %arg3[%c0_197, %223, %c1_198, %c1_199, %c0_200] : memref<1x10x10x10x4xbf16, #tpu.memory_space<vmem>>, vector<1x2x8x8x4xbf16>
    %225 = vector.shape_cast %224 : vector<1x2x8x8x4xbf16> to vector<2x8x8x4xbf16>
    %226 = arith.extf %225 : vector<2x8x8x4xbf16> to vector<2x8x8x4xf32>
    %227 = vector.shape_cast %226 : vector<2x8x8x4xf32> to vector<128x4xf32>
    %c0_201 = arith.constant 0 : index
    %c22 = arith.constant 22 : index
    %c0_202 = arith.constant 0 : index
    %c0_203 = arith.constant 0 : index
    %228 = vector.load %arg4[%c0_201, %c22, %c0_202, %c0_203] : memref<1x27x4x8xf32, #tpu.memory_space<vmem>>, vector<1x1x4x8xf32>
    %229 = vector.shape_cast %228 : vector<1x1x4x8xf32> to vector<4x8xf32>
    %cst_204 = arith.constant dense<0.000000e+00> : vector<128x8xf32>
    %230 = tpu.matmul %227, %229, %cst_204 {dimension_numbers = #tpu.dot_dimension_numbers<[1], [0], [0], [1], [0, 0, 1, 1], [], []>} : vector<128x4xf32>, vector<4x8xf32>, vector<128x8xf32> -> vector<128x8xf32>
    %231 = arith.addf %221, %230 : vector<128x8xf32>
    %c2_i32_205 = arith.constant 2 : i32
    %232 = arith.addi %0, %c2_i32_205 : i32
    %c0_206 = arith.constant 0 : index
    %233 = arith.index_cast %232 : i32 to index
    %c1_207 = arith.constant 1 : index
    %c2_208 = arith.constant 2 : index
    %c0_209 = arith.constant 0 : index
    %234 = vector.load %arg3[%c0_206, %233, %c1_207, %c2_208, %c0_209] : memref<1x10x10x10x4xbf16, #tpu.memory_space<vmem>>, vector<1x2x8x8x4xbf16>
    %235 = vector.shape_cast %234 : vector<1x2x8x8x4xbf16> to vector<2x8x8x4xbf16>
    %236 = arith.extf %235 : vector<2x8x8x4xbf16> to vector<2x8x8x4xf32>
    %237 = vector.shape_cast %236 : vector<2x8x8x4xf32> to vector<128x4xf32>
    %c0_210 = arith.constant 0 : index
    %c23 = arith.constant 23 : index
    %c0_211 = arith.constant 0 : index
    %c0_212 = arith.constant 0 : index
    %238 = vector.load %arg4[%c0_210, %c23, %c0_211, %c0_212] : memref<1x27x4x8xf32, #tpu.memory_space<vmem>>, vector<1x1x4x8xf32>
    %239 = vector.shape_cast %238 : vector<1x1x4x8xf32> to vector<4x8xf32>
    %cst_213 = arith.constant dense<0.000000e+00> : vector<128x8xf32>
    %240 = tpu.matmul %237, %239, %cst_213 {dimension_numbers = #tpu.dot_dimension_numbers<[1], [0], [0], [1], [0, 0, 1, 1], [], []>} : vector<128x4xf32>, vector<4x8xf32>, vector<128x8xf32> -> vector<128x8xf32>
    %241 = arith.addf %231, %240 : vector<128x8xf32>
    %c2_i32_214 = arith.constant 2 : i32
    %242 = arith.addi %0, %c2_i32_214 : i32
    %c0_215 = arith.constant 0 : index
    %243 = arith.index_cast %242 : i32 to index
    %c2_216 = arith.constant 2 : index
    %c0_217 = arith.constant 0 : index
    %c0_218 = arith.constant 0 : index
    %244 = vector.load %arg3[%c0_215, %243, %c2_216, %c0_217, %c0_218] : memref<1x10x10x10x4xbf16, #tpu.memory_space<vmem>>, vector<1x2x8x8x4xbf16>
    %245 = vector.shape_cast %244 : vector<1x2x8x8x4xbf16> to vector<2x8x8x4xbf16>
    %246 = arith.extf %245 : vector<2x8x8x4xbf16> to vector<2x8x8x4xf32>
    %247 = vector.shape_cast %246 : vector<2x8x8x4xf32> to vector<128x4xf32>
    %c0_219 = arith.constant 0 : index
    %c24 = arith.constant 24 : index
    %c0_220 = arith.constant 0 : index
    %c0_221 = arith.constant 0 : index
    %248 = vector.load %arg4[%c0_219, %c24, %c0_220, %c0_221] : memref<1x27x4x8xf32, #tpu.memory_space<vmem>>, vector<1x1x4x8xf32>
    %249 = vector.shape_cast %248 : vector<1x1x4x8xf32> to vector<4x8xf32>
    %cst_222 = arith.constant dense<0.000000e+00> : vector<128x8xf32>
    %250 = tpu.matmul %247, %249, %cst_222 {dimension_numbers = #tpu.dot_dimension_numbers<[1], [0], [0], [1], [0, 0, 1, 1], [], []>} : vector<128x4xf32>, vector<4x8xf32>, vector<128x8xf32> -> vector<128x8xf32>
    %251 = arith.addf %241, %250 : vector<128x8xf32>
    %c2_i32_223 = arith.constant 2 : i32
    %252 = arith.addi %0, %c2_i32_223 : i32
    %c0_224 = arith.constant 0 : index
    %253 = arith.index_cast %252 : i32 to index
    %c2_225 = arith.constant 2 : index
    %c1_226 = arith.constant 1 : index
    %c0_227 = arith.constant 0 : index
    %254 = vector.load %arg3[%c0_224, %253, %c2_225, %c1_226, %c0_227] : memref<1x10x10x10x4xbf16, #tpu.memory_space<vmem>>, vector<1x2x8x8x4xbf16>
    %255 = vector.shape_cast %254 : vector<1x2x8x8x4xbf16> to vector<2x8x8x4xbf16>
    %256 = arith.extf %255 : vector<2x8x8x4xbf16> to vector<2x8x8x4xf32>
    %257 = vector.shape_cast %256 : vector<2x8x8x4xf32> to vector<128x4xf32>
    %c0_228 = arith.constant 0 : index
    %c25 = arith.constant 25 : index
    %c0_229 = arith.constant 0 : index
    %c0_230 = arith.constant 0 : index
    %258 = vector.load %arg4[%c0_228, %c25, %c0_229, %c0_230] : memref<1x27x4x8xf32, #tpu.memory_space<vmem>>, vector<1x1x4x8xf32>
    %259 = vector.shape_cast %258 : vector<1x1x4x8xf32> to vector<4x8xf32>
    %cst_231 = arith.constant dense<0.000000e+00> : vector<128x8xf32>
    %260 = tpu.matmul %257, %259, %cst_231 {dimension_numbers = #tpu.dot_dimension_numbers<[1], [0], [0], [1], [0, 0, 1, 1], [], []>} : vector<128x4xf32>, vector<4x8xf32>, vector<128x8xf32> -> vector<128x8xf32>
    %261 = arith.addf %251, %260 : vector<128x8xf32>
    %c2_i32_232 = arith.constant 2 : i32
    %262 = arith.addi %0, %c2_i32_232 : i32
    %c0_233 = arith.constant 0 : index
    %263 = arith.index_cast %262 : i32 to index
    %c2_234 = arith.constant 2 : index
    %c2_235 = arith.constant 2 : index
    %c0_236 = arith.constant 0 : index
    %264 = vector.load %arg3[%c0_233, %263, %c2_234, %c2_235, %c0_236] : memref<1x10x10x10x4xbf16, #tpu.memory_space<vmem>>, vector<1x2x8x8x4xbf16>
    %265 = vector.shape_cast %264 : vector<1x2x8x8x4xbf16> to vector<2x8x8x4xbf16>
    %266 = arith.extf %265 : vector<2x8x8x4xbf16> to vector<2x8x8x4xf32>
    %267 = vector.shape_cast %266 : vector<2x8x8x4xf32> to vector<128x4xf32>
    %c0_237 = arith.constant 0 : index
    %c26 = arith.constant 26 : index
    %c0_238 = arith.constant 0 : index
    %c0_239 = arith.constant 0 : index
    %268 = vector.load %arg4[%c0_237, %c26, %c0_238, %c0_239] : memref<1x27x4x8xf32, #tpu.memory_space<vmem>>, vector<1x1x4x8xf32>
    %269 = vector.shape_cast %268 : vector<1x1x4x8xf32> to vector<4x8xf32>
    %cst_240 = arith.constant dense<0.000000e+00> : vector<128x8xf32>
    %270 = tpu.matmul %267, %269, %cst_240 {dimension_numbers = #tpu.dot_dimension_numbers<[1], [0], [0], [1], [0, 0, 1, 1], [], []>} : vector<128x4xf32>, vector<4x8xf32>, vector<128x8xf32> -> vector<128x8xf32>
    %271 = arith.addf %261, %270 : vector<128x8xf32>
    %c0_241 = arith.constant 0 : index
    %c0_242 = arith.constant 0 : index
    %c0_243 = arith.constant 0 : index
    %272 = vector.load %arg5[%c0_241, %c0_242, %c0_243] : memref<1x1x8xf32, #tpu.memory_space<vmem>>, vector<1x1x8xf32>
    %273 = vector.shape_cast %272 : vector<1x1x8xf32> to vector<1x8xf32>
    %274 = vector.broadcast %273 : vector<1x8xf32> to vector<128x8xf32>
    %275 = arith.addf %271, %274 : vector<128x8xf32>
    %276 = tpu.transpose %275, [1, 0] : vector<128x8xf32> -> vector<8x128xf32>
    %c0_244 = arith.constant 0 : index
    %c0_245 = arith.constant 0 : index
    %c0_246 = arith.constant 0 : index
    %277 = vector.load %arg6[%c0_244, %c0_245, %c0_246] : memref<1x8x128xf32, #tpu.memory_space<vmem>>, vector<1x8x128xf32>
    %278 = vector.shape_cast %277 : vector<1x8x128xf32> to vector<8x128xf32>
    %279 = vector.shape_cast %276 : vector<8x128xf32> to vector<1x8x128xf32>
    tpu.vector_store %arg6[%c0_244, %c0_245, %c0_246], %279 {strides = array<i32>} : memref<1x8x128xf32, #tpu.memory_space<vmem>>, vector<1x8x128xf32>,
    return
  }
  func.func @transform_0(%arg0: i32, %arg1: i32, %arg2: memref<8xi32, #tpu.memory_space<smem>>) -> (i32, i32, i32, i32, i32) {
    %c0_i32 = arith.constant 0 : i32
    %c0_i32_0 = arith.constant 0 : i32
    %c0_i32_1 = arith.constant 0 : i32
    %c0_i32_2 = arith.constant 0 : i32
    %c0_i32_3 = arith.constant 0 : i32
    return %arg0, %c0_i32, %c0_i32_0, %c0_i32_1, %c0_i32_2 : i32, i32, i32, i32, i32
  }
  func.func @transform_1(%arg0: i32, %arg1: i32, %arg2: memref<8xi32, #tpu.memory_space<smem>>) -> (i32, i32, i32, i32) {
    %0 = arith.index_cast %arg0 : i32 to index
    %1 = memref.load %arg2[%0] : memref<8xi32, #tpu.memory_space<smem>>
    %c0_i32 = arith.constant 0 : i32
    %c0_i32_0 = arith.constant 0 : i32
    %c0_i32_1 = arith.constant 0 : i32
    %c0_i32_2 = arith.constant 0 : i32
    return %1, %c0_i32, %c0_i32_0, %c0_i32_1 : i32, i32, i32, i32
  }
  func.func @transform_2(%arg0: i32, %arg1: i32, %arg2: memref<8xi32, #tpu.memory_space<smem>>) -> (i32, i32, i32) {
    %0 = arith.index_cast %arg0 : i32 to index
    %1 = memref.load %arg2[%0] : memref<8xi32, #tpu.memory_space<smem>>
    %c0_i32 = arith.constant 0 : i32
    %c0_i32_0 = arith.constant 0 : i32
    %c0_i32_1 = arith.constant 0 : i32
    return %1, %c0_i32, %c0_i32_0 : i32, i32, i32
  }
  func.func @transform_3(%arg0: i32, %arg1: i32, %arg2: memref<8xi32, #tpu.memory_space<smem>>) -> (i32, i32, i32) {
    %c0_i32 = arith.constant 0 : i32
    %c0_i32_0 = arith.constant 0 : i32
    return %arg0, %c0_i32, %arg1 : i32, i32, i32
  }
}

</mosaic_0001>

<llo_original>
// kernel: tpu_custom_call.1
$region0: #{tpu_custom_call.1}
  #allocation0 [shape = 'u32[]', space=smem, size = 0x4, offset = 0x4, fixed_abs, tag = 'smem constant byte address 0x4 - core index']
  #allocation1 [shape = 'u32[72,128]{1,0:T(1,128)}', space=vmem, size = 0x9000, scoped, tag = 'internal scratch']
  #allocation2 [shape = 's32[1]{0}', space=sflag, size = 0x4, scoped, tag = 'scoped memory for tpu_custom_call.1']
  #allocation3 [shape = 'u8[512]{0}', space=smem, size = 0x200, scoped, tag = 'prefetched SMEM operand 0']
  %s0 = inlined_call_operand.vmem [shape: s32[8], index: 0, kind: input, shape index: {}]
  %s1 = inlined_call_operand.vmem [shape: bf16[8,10,10,10,4], index: 1, kind: input, shape index: {}]
  %s2 = inlined_call_operand.vmem [shape: f32[4,27,4,8], index: 2, kind: input, shape index: {}]
  %s3 = inlined_call_operand.vmem [shape: f32[4,1,8], index: 3, kind: input, shape index: {}]
  %s4 = inlined_call_operand.hbm [shape: f32[8,8,512], index: 4, kind: output, shape index: {}]
  %s5 = sld [smem:[#allocation0]]
  $region45: #{tpu_custom_call.1} parent=0
    _
  %s7 = ssub.s32 1, %s5
  %s8 = scalar_select 0, %s7, %s5
  %s10 = sshll.u32 %s0, 4
  %s11 = int_to_ptr.vmem [resolvable:$true] %s10
  %13 = dma.vmem_to_smem %s11, 16, [#allocation3], [#allocation2]
  %15 = dma.done [#allocation2], 16
  %16 = sfence
  $region1: #{tpu_custom_call.1} parent=0
    #allocation4 [shape = 'u8[8192]{0}', space=vmem, size = 0x2000, scoped, tag = 'output window, operand 0']
    #allocation5 [shape = 's32[2]{0}', space=sflag, size = 0x8, scoped, tag = 'scoped memory for tpu_custom_call.1']
    %17 = vsyncpa [#allocation5], 0
    %s18 = scalar_lea.sflag [#allocation5], 1
    %19 = vsyncpa %s18, 0
    loop: start=0, step=1, limit=34
    $region2: #{tpu_custom_call.1} parent=1 // loop_pre_header
      _
    $region3: #{tpu_custom_call.1} parent=1 // loop_header
      %s21 = sphi 0, %s25
      %p22 = scmp.ge.s32.totalorder %s21, 34
      %s28 = sphi 0, %s40
      %s29 = sphi 0, %s36
      %s30 = sphi 0, %s28
      %s31 = sphi 0, %s29
      %s32 = sphi 0, %s30
      %s33 = sphi 0, %s31
      %s43 = sphi 0, %s45
      %s46 = sphi 0, %s43
      %s47 = sphi 0, %s46
      %s63 = sphi 0, %s47
      %s71 = sphi 0, %s73
      %s74 = sphi 0, %s71
      %s75 = sphi 0, %s74
      %s91 = sphi 0, %s75
      %s99 = sphi 0, %s101
      %s102 = sphi 0, %s99
      %s103 = sphi 0, %s102
      %s119 = sphi 0, %s103
      %s127 = sphi 0, %s129
      %s130 = sphi 0, %s127
      %s131 = sphi 0, %s130
      %s147 = sphi 0, %s131
    $region4: #{tpu_custom_call.1} parent=1 // loop_header_branch
      %24 = sbr.rel (%p22) target = $region8
    $region5: #{tpu_custom_call.1} parent=1 // loop_body
      %s26 = ssub.s32 %s21, 1
      %s27 = ssub.s32 %s21, 2
      %s34 = sadd.s32 1, %s29
      %p35 = scmp.ge.s32.totalorder %s34, 4
      %s36 = scalar_select %p35, 0, %s34
      %s37 = sadd.s32 1, %s28
      %s38 = scalar_select %p35, %s37, %s28
      %p39 = scmp.ge.s32.totalorder %s38, 8
      %s40 = scalar_select %p39, 0, %s38
      %s41 = ssub.s32 %s28, %s40
      %p42 = scmp.eq.s32.totalorder %s41, 0
      %s44 = sadd.s32 %s43, 1
      %s45 = scalar_select %p42, %s43, %s44
      %p48 = pneg %p42
      %p49 = scmp.eq.s32.totalorder %s21, 31
      %p50 = por %p48, %p49
      %p51 = scmp.ne.s32.totalorder %s43, %s46
      %p52 = scmp.eq.s32.totalorder %s21, 0
      %p53 = por %p51, %p52
      %p54 = scmp.ne.s32.totalorder %s43, %s46
      %p55 = scmp.eq.s32.totalorder %s26, 31
      %p56 = por %p54, %p55
      %p57 = scmp.ne.s32.totalorder %s46, %s47
      %p58 = scmp.eq.s32.totalorder %s26, 0
      %p59 = por %p57, %p58
      %p60 = scmp.ne.s32.totalorder %s46, %s47
      %p61 = scmp.eq.s32.totalorder %s27, 31
      %p62 = por %p60, %p61
      %p64 = scmp.ne.s32.totalorder %s47, %s63
      %p65 = scmp.eq.s32.totalorder %s27, 0
      %p66 = por %p64, %p65
      %s67 = sld [smem:[#allocation3 + %s28]]
      %s68 = sld [smem:[#allocation3 + %s40]]
      %s69 = ssub.s32 %s67, %s68
      %p70 = scmp.eq.s32.totalorder %s69, 0
      %s72 = sadd.s32 %s71, 1
      %s73 = scalar_select %p70, %s71, %s72
      %p76 = pneg %p70
      %p77 = scmp.eq.s32.totalorder %s21, 31
      %p78 = por %p76, %p77
      %p79 = scmp.ne.s32.totalorder %s71, %s74
      %p80 = scmp.eq.s32.totalorder %s21, 0
      %p81 = por %p79, %p80
      %p82 = scmp.ne.s32.totalorder %s71, %s74
      %p83 = scmp.eq.s32.totalorder %s26, 31
      %p84 = por %p82, %p83
      %p85 = scmp.ne.s32.totalorder %s74, %s75
      %p86 = scmp.eq.s32.totalorder %s26, 0
      %p87 = por %p85, %p86
      %p88 = scmp.ne.s32.totalorder %s74, %s75
      %p89 = scmp.eq.s32.totalorder %s27, 31
      %p90 = por %p88, %p89
      %p92 = scmp.ne.s32.totalorder %s75, %s91
      %p93 = scmp.eq.s32.totalorder %s27, 0
      %p94 = por %p92, %p93
      %s95 = sld [smem:[#allocation3 + %s28]]
      %s96 = sld [smem:[#allocation3 + %s40]]
      %s97 = ssub.s32 %s95, %s96
      %p98 = scmp.eq.s32.totalorder %s97, 0
      %s100 = sadd.s32 %s99, 1
      %s101 = scalar_select %p98, %s99, %s100
      %p104 = pneg %p98
      %p105 = scmp.eq.s32.totalorder %s21, 31
      %p106 = por %p104, %p105
      %p107 = scmp.ne.s32.totalorder %s99, %s102
      %p108 = scmp.eq.s32.totalorder %s21, 0
      %p109 = por %p107, %p108
      %p110 = scmp.ne.s32.totalorder %s99, %s102
      %p111 = scmp.eq.s32.totalorder %s26, 31
      %p112 = por %p110, %p111
      %p113 = scmp.ne.s32.totalorder %s102, %s103
      %p114 = scmp.eq.s32.totalorder %s26, 0
      %p115 = por %p113, %p114
      %p116 = scmp.ne.s32.totalorder %s102, %s103
      %p117 = scmp.eq.s32.totalorder %s27, 31
      %p118 = por %p116, %p117
      %p120 = scmp.ne.s32.totalorder %s103, %s119
      %p121 = scmp.eq.s32.totalorder %s27, 0
      %p122 = por %p120, %p121
      %s123 = ssub.s32 %s28, %s40
      %s124 = ssub.s32 %s29, %s36
      %s125 = sor.u32 %s123, %s124
      %p126 = scmp.eq.s32.totalorder %s125, 0
      %s128 = sadd.s32 %s127, 1
      %s129 = scalar_select %p126, %s127, %s128
      %p132 = pneg %p126
      %p133 = scmp.eq.s32.totalorder %s21, 31
      %p134 = por %p132, %p133
      %p135 = scmp.ne.s32.totalorder %s127, %s130
      %p136 = scmp.eq.s32.totalorder %s21, 0
      %p137 = por %p135, %p136
      %p138 = scmp.ne.s32.totalorder %s127, %s130
      %p139 = scmp.eq.s32.totalorder %s26, 31
      %p140 = por %p138, %p139
      %p141 = scmp.ne.s32.totalorder %s130, %s131
      %p142 = scmp.eq.s32.totalorder %s26, 0
      %p143 = por %p141, %p142
      %p144 = scmp.ne.s32.totalorder %s130, %s131
      %p145 = scmp.eq.s32.totalorder %s27, 31
      %p146 = por %p144, %p145
      %p148 = scmp.ne.s32.totalorder %s131, %s147
      %p149 = scmp.eq.s32.totalorder %s27, 0
      %p150 = por %p148, %p149
      %p151 = scmp.le.s32.totalorder 1, %s21
      %p152 = scmp.lt.s32.totalorder %s21, 33
      %p153 = pnand %p151, %p152
      %p154 = pneg %p153
      // Predicated region
      $region9: #{tpu_custom_call.1} parent=5 // pred_check
        _
      $region10: #{tpu_custom_call.1} parent=5 // pred_check_branch
        %156 = sbr.rel (%p153) target = $region12
      $region11: #{tpu_custom_call.1} parent=5 // pred_region
        %s157 = ssub.s32 %s21, 1
      $region12: #{tpu_custom_call.1} parent=5 // pred_fallthru
        _
      %p158 = scmp.lt.s32.totalorder %s21, 32
      // Predicated region
      $region13: #{tpu_custom_call.1} parent=5 // pred_check
        %p159 = pneg %p158
      $region14: #{tpu_custom_call.1} parent=5 // pred_check_branch
        %161 = sbr.rel (%p159) target = $region16
      $region15: #{tpu_custom_call.1} parent=5 // pred_region
        // Predicated region
        $region17: #{tpu_custom_call.1} parent=15 // pred_check
          %p162 = pneg %p53
        $region18: #{tpu_custom_call.1} parent=15 // pred_check_branch
          %164 = sbr.rel (%p162) target = $region20
        $region19: #{tpu_custom_call.1} parent=15 // pred_region
          %p165 = scmp.lt.s32.totalorder %s28, 7
          %s166 = scalar_select %p165, %s28, 7
          %s167 = smul.addr %s166, 200
          %s168 = smul.addr %s167, 4
          %s169 = scalar_lea.vmem %s1, %s168
        $region20: #{tpu_custom_call.1} parent=15 // pred_fallthru
          _
        // Predicated region
        $region21: #{tpu_custom_call.1} parent=15 // pred_check
          %p170 = pneg %p81
        $region22: #{tpu_custom_call.1} parent=15 // pred_check_branch
          %172 = sbr.rel (%p170) target = $region24
        $region23: #{tpu_custom_call.1} parent=15 // pred_region
          %s173 = sld [smem:[#allocation3 + %s28]]
          %p174 = scmp.lt.s32.totalorder %s173, 3
          %s175 = scalar_select %p174, %s173, 3
          %s176 = smul.addr %s175, 27
          %s177 = smul.addr %s176, 4
          %s178 = scalar_lea.vmem %s2, %s177
          %s179 = sld [smem:[#allocation3 + %s28]]
        $region24: #{tpu_custom_call.1} parent=15 // pred_fallthru
          _
        // Predicated region
        $region25: #{tpu_custom_call.1} parent=15 // pred_check
          %p180 = pneg %p109
        $region26: #{tpu_custom_call.1} parent=15 // pred_check_branch
          %182 = sbr.rel (%p180) target = $region28
        $region27: #{tpu_custom_call.1} parent=15 // pred_region
          %s183 = sld [smem:[#allocation3 + %s28]]
          %p184 = scmp.lt.s32.totalorder %s183, 3
          %s185 = scalar_select %p184, %s183, 3
          %s186 = scalar_lea.vmem %s3, %s185
          %s187 = sld [smem:[#allocation3 + %s28]]
        $region28: #{tpu_custom_call.1} parent=15 // pred_fallthru
          _
      $region16: #{tpu_custom_call.1} parent=5 // pred_fallthru
        _
      %p188 = scmp.le.s32.totalorder 1, %s21
      %p189 = scmp.lt.s32.totalorder %s21, 33
      %p190 = pnand %p188, %p189
      %p191 = pneg %p190
      // Predicated region
      $region29: #{tpu_custom_call.1} parent=5 // pred_check
        _
      $region30: #{tpu_custom_call.1} parent=5 // pred_check_branch
        %193 = sbr.rel (%p190) target = $region32
      $region31: #{tpu_custom_call.1} parent=5 // pred_region
        %s194 = ssub.s32 %s21, 1
        %p195 = scmp.lt.s32.totalorder %s30, 7
        %s196 = scalar_select %p195, %s30, 7
        %s197 = smul.addr %s196, 200
        %s198 = smul.addr %s197, 4
        %s199 = scalar_lea.vmem %s1, %s198
        %p200 = pneg %p59
        %p201 = pneg %p56
        %s202 = sld [smem:[#allocation3 + %s30]]
        %p203 = scmp.lt.s32.totalorder %s202, 3
        %s204 = scalar_select %p203, %s202, 3
        %s205 = smul.addr %s204, 27
        %s206 = smul.addr %s205, 4
        %s207 = scalar_lea.vmem %s2, %s206
        %p208 = pneg %p87
        %p209 = pneg %p84
        %s210 = sld [smem:[#allocation3 + %s30]]
        %p211 = scmp.lt.s32.totalorder %s210, 3
        %s212 = scalar_select %p211, %s210, 3
        %s213 = scalar_lea.vmem %s3, %s212
        %p214 = pneg %p115
        %p215 = pneg %p112
        %p216 = pneg %p143
        %p217 = pneg %p140
        %s218 = sand.u32 %s130, 1
        %s219 = scalar_lea.sflag [#allocation5], %s218
        %s220 = sand.u32 %s130, 1
        %s221 = smul.addr %s220, 8
        %s222 = scalar_lea.vmem [#allocation4], %s221
        %p223 = scmp.lt.s32.totalorder %s30, 7
        %s224 = scalar_select %p223, %s30, 7
        %s225 = smul.addr %s224, 200
        %s226 = smul.addr %s225, 4
        %s227 = scalar_lea.vmem %s1, %s226
        %s228 = sld [smem:[#allocation3 + %s30]]
        %p229 = scmp.lt.s32.totalorder %s228, 3
        %s230 = scalar_select %p229, %s228, 3
        %s231 = smul.addr %s230, 27
        %s232 = smul.addr %s231, 4
        %s233 = scalar_lea.vmem %s2, %s232
        %s234 = sld [smem:[#allocation3 + %s30]]
        %s235 = sld [smem:[#allocation3 + %s30]]
        %p236 = scmp.lt.s32.totalorder %s235, 3
        %s237 = scalar_select %p236, %s235, 3
        %s238 = scalar_lea.vmem %s3, %s237
        %s239 = sld [smem:[#allocation3 + %s30]]
        %s240 = smul.u32 %s31, 2
        %s241 = smul.u32 %s240, 20
        %s242 = smul.addr %s241, 4
        %s243 = scalar_lea.vmem %s227, %s242
        %v244 = vld [vmem:[%s243] sm:$0xf]
        %v245 = vld [vmem:[%s243 + $0x8] sm:$0xf]
        %v246 = vld [vmem:[%s243 + $0x10] sm:$0xf]
        %v247 = vld [vmem:[%s243 + $0x18] sm:$0xf]
        %v248 = vld [vmem:[%s243 + $0x20] sm:$0xf]
        %v249 = vld [vmem:[%s243 + $0x28] sm:$0xf]
        %v250 = vld [vmem:[%s243 + $0x30] sm:$0xf]
        %v251 = vld [vmem:[%s243 + $0x38] sm:$0xf]
        %v252 = vld [vmem:[%s243 + $0x50] sm:$0xf]
        %v253 = vld [vmem:[%s243 + $0x58] sm:$0xf]
        %v254 = vld [vmem:[%s243 + $0x60] sm:$0xf]
        %v255 = vld [vmem:[%s243 + $0x68] sm:$0xf]
        %v256 = vld [vmem:[%s243 + $0x70] sm:$0xf]
        %v257 = vld [vmem:[%s243 + $0x78] sm:$0xf]
        %v258 = vld [vmem:[%s243 + $0x80] sm:$0xf]
        %v259 = vld [vmem:[%s243 + $0x88] sm:$0xf]
        %v260 = vunpack.c.l.bf16 %v244
        %v261 = vunpack.c.l.bf16 %v245
        %v262 = vunpack.c.l.bf16 %v246
        %v263 = vunpack.c.l.bf16 %v247
        %v264 = vunpack.c.l.bf16 %v248
        %v265 = vunpack.c.l.bf16 %v249
        %v266 = vunpack.c.l.bf16 %v250
        %v267 = vunpack.c.l.bf16 %v251
        %v268 = vunpack.c.l.bf16 %v252
        %v269 = vunpack.c.l.bf16 %v253
        %v270 = vunpack.c.l.bf16 %v254
        %v271 = vunpack.c.l.bf16 %v255
        %v272 = vunpack.c.l.bf16 %v256
        %v273 = vunpack.c.l.bf16 %v257
        %v274 = vunpack.c.l.bf16 %v258
        %v275 = vunpack.c.l.bf16 %v259
        %v276 = vld [vmem:[%s233] sm:$0xf]
        %v277 = vld [vmem:[%s243 + $0x4] sm:$0x1]
        %v278 = vld [vmem:[%s243 + $0xc] sm:$0x1]
        %v279 = vld [vmem:[%s243 + $0x14] sm:$0x1]
        %v280 = vld [vmem:[%s243 + $0x1c] sm:$0x1]
        %v281 = vld [vmem:[%s243 + $0x24] sm:$0x1]
        %v282 = vld [vmem:[%s243 + $0x2c] sm:$0x1]
        %v283 = vld [vmem:[%s243 + $0x34] sm:$0x1]
        %v284 = vld [vmem:[%s243 + $0x3c] sm:$0x1]
        %v285 = vld [vmem:[%s243 + $0x54] sm:$0x1]
        %v286 = vld [vmem:[%s243 + $0x5c] sm:$0x1]
        %v287 = vld [vmem:[%s243 + $0x64] sm:$0x1]
        %v288 = vld [vmem:[%s243 + $0x6c] sm:$0x1]
        %v289 = vld [vmem:[%s243 + $0x74] sm:$0x1]
        %v290 = vld [vmem:[%s243 + $0x7c] sm:$0x1]
        %v291 = vld [vmem:[%s243 + $0x84] sm:$0x1]
        %v292 = vld [vmem:[%s243 + $0x8c] sm:$0x1]
        %v293 = vunpack.c.l.bf16 %v277
        %v294 = vunpack.c.l.bf16 %v278
        %v295 = vunpack.c.l.bf16 %v279
        %v296 = vunpack.c.l.bf16 %v280
        %v297 = vunpack.c.l.bf16 %v281
        %v298 = vunpack.c.l.bf16 %v282
        %v299 = vunpack.c.l.bf16 %v283
        %v300 = vunpack.c.l.bf16 %v284
        %v301 = vunpack.c.l.bf16 %v285
        %v302 = vunpack.c.l.bf16 %v286
        %v303 = vunpack.c.l.bf16 %v287
        %v304 = vunpack.c.l.bf16 %v288
        %v305 = vunpack.c.l.bf16 %v289
        %v306 = vunpack.c.l.bf16 %v290
        %v307 = vunpack.c.l.bf16 %v291
        %v308 = vunpack.c.l.bf16 %v292
        %vm341 = vcmask 1046528
        %v342 = vrot.slane %v260, 1
        %v343 = vrot.slane %v293, 1
        %v344 = vsel %vm341, %v342, %v343
        %v345 = vrot.slane %v261, 1
        %v346 = vrot.slane %v294, 1
        %v347 = vsel %vm341, %v345, %v346
        %v348 = vrot.slane %v262, 1
        %v349 = vrot.slane %v295, 1
        %v350 = vsel %vm341, %v348, %v349
        %v351 = vrot.slane %v263, 1
        %v352 = vrot.slane %v296, 1
        %v353 = vsel %vm341, %v351, %v352
        %v354 = vrot.slane %v264, 1
        %v355 = vrot.slane %v297, 1
        %v356 = vsel %vm341, %v354, %v355
        %v357 = vrot.slane %v265, 1
        %v358 = vrot.slane %v298, 1
        %v359 = vsel %vm341, %v357, %v358
        %v360 = vrot.slane %v266, 1
        %v361 = vrot.slane %v299, 1
        %v362 = vsel %vm341, %v360, %v361
        %v363 = vrot.slane %v267, 1
        %v364 = vrot.slane %v300, 1
        %v365 = vsel %vm341, %v363, %v364
        %v366 = vrot.slane %v268, 1
        %v367 = vrot.slane %v301, 1
        %v368 = vsel %vm341, %v366, %v367
        %v369 = vrot.slane %v269, 1
        %v370 = vrot.slane %v302, 1
        %v371 = vsel %vm341, %v369, %v370
        %v372 = vrot.slane %v270, 1
        %v373 = vrot.slane %v303, 1
        %v374 = vsel %vm341, %v372, %v373
        %v375 = vrot.slane %v271, 1
        %v376 = vrot.slane %v304, 1
        %v377 = vsel %vm341, %v375, %v376
        %v378 = vrot.slane %v272, 1
        %v379 = vrot.slane %v305, 1
        %v380 = vsel %vm341, %v378, %v379
        %v381 = vrot.slane %v273, 1
        %v382 = vrot.slane %v306, 1
        %v383 = vsel %vm341, %v381, %v382
        %v384 = vrot.slane %v274, 1
        %v385 = vrot.slane %v307, 1
        %v386 = vsel %vm341, %v384, %v385
        %v387 = vrot.slane %v275, 1
        %v388 = vrot.slane %v308, 1
        %v389 = vsel %vm341, %v387, %v388
        %s390 = scalar_lea.vmem %s233, 4
        %v391 = vld [vmem:[%s390] sm:$0xf]
        %vm392 = vcmask 31744
        %v393 = vsel %vm392, %v344, 0
        %v395 = vsel %vm392, %v347, 0
        %v397 = vsel %vm392, %v350, 0
        %v399 = vsel %vm392, %v353, 0
        %v401 = vsel %vm392, %v356, 0
        %v403 = vsel %vm392, %v359, 0
        %v405 = vsel %vm392, %v362, 0
        %v407 = vsel %vm392, %v365, 0
        %v409 = vsel %vm392, %v368, 0
        %v411 = vsel %vm392, %v371, 0
        %v413 = vsel %vm392, %v374, 0
        %v415 = vsel %vm392, %v377, 0
        %v417 = vsel %vm392, %v380, 0
        %v419 = vsel %vm392, %v383, 0
        %v421 = vsel %vm392, %v386, 0
        %v423 = vsel %vm392, %v389, 0
        %vm425 = vcmask 1043456
        %v427 = vsel %vm425, %v391, 0
        %429 = vmatpush.msra.mxu0 0.0
        %430 = vmatpush.msra.mxu0 0.0
        %431 = vmatpush.msra.mxu0 0.0
        %432 = vmatpush.msra.mxu0 0.0
        %433 = vmatpush.msra.mxu0 0.0
        %434 = vmatpush.msra.mxu0 0.0
        %435 = vmatpush.msra.mxu0 0.0
        %436 = vmatpush.msra.mxu0 0.0
        %437 = vmatpush.msra.mxu0 0.0
        %438 = vmatpush.msra.mxu0 0.0
        %439 = vmatpush.msra.mxu0 0.0
        %440 = vmatpush.msra.mxu0 0.0
        %441 = vmatpush.msra.mxu0 0.0
        %442 = vmatpush.msra.mxu0 0.0
        %443 = vmatpush.msra.mxu0 0.0
        %444 = vmatpush.msra.mxu0 %v427
        %445 = vmatmul.f32.gmra.mxu0 %v393
        %v446 = vpop.f32.mrf.mxu0
        %v447 = vadd.f32 0.0, %v446
        %448 = vmatmul.f32.gmra.mxu0 %v395
        %v449 = vpop.f32.mrf.mxu0
        %v450 = vadd.f32 0.0, %v449
        %451 = vmatmul.f32.gmra.mxu0 %v397
        %v452 = vpop.f32.mrf.mxu0
        %v453 = vadd.f32 0.0, %v452
        %454 = vmatmul.f32.gmra.mxu0 %v399
        %v455 = vpop.f32.mrf.mxu0
        %v456 = vadd.f32 0.0, %v455
        %457 = vmatmul.f32.gmra.mxu0 %v401
        %v458 = vpop.f32.mrf.mxu0
        %v459 = vadd.f32 0.0, %v458
        %460 = vmatmul.f32.gmra.mxu0 %v403
        %v461 = vpop.f32.mrf.mxu0
        %v462 = vadd.f32 0.0, %v461
        %463 = vmatmul.f32.gmra.mxu0 %v405
        %v464 = vpop.f32.mrf.mxu0
        %v465 = vadd.f32 0.0, %v464
        %466 = vmatmul.f32.gmra.mxu0 %v407
        %v467 = vpop.f32.mrf.mxu0
        %v468 = vadd.f32 0.0, %v467
        %469 = vmatmul.f32.gmra.mxu0 %v409
        %v470 = vpop.f32.mrf.mxu0
        %v471 = vadd.f32 0.0, %v470
        %472 = vmatmul.f32.gmra.mxu0 %v411
        %v473 = vpop.f32.mrf.mxu0
        %v474 = vadd.f32 0.0, %v473
        %475 = vmatmul.f32.gmra.mxu0 %v413
        %v476 = vpop.f32.mrf.mxu0
        %v477 = vadd.f32 0.0, %v476
        %478 = vmatmul.f32.gmra.mxu0 %v415
        %v479 = vpop.f32.mrf.mxu0
        %v480 = vadd.f32 0.0, %v479
        %481 = vmatmul.f32.gmra.mxu0 %v417
        %v482 = vpop.f32.mrf.mxu0
        %v483 = vadd.f32 0.0, %v482
        %484 = vmatmul.f32.gmra.mxu0 %v419
        %v485 = vpop.f32.mrf.mxu0
        %v486 = vadd.f32 0.0, %v485
        %487 = vmatmul.f32.gmra.mxu0 %v421
        %v488 = vpop.f32.mrf.mxu0
        %v489 = vadd.f32 0.0, %v488
        %490 = vmatmul.f32.gmra.mxu0 %v423
        %v491 = vpop.f32.mrf.mxu0
        %v492 = vadd.f32 0.0, %v491
        %493 = vdwg.mxu0
        %v494 = vsel %vm392, %v260, 0
        %v496 = vsel %vm392, %v261, 0
        %v498 = vsel %vm392, %v262, 0
        %v500 = vsel %vm392, %v263, 0
        %v502 = vsel %vm392, %v264, 0
        %v504 = vsel %vm392, %v265, 0
        %v506 = vsel %vm392, %v266, 0
        %v508 = vsel %vm392, %v267, 0
        %v510 = vsel %vm392, %v268, 0
        %v512 = vsel %vm392, %v269, 0
        %v514 = vsel %vm392, %v270, 0
        %v516 = vsel %vm392, %v271, 0
        %v518 = vsel %vm392, %v272, 0
        %v520 = vsel %vm392, %v273, 0
        %v522 = vsel %vm392, %v274, 0
        %v524 = vsel %vm392, %v275, 0
        %v527 = vsel %vm425, %v276, 0
        %529 = vmatpush.msra.mxu0 0.0
        %530 = vmatpush.msra.mxu0 0.0
        %531 = vmatpush.msra.mxu0 0.0
        %532 = vmatpush.msra.mxu0 0.0
        %533 = vmatpush.msra.mxu0 0.0
        %534 = vmatpush.msra.mxu0 0.0
        %535 = vmatpush.msra.mxu0 0.0
        %536 = vmatpush.msra.mxu0 0.0
        %537 = vmatpush.msra.mxu0 0.0
        %538 = vmatpush.msra.mxu0 0.0
        %539 = vmatpush.msra.mxu0 0.0
        %540 = vmatpush.msra.mxu0 0.0
        %541 = vmatpush.msra.mxu0 0.0
        %542 = vmatpush.msra.mxu0 0.0
        %543 = vmatpush.msra.mxu0 0.0
        %544 = vmatpush.msra.mxu0 %v527
        %545 = vmatmul.f32.gmra.mxu0 %v494
        %v546 = vpop.f32.mrf.mxu0
        %v547 = vadd.f32 %v447, %v546
        %548 = vmatmul.f32.gmra.mxu0 %v496
        %v549 = vpop.f32.mrf.mxu0
        %v550 = vadd.f32 %v450, %v549
        %551 = vmatmul.f32.gmra.mxu0 %v498
        %v552 = vpop.f32.mrf.mxu0
        %v553 = vadd.f32 %v453, %v552
        %554 = vmatmul.f32.gmra.mxu0 %v500
        %v555 = vpop.f32.mrf.mxu0
        %v556 = vadd.f32 %v456, %v555
        %557 = vmatmul.f32.gmra.mxu0 %v502
        %v558 = vpop.f32.mrf.mxu0
        %v559 = vadd.f32 %v459, %v558
        %560 = vmatmul.f32.gmra.mxu0 %v504
        %v561 = vpop.f32.mrf.mxu0
        %v562 = vadd.f32 %v462, %v561
        %563 = vmatmul.f32.gmra.mxu0 %v506
        %v564 = vpop.f32.mrf.mxu0
        %v565 = vadd.f32 %v465, %v564
        %566 = vmatmul.f32.gmra.mxu0 %v508
        %v567 = vpop.f32.mrf.mxu0
        %v568 = vadd.f32 %v468, %v567
        %569 = vmatmul.f32.gmra.mxu0 %v510
        %v570 = vpop.f32.mrf.mxu0
        %v571 = vadd.f32 %v471, %v570
        %572 = vmatmul.f32.gmra.mxu0 %v512
        %v573 = vpop.f32.mrf.mxu0
        %v574 = vadd.f32 %v474, %v573
        %575 = vmatmul.f32.gmra.mxu0 %v514
        %v576 = vpop.f32.mrf.mxu0
        %v577 = vadd.f32 %v477, %v576
        %578 = vmatmul.f32.gmra.mxu0 %v516
        %v579 = vpop.f32.mrf.mxu0
        %v580 = vadd.f32 %v480, %v579
        %581 = vmatmul.f32.gmra.mxu0 %v518
        %v582 = vpop.f32.mrf.mxu0
        %v583 = vadd.f32 %v483, %v582
        %584 = vmatmul.f32.gmra.mxu0 %v520
        %v585 = vpop.f32.mrf.mxu0
        %v586 = vadd.f32 %v486, %v585
        %587 = vmatmul.f32.gmra.mxu0 %v522
        %v588 = vpop.f32.mrf.mxu0
        %v589 = vadd.f32 %v489, %v588
        %590 = vmatmul.f32.gmra.mxu0 %v524
        %v591 = vpop.f32.mrf.mxu0
        %v592 = vadd.f32 %v492, %v591
        %593 = vdwg.mxu0
        %v594 = vld [vmem:[%s243] sm:$0xe]
        %v595 = vld [vmem:[%s243 + $0x8] sm:$0xe]
        %v596 = vld [vmem:[%s243 + $0x10] sm:$0xe]
        %v597 = vld [vmem:[%s243 + $0x18] sm:$0xe]
        %v598 = vld [vmem:[%s243 + $0x20] sm:$0xe]
        %v599 = vld [vmem:[%s243 + $0x28] sm:$0xe]
        %v600 = vld [vmem:[%s243 + $0x30] sm:$0xe]
        %v601 = vld [vmem:[%s243 + $0x38] sm:$0xe]
        %v602 = vld [vmem:[%s243 + $0x50] sm:$0xe]
        %v603 = vld [vmem:[%s243 + $0x58] sm:$0xe]
        %v604 = vld [vmem:[%s243 + $0x60] sm:$0xe]
        %v605 = vld [vmem:[%s243 + $0x68] sm:$0xe]
        %v606 = vld [vmem:[%s243 + $0x70] sm:$0xe]
        %v607 = vld [vmem:[%s243 + $0x78] sm:$0xe]
        %v608 = vld [vmem:[%s243 + $0x80] sm:$0xe]
        %v609 = vld [vmem:[%s243 + $0x88] sm:$0xe]
        %v610 = vunpack.c.l.bf16 %v594
        %v611 = vunpack.c.l.bf16 %v595
        %v612 = vunpack.c.l.bf16 %v596
        %v613 = vunpack.c.l.bf16 %v597
        %v614 = vunpack.c.l.bf16 %v598
        %v615 = vunpack.c.l.bf16 %v599
        %v616 = vunpack.c.l.bf16 %v600
        %v617 = vunpack.c.l.bf16 %v601
        %v618 = vunpack.c.l.bf16 %v602
        %v619 = vunpack.c.l.bf16 %v603
        %v620 = vunpack.c.l.bf16 %v604
        %v621 = vunpack.c.l.bf16 %v605
        %v622 = vunpack.c.l.bf16 %v606
        %v623 = vunpack.c.l.bf16 %v607
        %v624 = vunpack.c.l.bf16 %v608
        %v625 = vunpack.c.l.bf16 %v609
        %vm642 = vcmask 1045504
        %v643 = vrot.slane %v610, 2
        %v644 = vrot.slane %v293, 2
        %v645 = vsel %vm642, %v643, %v644
        %v646 = vrot.slane %v611, 2
        %v647 = vrot.slane %v294, 2
        %v648 = vsel %vm642, %v646, %v647
        %v649 = vrot.slane %v612, 2
        %v650 = vrot.slane %v295, 2
        %v651 = vsel %vm642, %v649, %v650
        %v652 = vrot.slane %v613, 2
        %v653 = vrot.slane %v296, 2
        %v654 = vsel %vm642, %v652, %v653
        %v655 = vrot.slane %v614, 2
        %v656 = vrot.slane %v297, 2
        %v657 = vsel %vm642, %v655, %v656
        %v658 = vrot.slane %v615, 2
        %v659 = vrot.slane %v298, 2
        %v660 = vsel %vm642, %v658, %v659
        %v661 = vrot.slane %v616, 2
        %v662 = vrot.slane %v299, 2
        %v663 = vsel %vm642, %v661, %v662
        %v664 = vrot.slane %v617, 2
        %v665 = vrot.slane %v300, 2
        %v666 = vsel %vm642, %v664, %v665
        %v667 = vrot.slane %v618, 2
        %v668 = vrot.slane %v301, 2
        %v669 = vsel %vm642, %v667, %v668
        %v670 = vrot.slane %v619, 2
        %v671 = vrot.slane %v302, 2
        %v672 = vsel %vm642, %v670, %v671
        %v673 = vrot.slane %v620, 2
        %v674 = vrot.slane %v303, 2
        %v675 = vsel %vm642, %v673, %v674
        %v676 = vrot.slane %v621, 2
        %v677 = vrot.slane %v304, 2
        %v678 = vsel %vm642, %v676, %v677
        %v679 = vrot.slane %v622, 2
        %v680 = vrot.slane %v305, 2
        %v681 = vsel %vm642, %v679, %v680
        %v682 = vrot.slane %v623, 2
        %v683 = vrot.slane %v306, 2
        %v684 = vsel %vm642, %v682, %v683
        %v685 = vrot.slane %v624, 2
        %v686 = vrot.slane %v307, 2
        %v687 = vsel %vm642, %v685, %v686
        %v688 = vrot.slane %v625, 2
        %v689 = vrot.slane %v308, 2
        %v690 = vsel %vm642, %v688, %v689
        %s691 = scalar_lea.vmem %s233, 8
        %v692 = vld [vmem:[%s691] sm:$0xf]
        %v693 = vsel %vm392, %v645, 0
        %v695 = vsel %vm392, %v648, 0
        %v697 = vsel %vm392, %v651, 0
        %v699 = vsel %vm392, %v654, 0
        %v701 = vsel %vm392, %v657, 0
        %v703 = vsel %vm392, %v660, 0
        %v705 = vsel %vm392, %v663, 0
        %v707 = vsel %vm392, %v666, 0
        %v709 = vsel %vm392, %v669, 0
        %v711 = vsel %vm392, %v672, 0
        %v713 = vsel %vm392, %v675, 0
        %v715 = vsel %vm392, %v678, 0
        %v717 = vsel %vm392, %v681, 0
        %v719 = vsel %vm392, %v684, 0
        %v721 = vsel %vm392, %v687, 0
        %v723 = vsel %vm392, %v690, 0
        %v726 = vsel %vm425, %v692, 0
        %728 = vmatpush.msra.mxu0 0.0
        %729 = vmatpush.msra.mxu0 0.0
        %730 = vmatpush.msra.mxu0 0.0
        %731 = vmatpush.msra.mxu0 0.0
        %732 = vmatpush.msra.mxu0 0.0
        %733 = vmatpush.msra.mxu0 0.0
        %734 = vmatpush.msra.mxu0 0.0
        %735 = vmatpush.msra.mxu0 0.0
        %736 = vmatpush.msra.mxu0 0.0
        %737 = vmatpush.msra.mxu0 0.0
        %738 = vmatpush.msra.mxu0 0.0
        %739 = vmatpush.msra.mxu0 0.0
        %740 = vmatpush.msra.mxu0 0.0
        %741 = vmatpush.msra.mxu0 0.0
        %742 = vmatpush.msra.mxu0 0.0
        %743 = vmatpush.msra.mxu0 %v726
        %744 = vmatmul.f32.gmra.mxu0 %v693
        %v745 = vpop.f32.mrf.mxu0
        %v746 = vadd.f32 0.0, %v745
        %747 = vmatmul.f32.gmra.mxu0 %v695
        %v748 = vpop.f32.mrf.mxu0
        %v749 = vadd.f32 0.0, %v748
        %750 = vmatmul.f32.gmra.mxu0 %v697
        %v751 = vpop.f32.mrf.mxu0
        %v752 = vadd.f32 0.0, %v751
        %753 = vmatmul.f32.gmra.mxu0 %v699
        %v754 = vpop.f32.mrf.mxu0
        %v755 = vadd.f32 0.0, %v754
        %756 = vmatmul.f32.gmra.mxu0 %v701
        %v757 = vpop.f32.mrf.mxu0
        %v758 = vadd.f32 0.0, %v757
        %759 = vmatmul.f32.gmra.mxu0 %v703
        %v760 = vpop.f32.mrf.mxu0
        %v761 = vadd.f32 0.0, %v760
        %762 = vmatmul.f32.gmra.mxu0 %v705
        %v763 = vpop.f32.mrf.mxu0
        %v764 = vadd.f32 0.0, %v763
        %765 = vmatmul.f32.gmra.mxu0 %v707
        %v766 = vpop.f32.mrf.mxu0
        %v767 = vadd.f32 0.0, %v766
        %768 = vmatmul.f32.gmra.mxu0 %v709
        %v769 = vpop.f32.mrf.mxu0
        %v770 = vadd.f32 0.0, %v769
        %771 = vmatmul.f32.gmra.mxu0 %v711
        %v772 = vpop.f32.mrf.mxu0
        %v773 = vadd.f32 0.0, %v772
        %774 = vmatmul.f32.gmra.mxu0 %v713
        %v775 = vpop.f32.mrf.mxu0
        %v776 = vadd.f32 0.0, %v775
        %777 = vmatmul.f32.gmra.mxu0 %v715
        %v778 = vpop.f32.mrf.mxu0
        %v779 = vadd.f32 0.0, %v778
        %780 = vmatmul.f32.gmra.mxu0 %v717
        %v781 = vpop.f32.mrf.mxu0
        %v782 = vadd.f32 0.0, %v781
        %783 = vmatmul.f32.gmra.mxu0 %v719
        %v784 = vpop.f32.mrf.mxu0
        %v785 = vadd.f32 0.0, %v784
        %786 = vmatmul.f32.gmra.mxu0 %v721
        %v787 = vpop.f32.mrf.mxu0
        %v788 = vadd.f32 0.0, %v787
        %789 = vmatmul.f32.gmra.mxu0 %v723
        %v790 = vpop.f32.mrf.mxu0
        %v791 = vadd.f32 0.0, %v790
        %792 = vdwg.mxu0
        %v793 = vadd.f32 %v547, %v746
        %v794 = vadd.f32 %v550, %v749
        %v795 = vadd.f32 %v553, %v752
        %v796 = vadd.f32 %v556, %v755
        %v797 = vadd.f32 %v559, %v758
        %v798 = vadd.f32 %v562, %v761
        %v799 = vadd.f32 %v565, %v764
        %v800 = vadd.f32 %v568, %v767
        %v801 = vadd.f32 %v571, %v770
        %v802 = vadd.f32 %v574, %v773
        %v803 = vadd.f32 %v577, %v776
        %v804 = vadd.f32 %v580, %v779
        %v805 = vadd.f32 %v583, %v782
        %v806 = vadd.f32 %v586, %v785
        %v807 = vadd.f32 %v589, %v788
        %v808 = vadd.f32 %v592, %v791
        %s809 = sadd.s32 2, %s241
        %s810 = smul.addr %s809, 4
        %s811 = scalar_lea.vmem %s227, %s810
        %v812 = vld [vmem:[%s811] sm:$0xf]
        %v813 = vld [vmem:[%s811 + $0x8] sm:$0xf]
        %v814 = vld [vmem:[%s811 + $0x10] sm:$0xf]
        %v815 = vld [vmem:[%s811 + $0x18] sm:$0xf]
        %v816 = vld [vmem:[%s811 + $0x20] sm:$0xf]
        %v817 = vld [vmem:[%s811 + $0x28] sm:$0xf]
        %v818 = vld [vmem:[%s811 + $0x30] sm:$0xf]
        %v819 = vld [vmem:[%s811 + $0x38] sm:$0xf]
        %v820 = vld [vmem:[%s811 + $0x50] sm:$0xf]
        %v821 = vld [vmem:[%s811 + $0x58] sm:$0xf]
        %v822 = vld [vmem:[%s811 + $0x60] sm:$0xf]
        %v823 = vld [vmem:[%s811 + $0x68] sm:$0xf]
        %v824 = vld [vmem:[%s811 + $0x70] sm:$0xf]
        %v825 = vld [vmem:[%s811 + $0x78] sm:$0xf]
        %v826 = vld [vmem:[%s811 + $0x80] sm:$0xf]
        %v827 = vld [vmem:[%s811 + $0x88] sm:$0xf]
        %v828 = vunpack.c.l.bf16 %v812
        %v829 = vunpack.c.l.bf16 %v813
        %v830 = vunpack.c.l.bf16 %v814
        %v831 = vunpack.c.l.bf16 %v815
        %v832 = vunpack.c.l.bf16 %v816
        %v833 = vunpack.c.l.bf16 %v817
        %v834 = vunpack.c.l.bf16 %v818
        %v835 = vunpack.c.l.bf16 %v819
        %v836 = vunpack.c.l.bf16 %v820
        %v837 = vunpack.c.l.bf16 %v821
        %v838 = vunpack.c.l.bf16 %v822
        %v839 = vunpack.c.l.bf16 %v823
        %v840 = vunpack.c.l.bf16 %v824
        %v841 = vunpack.c.l.bf16 %v825
        %v842 = vunpack.c.l.bf16 %v826
        %v843 = vunpack.c.l.bf16 %v827
        %s844 = scalar_lea.vmem %s233, 12
        %v845 = vld [vmem:[%s844] sm:$0xf]
        %v847 = vsel %vm392, %v828, 0
        %v850 = vsel %vm392, %v829, 0
        %v853 = vsel %vm392, %v830, 0
        %v856 = vsel %vm392, %v831, 0
        %v859 = vsel %vm392, %v832, 0
        %v862 = vsel %vm392, %v833, 0
        %v865 = vsel %vm392, %v834, 0
        %v868 = vsel %vm392, %v835, 0
        %v871 = vsel %vm392, %v836, 0
        %v874 = vsel %vm392, %v837, 0
        %v877 = vsel %vm392, %v838, 0
        %v880 = vsel %vm392, %v839, 0
        %v883 = vsel %vm392, %v840, 0
        %v886 = vsel %vm392, %v841, 0
        %v889 = vsel %vm392, %v842, 0
        %v892 = vsel %vm392, %v843, 0
        %v895 = vsel %vm425, %v845, 0
        %897 = vmatpush.msra.mxu0 0.0
        %898 = vmatpush.msra.mxu0 0.0
        %899 = vmatpush.msra.mxu0 0.0
        %900 = vmatpush.msra.mxu0 0.0
        %901 = vmatpush.msra.mxu0 0.0
        %902 = vmatpush.msra.mxu0 0.0
        %903 = vmatpush.msra.mxu0 0.0
        %904 = vmatpush.msra.mxu0 0.0
        %905 = vmatpush.msra.mxu0 0.0
        %906 = vmatpush.msra.mxu0 0.0
        %907 = vmatpush.msra.mxu0 0.0
        %908 = vmatpush.msra.mxu0 0.0
        %909 = vmatpush.msra.mxu0 0.0
        %910 = vmatpush.msra.mxu0 0.0
        %911 = vmatpush.msra.mxu0 0.0
        %912 = vmatpush.msra.mxu0 %v895
        %913 = vmatmul.f32.gmra.mxu0 %v847
        %v914 = vpop.f32.mrf.mxu0
        %v915 = vadd.f32 0.0, %v914
        %916 = vmatmul.f32.gmra.mxu0 %v850
        %v917 = vpop.f32.mrf.mxu0
        %v918 = vadd.f32 0.0, %v917
        %919 = vmatmul.f32.gmra.mxu0 %v853
        %v920 = vpop.f32.mrf.mxu0
        %v921 = vadd.f32 0.0, %v920
        %922 = vmatmul.f32.gmra.mxu0 %v856
        %v923 = vpop.f32.mrf.mxu0
        %v924 = vadd.f32 0.0, %v923
        %925 = vmatmul.f32.gmra.mxu0 %v859
        %v926 = vpop.f32.mrf.mxu0
        %v927 = vadd.f32 0.0, %v926
        %928 = vmatmul.f32.gmra.mxu0 %v862
        %v929 = vpop.f32.mrf.mxu0
        %v930 = vadd.f32 0.0, %v929
        %931 = vmatmul.f32.gmra.mxu0 %v865
        %v932 = vpop.f32.mrf.mxu0
        %v933 = vadd.f32 0.0, %v932
        %934 = vmatmul.f32.gmra.mxu0 %v868
        %v935 = vpop.f32.mrf.mxu0
        %v936 = vadd.f32 0.0, %v935
        %937 = vmatmul.f32.gmra.mxu0 %v871
        %v938 = vpop.f32.mrf.mxu0
        %v939 = vadd.f32 0.0, %v938
        %940 = vmatmul.f32.gmra.mxu0 %v874
        %v941 = vpop.f32.mrf.mxu0
        %v942 = vadd.f32 0.0, %v941
        %943 = vmatmul.f32.gmra.mxu0 %v877
        %v944 = vpop.f32.mrf.mxu0
        %v945 = vadd.f32 0.0, %v944
        %946 = vmatmul.f32.gmra.mxu0 %v880
        %v947 = vpop.f32.mrf.mxu0
        %v948 = vadd.f32 0.0, %v947
        %949 = vmatmul.f32.gmra.mxu0 %v883
        %v950 = vpop.f32.mrf.mxu0
        %v951 = vadd.f32 0.0, %v950
        %952 = vmatmul.f32.gmra.mxu0 %v886
        %v953 = vpop.f32.mrf.mxu0
        %v954 = vadd.f32 0.0, %v953
        %955 = vmatmul.f32.gmra.mxu0 %v889
        %v956 = vpop.f32.mrf.mxu0
        %v957 = vadd.f32 0.0, %v956
        %958 = vmatmul.f32.gmra.mxu0 %v892
        %v959 = vpop.f32.mrf.mxu0
        %v960 = vadd.f32 0.0, %v959
        %961 = vdwg.mxu0
        %v962 = vadd.f32 %v793, %v915
        %v963 = vadd.f32 %v794, %v918
        %v964 = vadd.f32 %v795, %v921
        %v965 = vadd.f32 %v796, %v924
        %v966 = vadd.f32 %v797, %v927
        %v967 = vadd.f32 %v798, %v930
        %v968 = vadd.f32 %v799, %v933
        %v969 = vadd.f32 %v800, %v936
        %v970 = vadd.f32 %v801, %v939
        %v971 = vadd.f32 %v802, %v942
        %v972 = vadd.f32 %v803, %v945
        %v973 = vadd.f32 %v804, %v948
        %v974 = vadd.f32 %v805, %v951
        %v975 = vadd.f32 %v806, %v954
        %v976 = vadd.f32 %v807, %v957
        %v977 = vadd.f32 %v808, %v960
        %v978 = vld [vmem:[%s811] sm:$0xf]
        %v979 = vld [vmem:[%s811 + $0x4] sm:$0x1]
        %v980 = vld [vmem:[%s811 + $0x8] sm:$0xf]
        %v981 = vld [vmem:[%s811 + $0xc] sm:$0x1]
        %v982 = vld [vmem:[%s811 + $0x10] sm:$0xf]
        %v983 = vld [vmem:[%s811 + $0x14] sm:$0x1]
        %v984 = vld [vmem:[%s811 + $0x18] sm:$0xf]
        %v985 = vld [vmem:[%s811 + $0x1c] sm:$0x1]
        %v986 = vld [vmem:[%s811 + $0x20] sm:$0xf]
        %v987 = vld [vmem:[%s811 + $0x24] sm:$0x1]
        %v988 = vld [vmem:[%s811 + $0x28] sm:$0xf]
        %v989 = vld [vmem:[%s811 + $0x2c] sm:$0x1]
        %v990 = vld [vmem:[%s811 + $0x30] sm:$0xf]
        %v991 = vld [vmem:[%s811 + $0x34] sm:$0x1]
        %v992 = vld [vmem:[%s811 + $0x38] sm:$0xf]
        %v993 = vld [vmem:[%s811 + $0x3c] sm:$0x1]
        %v994 = vld [vmem:[%s811 + $0x50] sm:$0xf]
        %v995 = vld [vmem:[%s811 + $0x54] sm:$0x1]
        %v996 = vld [vmem:[%s811 + $0x58] sm:$0xf]
        %v997 = vld [vmem:[%s811 + $0x5c] sm:$0x1]
        %v998 = vld [vmem:[%s811 + $0x60] sm:$0xf]
        %v999 = vld [vmem:[%s811 + $0x64] sm:$0x1]
        %v1000 = vld [vmem:[%s811 + $0x68] sm:$0xf]
        %v1001 = vld [vmem:[%s811 + $0x6c] sm:$0x1]
        %v1002 = vld [vmem:[%s811 + $0x70] sm:$0xf]
        %v1003 = vld [vmem:[%s811 + $0x74] sm:$0x1]
        %v1004 = vld [vmem:[%s811 + $0x78] sm:$0xf]
        %v1005 = vld [vmem:[%s811 + $0x7c] sm:$0x1]
        %v1006 = vld [vmem:[%s811 + $0x80] sm:$0xf]
        %v1007 = vld [vmem:[%s811 + $0x84] sm:$0x1]
        %v1008 = vld [vmem:[%s811 + $0x88] sm:$0xf]
        %v1009 = vld [vmem:[%s811 + $0x8c] sm:$0x1]
        %v1010 = vunpack.c.l.bf16 %v978
        %v1011 = vunpack.c.l.bf16 %v979
        %v1012 = vunpack.c.l.bf16 %v980
        %v1013 = vunpack.c.l.bf16 %v981
        %v1014 = vunpack.c.l.bf16 %v982
        %v1015 = vunpack.c.l.bf16 %v983
        %v1016 = vunpack.c.l.bf16 %v984
        %v1017 = vunpack.c.l.bf16 %v985
        %v1018 = vunpack.c.l.bf16 %v986
        %v1019 = vunpack.c.l.bf16 %v987
        %v1020 = vunpack.c.l.bf16 %v988
        %v1021 = vunpack.c.l.bf16 %v989
        %v1022 = vunpack.c.l.bf16 %v990
        %v1023 = vunpack.c.l.bf16 %v991
        %v1024 = vunpack.c.l.bf16 %v992
        %v1025 = vunpack.c.l.bf16 %v993
        %v1026 = vunpack.c.l.bf16 %v994
        %v1027 = vunpack.c.l.bf16 %v995
        %v1028 = vunpack.c.l.bf16 %v996
        %v1029 = vunpack.c.l.bf16 %v997
        %v1030 = vunpack.c.l.bf16 %v998
        %v1031 = vunpack.c.l.bf16 %v999
        %v1032 = vunpack.c.l.bf16 %v1000
        %v1033 = vunpack.c.l.bf16 %v1001
        %v1034 = vunpack.c.l.bf16 %v1002
        %v1035 = vunpack.c.l.bf16 %v1003
        %v1036 = vunpack.c.l.bf16 %v1004
        %v1037 = vunpack.c.l.bf16 %v1005
        %v1038 = vunpack.c.l.bf16 %v1006
        %v1039 = vunpack.c.l.bf16 %v1007
        %v1040 = vunpack.c.l.bf16 %v1008
        %v1041 = vunpack.c.l.bf16 %v1009
        %v1074 = vrot.slane %v1010, 1
        %v1075 = vrot.slane %v1011, 1
        %v1076 = vsel %vm341, %v1074, %v1075
        %v1077 = vrot.slane %v1012, 1
        %v1078 = vrot.slane %v1013, 1
        %v1079 = vsel %vm341, %v1077, %v1078
        %v1080 = vrot.slane %v1014, 1
        %v1081 = vrot.slane %v1015, 1
        %v1082 = vsel %vm341, %v1080, %v1081
        %v1083 = vrot.slane %v1016, 1
        %v1084 = vrot.slane %v1017, 1
        %v1085 = vsel %vm341, %v1083, %v1084
        %v1086 = vrot.slane %v1018, 1
        %v1087 = vrot.slane %v1019, 1
        %v1088 = vsel %vm341, %v1086, %v1087
        %v1089 = vrot.slane %v1020, 1
        %v1090 = vrot.slane %v1021, 1
        %v1091 = vsel %vm341, %v1089, %v1090
        %v1092 = vrot.slane %v1022, 1
        %v1093 = vrot.slane %v1023, 1
        %v1094 = vsel %vm341, %v1092, %v1093
        %v1095 = vrot.slane %v1024, 1
        %v1096 = vrot.slane %v1025, 1
        %v1097 = vsel %vm341, %v1095, %v1096
        %v1098 = vrot.slane %v1026, 1
        %v1099 = vrot.slane %v1027, 1
        %v1100 = vsel %vm341, %v1098, %v1099
        %v1101 = vrot.slane %v1028, 1
        %v1102 = vrot.slane %v1029, 1
        %v1103 = vsel %vm341, %v1101, %v1102
        %v1104 = vrot.slane %v1030, 1
        %v1105 = vrot.slane %v1031, 1
        %v1106 = vsel %vm341, %v1104, %v1105
        %v1107 = vrot.slane %v1032, 1
        %v1108 = vrot.slane %v1033, 1
        %v1109 = vsel %vm341, %v1107, %v1108
        %v1110 = vrot.slane %v1034, 1
        %v1111 = vrot.slane %v1035, 1
        %v1112 = vsel %vm341, %v1110, %v1111
        %v1113 = vrot.slane %v1036, 1
        %v1114 = vrot.slane %v1037, 1
        %v1115 = vsel %vm341, %v1113, %v1114
        %v1116 = vrot.slane %v1038, 1
        %v1117 = vrot.slane %v1039, 1
        %v1118 = vsel %vm341, %v1116, %v1117
        %v1119 = vrot.slane %v1040, 1
        %v1120 = vrot.slane %v1041, 1
        %v1121 = vsel %vm341, %v1119, %v1120
        %s1122 = scalar_lea.vmem %s233, 16
        %v1123 = vld [vmem:[%s1122] sm:$0xf]
        %v1124 = vsel %vm392, %v1076, 0
        %v1126 = vsel %vm392, %v1079, 0
        %v1128 = vsel %vm392, %v1082, 0
        %v1130 = vsel %vm392, %v1085, 0
        %v1132 = vsel %vm392, %v1088, 0
        %v1134 = vsel %vm392, %v1091, 0
        %v1136 = vsel %vm392, %v1094, 0
        %v1138 = vsel %vm392, %v1097, 0
        %v1140 = vsel %vm392, %v1100, 0
        %v1142 = vsel %vm392, %v1103, 0
        %v1144 = vsel %vm392, %v1106, 0
        %v1146 = vsel %vm392, %v1109, 0
        %v1148 = vsel %vm392, %v1112, 0
        %v1150 = vsel %vm392, %v1115, 0
        %v1152 = vsel %vm392, %v1118, 0
        %v1154 = vsel %vm392, %v1121, 0
        %v1157 = vsel %vm425, %v1123, 0
        %1159 = vmatpush.msra.mxu0 0.0
        %1160 = vmatpush.msra.mxu0 0.0
        %1161 = vmatpush.msra.mxu0 0.0
        %1162 = vmatpush.msra.mxu0 0.0
        %1163 = vmatpush.msra.mxu0 0.0
        %1164 = vmatpush.msra.mxu0 0.0
        %1165 = vmatpush.msra.mxu0 0.0
        %1166 = vmatpush.msra.mxu0 0.0
        %1167 = vmatpush.msra.mxu0 0.0
        %1168 = vmatpush.msra.mxu0 0.0
        %1169 = vmatpush.msra.mxu0 0.0
        %1170 = vmatpush.msra.mxu0 0.0
        %1171 = vmatpush.msra.mxu0 0.0
        %1172 = vmatpush.msra.mxu0 0.0
        %1173 = vmatpush.msra.mxu0 0.0
        %1174 = vmatpush.msra.mxu0 %v1157
        %1175 = vmatmul.f32.gmra.mxu0 %v1124
        %v1176 = vpop.f32.mrf.mxu0
        %v1177 = vadd.f32 0.0, %v1176
        %1178 = vmatmul.f32.gmra.mxu0 %v1126
        %v1179 = vpop.f32.mrf.mxu0
        %v1180 = vadd.f32 0.0, %v1179
        %1181 = vmatmul.f32.gmra.mxu0 %v1128
        %v1182 = vpop.f32.mrf.mxu0
        %v1183 = vadd.f32 0.0, %v1182
        %1184 = vmatmul.f32.gmra.mxu0 %v1130
        %v1185 = vpop.f32.mrf.mxu0
        %v1186 = vadd.f32 0.0, %v1185
        %1187 = vmatmul.f32.gmra.mxu0 %v1132
        %v1188 = vpop.f32.mrf.mxu0
        %v1189 = vadd.f32 0.0, %v1188
        %1190 = vmatmul.f32.gmra.mxu0 %v1134
        %v1191 = vpop.f32.mrf.mxu0
        %v1192 = vadd.f32 0.0, %v1191
        %1193 = vmatmul.f32.gmra.mxu0 %v1136
        %v1194 = vpop.f32.mrf.mxu0
        %v1195 = vadd.f32 0.0, %v1194
        %1196 = vmatmul.f32.gmra.mxu0 %v1138
        %v1197 = vpop.f32.mrf.mxu0
        %v1198 = vadd.f32 0.0, %v1197
        %1199 = vmatmul.f32.gmra.mxu0 %v1140
        %v1200 = vpop.f32.mrf.mxu0
        %v1201 = vadd.f32 0.0, %v1200
        %1202 = vmatmul.f32.gmra.mxu0 %v1142
        %v1203 = vpop.f32.mrf.mxu0
        %v1204 = vadd.f32 0.0, %v1203
        %1205 = vmatmul.f32.gmra.mxu0 %v1144
        %v1206 = vpop.f32.mrf.mxu0
        %v1207 = vadd.f32 0.0, %v1206
        %1208 = vmatmul.f32.gmra.mxu0 %v1146
        %v1209 = vpop.f32.mrf.mxu0
        %v1210 = vadd.f32 0.0, %v1209
        %1211 = vmatmul.f32.gmra.mxu0 %v1148
        %v1212 = vpop.f32.mrf.mxu0
        %v1213 = vadd.f32 0.0, %v1212
        %1214 = vmatmul.f32.gmra.mxu0 %v1150
        %v1215 = vpop.f32.mrf.mxu0
        %v1216 = vadd.f32 0.0, %v1215
        %1217 = vmatmul.f32.gmra.mxu0 %v1152
        %v1218 = vpop.f32.mrf.mxu0
        %v1219 = vadd.f32 0.0, %v1218
        %1220 = vmatmul.f32.gmra.mxu0 %v1154
        %v1221 = vpop.f32.mrf.mxu0
        %v1222 = vadd.f32 0.0, %v1221
        %1223 = vdwg.mxu0
        %v1224 = vadd.f32 %v962, %v1177
        %v1225 = vadd.f32 %v963, %v1180
        %v1226 = vadd.f32 %v964, %v1183
        %v1227 = vadd.f32 %v965, %v1186
        %v1228 = vadd.f32 %v966, %v1189
        %v1229 = vadd.f32 %v967, %v1192
        %v1230 = vadd.f32 %v968, %v1195
        %v1231 = vadd.f32 %v969, %v1198
        %v1232 = vadd.f32 %v970, %v1201
        %v1233 = vadd.f32 %v971, %v1204
        %v1234 = vadd.f32 %v972, %v1207
        %v1235 = vadd.f32 %v973, %v1210
        %v1236 = vadd.f32 %v974, %v1213
        %v1237 = vadd.f32 %v975, %v1216
        %v1238 = vadd.f32 %v976, %v1219
        %v1239 = vadd.f32 %v977, %v1222
        %v1240 = vld [vmem:[%s811] sm:$0xe]
        %v1241 = vld [vmem:[%s811 + $0x8] sm:$0xe]
        %v1242 = vld [vmem:[%s811 + $0x10] sm:$0xe]
        %v1243 = vld [vmem:[%s811 + $0x18] sm:$0xe]
        %v1244 = vld [vmem:[%s811 + $0x20] sm:$0xe]
        %v1245 = vld [vmem:[%s811 + $0x28] sm:$0xe]
        %v1246 = vld [vmem:[%s811 + $0x30] sm:$0xe]
        %v1247 = vld [vmem:[%s811 + $0x38] sm:$0xe]
        %v1248 = vld [vmem:[%s811 + $0x50] sm:$0xe]
        %v1249 = vld [vmem:[%s811 + $0x58] sm:$0xe]
        %v1250 = vld [vmem:[%s811 + $0x60] sm:$0xe]
        %v1251 = vld [vmem:[%s811 + $0x68] sm:$0xe]
        %v1252 = vld [vmem:[%s811 + $0x70] sm:$0xe]
        %v1253 = vld [vmem:[%s811 + $0x78] sm:$0xe]
        %v1254 = vld [vmem:[%s811 + $0x80] sm:$0xe]
        %v1255 = vld [vmem:[%s811 + $0x88] sm:$0xe]
        %v1256 = vunpack.c.l.bf16 %v1240
        %v1257 = vunpack.c.l.bf16 %v1241
        %v1258 = vunpack.c.l.bf16 %v1242
        %v1259 = vunpack.c.l.bf16 %v1243
        %v1260 = vunpack.c.l.bf16 %v1244
        %v1261 = vunpack.c.l.bf16 %v1245
        %v1262 = vunpack.c.l.bf16 %v1246
        %v1263 = vunpack.c.l.bf16 %v1247
        %v1264 = vunpack.c.l.bf16 %v1248
        %v1265 = vunpack.c.l.bf16 %v1249
        %v1266 = vunpack.c.l.bf16 %v1250
        %v1267 = vunpack.c.l.bf16 %v1251
        %v1268 = vunpack.c.l.bf16 %v1252
        %v1269 = vunpack.c.l.bf16 %v1253
        %v1270 = vunpack.c.l.bf16 %v1254
        %v1271 = vunpack.c.l.bf16 %v1255
        %v1288 = vrot.slane %v1256, 2
        %v1289 = vrot.slane %v1011, 2
        %v1290 = vsel %vm642, %v1288, %v1289
        %v1291 = vrot.slane %v1257, 2
        %v1292 = vrot.slane %v1013, 2
        %v1293 = vsel %vm642, %v1291, %v1292
        %v1294 = vrot.slane %v1258, 2
        %v1295 = vrot.slane %v1015, 2
        %v1296 = vsel %vm642, %v1294, %v1295
        %v1297 = vrot.slane %v1259, 2
        %v1298 = vrot.slane %v1017, 2
        %v1299 = vsel %vm642, %v1297, %v1298
        %v1300 = vrot.slane %v1260, 2
        %v1301 = vrot.slane %v1019, 2
        %v1302 = vsel %vm642, %v1300, %v1301
        %v1303 = vrot.slane %v1261, 2
        %v1304 = vrot.slane %v1021, 2
        %v1305 = vsel %vm642, %v1303, %v1304
        %v1306 = vrot.slane %v1262, 2
        %v1307 = vrot.slane %v1023, 2
        %v1308 = vsel %vm642, %v1306, %v1307
        %v1309 = vrot.slane %v1263, 2
        %v1310 = vrot.slane %v1025, 2
        %v1311 = vsel %vm642, %v1309, %v1310
        %v1312 = vrot.slane %v1264, 2
        %v1313 = vrot.slane %v1027, 2
        %v1314 = vsel %vm642, %v1312, %v1313
        %v1315 = vrot.slane %v1265, 2
        %v1316 = vrot.slane %v1029, 2
        %v1317 = vsel %vm642, %v1315, %v1316
        %v1318 = vrot.slane %v1266, 2
        %v1319 = vrot.slane %v1031, 2
        %v1320 = vsel %vm642, %v1318, %v1319
        %v1321 = vrot.slane %v1267, 2
        %v1322 = vrot.slane %v1033, 2
        %v1323 = vsel %vm642, %v1321, %v1322
        %v1324 = vrot.slane %v1268, 2
        %v1325 = vrot.slane %v1035, 2
        %v1326 = vsel %vm642, %v1324, %v1325
        %v1327 = vrot.slane %v1269, 2
        %v1328 = vrot.slane %v1037, 2
        %v1329 = vsel %vm642, %v1327, %v1328
        %v1330 = vrot.slane %v1270, 2
        %v1331 = vrot.slane %v1039, 2
        %v1332 = vsel %vm642, %v1330, %v1331
        %v1333 = vrot.slane %v1271, 2
        %v1334 = vrot.slane %v1041, 2
        %v1335 = vsel %vm642, %v1333, %v1334
        %s1336 = scalar_lea.vmem %s233, 20
        %v1337 = vld [vmem:[%s1336] sm:$0xf]
        %v1338 = vsel %vm392, %v1290, 0
        %v1340 = vsel %vm392, %v1293, 0
        %v1342 = vsel %vm392, %v1296, 0
        %v1344 = vsel %vm392, %v1299, 0
        %v1346 = vsel %vm392, %v1302, 0
        %v1348 = vsel %vm392, %v1305, 0
        %v1350 = vsel %vm392, %v1308, 0
        %v1352 = vsel %vm392, %v1311, 0
        %v1354 = vsel %vm392, %v1314, 0
        %v1356 = vsel %vm392, %v1317, 0
        %v1358 = vsel %vm392, %v1320, 0
        %v1360 = vsel %vm392, %v1323, 0
        %v1362 = vsel %vm392, %v1326, 0
        %v1364 = vsel %vm392, %v1329, 0
        %v1366 = vsel %vm392, %v1332, 0
        %v1368 = vsel %vm392, %v1335, 0
        %v1371 = vsel %vm425, %v1337, 0
        %1373 = vmatpush.msra.mxu0 0.0
        %1374 = vmatpush.msra.mxu0 0.0
        %1375 = vmatpush.msra.mxu0 0.0
        %1376 = vmatpush.msra.mxu0 0.0
        %1377 = vmatpush.msra.mxu0 0.0
        %1378 = vmatpush.msra.mxu0 0.0
        %1379 = vmatpush.msra.mxu0 0.0
        %1380 = vmatpush.msra.mxu0 0.0
        %1381 = vmatpush.msra.mxu0 0.0
        %1382 = vmatpush.msra.mxu0 0.0
        %1383 = vmatpush.msra.mxu0 0.0
        %1384 = vmatpush.msra.mxu0 0.0
        %1385 = vmatpush.msra.mxu0 0.0
        %1386 = vmatpush.msra.mxu0 0.0
        %1387 = vmatpush.msra.mxu0 0.0
        %1388 = vmatpush.msra.mxu0 %v1371
        %1389 = vmatmul.f32.gmra.mxu0 %v1338
        %v1390 = vpop.f32.mrf.mxu0
        %v1391 = vadd.f32 0.0, %v1390
        %1392 = vmatmul.f32.gmra.mxu0 %v1340
        %v1393 = vpop.f32.mrf.mxu0
        %v1394 = vadd.f32 0.0, %v1393
        %1395 = vmatmul.f32.gmra.mxu0 %v1342
        %v1396 = vpop.f32.mrf.mxu0
        %v1397 = vadd.f32 0.0, %v1396
        %1398 = vmatmul.f32.gmra.mxu0 %v1344
        %v1399 = vpop.f32.mrf.mxu0
        %v1400 = vadd.f32 0.0, %v1399
        %1401 = vmatmul.f32.gmra.mxu0 %v1346
        %v1402 = vpop.f32.mrf.mxu0
        %v1403 = vadd.f32 0.0, %v1402
        %1404 = vmatmul.f32.gmra.mxu0 %v1348
        %v1405 = vpop.f32.mrf.mxu0
        %v1406 = vadd.f32 0.0, %v1405
        %1407 = vmatmul.f32.gmra.mxu0 %v1350
        %v1408 = vpop.f32.mrf.mxu0
        %v1409 = vadd.f32 0.0, %v1408
        %1410 = vmatmul.f32.gmra.mxu0 %v1352
        %v1411 = vpop.f32.mrf.mxu0
        %v1412 = vadd.f32 0.0, %v1411
        %1413 = vmatmul.f32.gmra.mxu0 %v1354
        %v1414 = vpop.f32.mrf.mxu0
        %v1415 = vadd.f32 0.0, %v1414
        %1416 = vmatmul.f32.gmra.mxu0 %v1356
        %v1417 = vpop.f32.mrf.mxu0
        %v1418 = vadd.f32 0.0, %v1417
        %1419 = vmatmul.f32.gmra.mxu0 %v1358
        %v1420 = vpop.f32.mrf.mxu0
        %v1421 = vadd.f32 0.0, %v1420
        %1422 = vmatmul.f32.gmra.mxu0 %v1360
        %v1423 = vpop.f32.mrf.mxu0
        %v1424 = vadd.f32 0.0, %v1423
        %1425 = vmatmul.f32.gmra.mxu0 %v1362
        %v1426 = vpop.f32.mrf.mxu0
        %v1427 = vadd.f32 0.0, %v1426
        %1428 = vmatmul.f32.gmra.mxu0 %v1364
        %v1429 = vpop.f32.mrf.mxu0
        %v1430 = vadd.f32 0.0, %v1429
        %1431 = vmatmul.f32.gmra.mxu0 %v1366
        %v1432 = vpop.f32.mrf.mxu0
        %v1433 = vadd.f32 0.0, %v1432
        %1434 = vmatmul.f32.gmra.mxu0 %v1368
        %v1435 = vpop.f32.mrf.mxu0
        %v1436 = vadd.f32 0.0, %v1435
        %1437 = vdwg.mxu0
        %v1438 = vadd.f32 %v1224, %v1391
        %v1439 = vadd.f32 %v1225, %v1394
        %v1440 = vadd.f32 %v1226, %v1397
        %v1441 = vadd.f32 %v1227, %v1400
        %v1442 = vadd.f32 %v1228, %v1403
        %v1443 = vadd.f32 %v1229, %v1406
        %v1444 = vadd.f32 %v1230, %v1409
        %v1445 = vadd.f32 %v1231, %v1412
        %v1446 = vadd.f32 %v1232, %v1415
        %v1447 = vadd.f32 %v1233, %v1418
        %v1448 = vadd.f32 %v1234, %v1421
        %v1449 = vadd.f32 %v1235, %v1424
        %v1450 = vadd.f32 %v1236, %v1427
        %v1451 = vadd.f32 %v1237, %v1430
        %v1452 = vadd.f32 %v1238, %v1433
        %v1453 = vadd.f32 %v1239, %v1436
        %s1454 = sadd.s32 4, %s241
        %s1455 = smul.addr %s1454, 4
        %s1456 = scalar_lea.vmem %s227, %s1455
        %v1457 = vld [vmem:[%s1456] sm:$0xf]
        %v1458 = vld [vmem:[%s1456 + $0x8] sm:$0xf]
        %v1459 = vld [vmem:[%s1456 + $0x10] sm:$0xf]
        %v1460 = vld [vmem:[%s1456 + $0x18] sm:$0xf]
        %v1461 = vld [vmem:[%s1456 + $0x20] sm:$0xf]
        %v1462 = vld [vmem:[%s1456 + $0x28] sm:$0xf]
        %v1463 = vld [vmem:[%s1456 + $0x30] sm:$0xf]
        %v1464 = vld [vmem:[%s1456 + $0x38] sm:$0xf]
        %v1465 = vld [vmem:[%s1456 + $0x50] sm:$0xf]
        %v1466 = vld [vmem:[%s1456 + $0x58] sm:$0xf]
        %v1467 = vld [vmem:[%s1456 + $0x60] sm:$0xf]
        %v1468 = vld [vmem:[%s1456 + $0x68] sm:$0xf]
        %v1469 = vld [vmem:[%s1456 + $0x70] sm:$0xf]
        %v1470 = vld [vmem:[%s1456 + $0x78] sm:$0xf]
        %v1471 = vld [vmem:[%s1456 + $0x80] sm:$0xf]
        %v1472 = vld [vmem:[%s1456 + $0x88] sm:$0xf]
        %v1473 = vunpack.c.l.bf16 %v1457
        %v1474 = vunpack.c.l.bf16 %v1458
        %v1475 = vunpack.c.l.bf16 %v1459
        %v1476 = vunpack.c.l.bf16 %v1460
        %v1477 = vunpack.c.l.bf16 %v1461
        %v1478 = vunpack.c.l.bf16 %v1462
        %v1479 = vunpack.c.l.bf16 %v1463
        %v1480 = vunpack.c.l.bf16 %v1464
        %v1481 = vunpack.c.l.bf16 %v1465
        %v1482 = vunpack.c.l.bf16 %v1466
        %v1483 = vunpack.c.l.bf16 %v1467
        %v1484 = vunpack.c.l.bf16 %v1468
        %v1485 = vunpack.c.l.bf16 %v1469
        %v1486 = vunpack.c.l.bf16 %v1470
        %v1487 = vunpack.c.l.bf16 %v1471
        %v1488 = vunpack.c.l.bf16 %v1472
        %s1489 = scalar_lea.vmem %s233, 24
        %v1490 = vld [vmem:[%s1489] sm:$0xf]
        %v1492 = vsel %vm392, %v1473, 0
        %v1495 = vsel %vm392, %v1474, 0
        %v1498 = vsel %vm392, %v1475, 0
        %v1501 = vsel %vm392, %v1476, 0
        %v1504 = vsel %vm392, %v1477, 0
        %v1507 = vsel %vm392, %v1478, 0
        %v1510 = vsel %vm392, %v1479, 0
        %v1513 = vsel %vm392, %v1480, 0
        %v1516 = vsel %vm392, %v1481, 0
        %v1519 = vsel %vm392, %v1482, 0
        %v1522 = vsel %vm392, %v1483, 0
        %v1525 = vsel %vm392, %v1484, 0
        %v1528 = vsel %vm392, %v1485, 0
        %v1531 = vsel %vm392, %v1486, 0
        %v1534 = vsel %vm392, %v1487, 0
        %v1537 = vsel %vm392, %v1488, 0
        %v1540 = vsel %vm425, %v1490, 0
        %1542 = vmatpush.msra.mxu0 0.0
        %1543 = vmatpush.msra.mxu0 0.0
        %1544 = vmatpush.msra.mxu0 0.0
        %1545 = vmatpush.msra.mxu0 0.0
        %1546 = vmatpush.msra.mxu0 0.0
        %1547 = vmatpush.msra.mxu0 0.0
        %1548 = vmatpush.msra.mxu0 0.0
        %1549 = vmatpush.msra.mxu0 0.0
        %1550 = vmatpush.msra.mxu0 0.0
        %1551 = vmatpush.msra.mxu0 0.0
        %1552 = vmatpush.msra.mxu0 0.0
        %1553 = vmatpush.msra.mxu0 0.0
        %1554 = vmatpush.msra.mxu0 0.0
        %1555 = vmatpush.msra.mxu0 0.0
        %1556 = vmatpush.msra.mxu0 0.0
        %1557 = vmatpush.msra.mxu0 %v1540
        %1558 = vmatmul.f32.gmra.mxu0 %v1492
        %v1559 = vpop.f32.mrf.mxu0
        %v1560 = vadd.f32 0.0, %v1559
        %1561 = vmatmul.f32.gmra.mxu0 %v1495
        %v1562 = vpop.f32.mrf.mxu0
        %v1563 = vadd.f32 0.0, %v1562
        %1564 = vmatmul.f32.gmra.mxu0 %v1498
        %v1565 = vpop.f32.mrf.mxu0
        %v1566 = vadd.f32 0.0, %v1565
        %1567 = vmatmul.f32.gmra.mxu0 %v1501
        %v1568 = vpop.f32.mrf.mxu0
        %v1569 = vadd.f32 0.0, %v1568
        %1570 = vmatmul.f32.gmra.mxu0 %v1504
        %v1571 = vpop.f32.mrf.mxu0
        %v1572 = vadd.f32 0.0, %v1571
        %1573 = vmatmul.f32.gmra.mxu0 %v1507
        %v1574 = vpop.f32.mrf.mxu0
        %v1575 = vadd.f32 0.0, %v1574
        %1576 = vmatmul.f32.gmra.mxu0 %v1510
        %v1577 = vpop.f32.mrf.mxu0
        %v1578 = vadd.f32 0.0, %v1577
        %1579 = vmatmul.f32.gmra.mxu0 %v1513
        %v1580 = vpop.f32.mrf.mxu0
        %v1581 = vadd.f32 0.0, %v1580
        %1582 = vmatmul.f32.gmra.mxu0 %v1516
        %v1583 = vpop.f32.mrf.mxu0
        %v1584 = vadd.f32 0.0, %v1583
        %1585 = vmatmul.f32.gmra.mxu0 %v1519
        %v1586 = vpop.f32.mrf.mxu0
        %v1587 = vadd.f32 0.0, %v1586
        %1588 = vmatmul.f32.gmra.mxu0 %v1522
        %v1589 = vpop.f32.mrf.mxu0
        %v1590 = vadd.f32 0.0, %v1589
        %1591 = vmatmul.f32.gmra.mxu0 %v1525
        %v1592 = vpop.f32.mrf.mxu0
        %v1593 = vadd.f32 0.0, %v1592
        %1594 = vmatmul.f32.gmra.mxu0 %v1528
        %v1595 = vpop.f32.mrf.mxu0
        %v1596 = vadd.f32 0.0, %v1595
        %1597 = vmatmul.f32.gmra.mxu0 %v1531
        %v1598 = vpop.f32.mrf.mxu0
        %v1599 = vadd.f32 0.0, %v1598
        %1600 = vmatmul.f32.gmra.mxu0 %v1534
        %v1601 = vpop.f32.mrf.mxu0
        %v1602 = vadd.f32 0.0, %v1601
        %1603 = vmatmul.f32.gmra.mxu0 %v1537
        %v1604 = vpop.f32.mrf.mxu0
        %v1605 = vadd.f32 0.0, %v1604
        %1606 = vdwg.mxu0
        %v1607 = vadd.f32 %v1438, %v1560
        %v1608 = vadd.f32 %v1439, %v1563
        %v1609 = vadd.f32 %v1440, %v1566
        %v1610 = vadd.f32 %v1441, %v1569
        %v1611 = vadd.f32 %v1442, %v1572
        %v1612 = vadd.f32 %v1443, %v1575
        %v1613 = vadd.f32 %v1444, %v1578
        %v1614 = vadd.f32 %v1445, %v1581
        %v1615 = vadd.f32 %v1446, %v1584
        %v1616 = vadd.f32 %v1447, %v1587
        %v1617 = vadd.f32 %v1448, %v1590
        %v1618 = vadd.f32 %v1449, %v1593
        %v1619 = vadd.f32 %v1450, %v1596
        %v1620 = vadd.f32 %v1451, %v1599
        %v1621 = vadd.f32 %v1452, %v1602
        %v1622 = vadd.f32 %v1453, %v1605
        %v1623 = vld [vmem:[%s1456] sm:$0xf]
        %v1624 = vld [vmem:[%s1456 + $0x4] sm:$0x1]
        %v1625 = vld [vmem:[%s1456 + $0x8] sm:$0xf]
        %v1626 = vld [vmem:[%s1456 + $0xc] sm:$0x1]
        %v1627 = vld [vmem:[%s1456 + $0x10] sm:$0xf]
        %v1628 = vld [vmem:[%s1456 + $0x14] sm:$0x1]
        %v1629 = vld [vmem:[%s1456 + $0x18] sm:$0xf]
        %v1630 = vld [vmem:[%s1456 + $0x1c] sm:$0x1]
        %v1631 = vld [vmem:[%s1456 + $0x20] sm:$0xf]
        %v1632 = vld [vmem:[%s1456 + $0x24] sm:$0x1]
        %v1633 = vld [vmem:[%s1456 + $0x28] sm:$0xf]
        %v1634 = vld [vmem:[%s1456 + $0x2c] sm:$0x1]
        %v1635 = vld [vmem:[%s1456 + $0x30] sm:$0xf]
        %v1636 = vld [vmem:[%s1456 + $0x34] sm:$0x1]
        %v1637 = vld [vmem:[%s1456 + $0x38] sm:$0xf]
        %v1638 = vld [vmem:[%s1456 + $0x3c] sm:$0x1]
        %v1639 = vld [vmem:[%s1456 + $0x50] sm:$0xf]
        %v1640 = vld [vmem:[%s1456 + $0x54] sm:$0x1]
        %v1641 = vld [vmem:[%s1456 + $0x58] sm:$0xf]
        %v1642 = vld [vmem:[%s1456 + $0x5c] sm:$0x1]
        %v1643 = vld [vmem:[%s1456 + $0x60] sm:$0xf]
        %v1644 = vld [vmem:[%s1456 + $0x64] sm:$0x1]
        %v1645 = vld [vmem:[%s1456 + $0x68] sm:$0xf]
        %v1646 = vld [vmem:[%s1456 + $0x6c] sm:$0x1]
        %v1647 = vld [vmem:[%s1456 + $0x70] sm:$0xf]
        %v1648 = vld [vmem:[%s1456 + $0x74] sm:$0x1]
        %v1649 = vld [vmem:[%s1456 + $0x78] sm:$0xf]
        %v1650 = vld [vmem:[%s1456 + $0x7c] sm:$0x1]
        %v1651 = vld [vmem:[%s1456 + $0x80] sm:$0xf]
        %v1652 = vld [vmem:[%s1456 + $0x84] sm:$0x1]
        %v1653 = vld [vmem:[%s1456 + $0x88] sm:$0xf]
        %v1654 = vld [vmem:[%s1456 + $0x8c] sm:$0x1]
        %v1655 = vunpack.c.l.bf16 %v1623
        %v1656 = vunpack.c.l.bf16 %v1624
        %v1657 = vunpack.c.l.bf16 %v1625
        %v1658 = vunpack.c.l.bf16 %v1626
        %v1659 = vunpack.c.l.bf16 %v1627
        %v1660 = vunpack.c.l.bf16 %v1628
        %v1661 = vunpack.c.l.bf16 %v1629
        %v1662 = vunpack.c.l.bf16 %v1630
        %v1663 = vunpack.c.l.bf16 %v1631
        %v1664 = vunpack.c.l.bf16 %v1632
        %v1665 = vunpack.c.l.bf16 %v1633
        %v1666 = vunpack.c.l.bf16 %v1634
        %v1667 = vunpack.c.l.bf16 %v1635
        %v1668 = vunpack.c.l.bf16 %v1636
        %v1669 = vunpack.c.l.bf16 %v1637
        %v1670 = vunpack.c.l.bf16 %v1638
        %v1671 = vunpack.c.l.bf16 %v1639
        %v1672 = vunpack.c.l.bf16 %v1640
        %v1673 = vunpack.c.l.bf16 %v1641
        %v1674 = vunpack.c.l.bf16 %v1642
        %v1675 = vunpack.c.l.bf16 %v1643
        %v1676 = vunpack.c.l.bf16 %v1644
        %v1677 = vunpack.c.l.bf16 %v1645
        %v1678 = vunpack.c.l.bf16 %v1646
        %v1679 = vunpack.c.l.bf16 %v1647
        %v1680 = vunpack.c.l.bf16 %v1648
        %v1681 = vunpack.c.l.bf16 %v1649
        %v1682 = vunpack.c.l.bf16 %v1650
        %v1683 = vunpack.c.l.bf16 %v1651
        %v1684 = vunpack.c.l.bf16 %v1652
        %v1685 = vunpack.c.l.bf16 %v1653
        %v1686 = vunpack.c.l.bf16 %v1654
        %v1719 = vrot.slane %v1655, 1
        %v1720 = vrot.slane %v1656, 1
        %v1721 = vsel %vm341, %v1719, %v1720
        %v1722 = vrot.slane %v1657, 1
        %v1723 = vrot.slane %v1658, 1
        %v1724 = vsel %vm341, %v1722, %v1723
        %v1725 = vrot.slane %v1659, 1
        %v1726 = vrot.slane %v1660, 1
        %v1727 = vsel %vm341, %v1725, %v1726
        %v1728 = vrot.slane %v1661, 1
        %v1729 = vrot.slane %v1662, 1
        %v1730 = vsel %vm341, %v1728, %v1729
        %v1731 = vrot.slane %v1663, 1
        %v1732 = vrot.slane %v1664, 1
        %v1733 = vsel %vm341, %v1731, %v1732
        %v1734 = vrot.slane %v1665, 1
        %v1735 = vrot.slane %v1666, 1
        %v1736 = vsel %vm341, %v1734, %v1735
        %v1737 = vrot.slane %v1667, 1
        %v1738 = vrot.slane %v1668, 1
        %v1739 = vsel %vm341, %v1737, %v1738
        %v1740 = vrot.slane %v1669, 1
        %v1741 = vrot.slane %v1670, 1
        %v1742 = vsel %vm341, %v1740, %v1741
        %v1743 = vrot.slane %v1671, 1
        %v1744 = vrot.slane %v1672, 1
        %v1745 = vsel %vm341, %v1743, %v1744
        %v1746 = vrot.slane %v1673, 1
        %v1747 = vrot.slane %v1674, 1
        %v1748 = vsel %vm341, %v1746, %v1747
        %v1749 = vrot.slane %v1675, 1
        %v1750 = vrot.slane %v1676, 1
        %v1751 = vsel %vm341, %v1749, %v1750
        %v1752 = vrot.slane %v1677, 1
        %v1753 = vrot.slane %v1678, 1
        %v1754 = vsel %vm341, %v1752, %v1753
        %v1755 = vrot.slane %v1679, 1
        %v1756 = vrot.slane %v1680, 1
        %v1757 = vsel %vm341, %v1755, %v1756
        %v1758 = vrot.slane %v1681, 1
        %v1759 = vrot.slane %v1682, 1
        %v1760 = vsel %vm341, %v1758, %v1759
        %v1761 = vrot.slane %v1683, 1
        %v1762 = vrot.slane %v1684, 1
        %v1763 = vsel %vm341, %v1761, %v1762
        %v1764 = vrot.slane %v1685, 1
        %v1765 = vrot.slane %v1686, 1
        %v1766 = vsel %vm341, %v1764, %v1765
        %s1767 = scalar_lea.vmem %s233, 28
        %v1768 = vld [vmem:[%s1767] sm:$0xf]
        %v1769 = vsel %vm392, %v1721, 0
        %v1771 = vsel %vm392, %v1724, 0
        %v1773 = vsel %vm392, %v1727, 0
        %v1775 = vsel %vm392, %v1730, 0
        %v1777 = vsel %vm392, %v1733, 0
        %v1779 = vsel %vm392, %v1736, 0
        %v1781 = vsel %vm392, %v1739, 0
        %v1783 = vsel %vm392, %v1742, 0
        %v1785 = vsel %vm392, %v1745, 0
        %v1787 = vsel %vm392, %v1748, 0
        %v1789 = vsel %vm392, %v1751, 0
        %v1791 = vsel %vm392, %v1754, 0
        %v1793 = vsel %vm392, %v1757, 0
        %v1795 = vsel %vm392, %v1760, 0
        %v1797 = vsel %vm392, %v1763, 0
        %v1799 = vsel %vm392, %v1766, 0
        %v1802 = vsel %vm425, %v1768, 0
        %1804 = vmatpush.msra.mxu0 0.0
        %1805 = vmatpush.msra.mxu0 0.0
        %1806 = vmatpush.msra.mxu0 0.0
        %1807 = vmatpush.msra.mxu0 0.0
        %1808 = vmatpush.msra.mxu0 0.0
        %1809 = vmatpush.msra.mxu0 0.0
        %1810 = vmatpush.msra.mxu0 0.0
        %1811 = vmatpush.msra.mxu0 0.0
        %1812 = vmatpush.msra.mxu0 0.0
        %1813 = vmatpush.msra.mxu0 0.0
        %1814 = vmatpush.msra.mxu0 0.0
        %1815 = vmatpush.msra.mxu0 0.0
        %1816 = vmatpush.msra.mxu0 0.0
        %1817 = vmatpush.msra.mxu0 0.0
        %1818 = vmatpush.msra.mxu0 0.0
        %1819 = vmatpush.msra.mxu0 %v1802
        %1820 = vmatmul.f32.gmra.mxu0 %v1769
        %v1821 = vpop.f32.mrf.mxu0
        %v1822 = vadd.f32 0.0, %v1821
        %1823 = vmatmul.f32.gmra.mxu0 %v1771
        %v1824 = vpop.f32.mrf.mxu0
        %v1825 = vadd.f32 0.0, %v1824
        %1826 = vmatmul.f32.gmra.mxu0 %v1773
        %v1827 = vpop.f32.mrf.mxu0
        %v1828 = vadd.f32 0.0, %v1827
        %1829 = vmatmul.f32.gmra.mxu0 %v1775
        %v1830 = vpop.f32.mrf.mxu0
        %v1831 = vadd.f32 0.0, %v1830
        %1832 = vmatmul.f32.gmra.mxu0 %v1777
        %v1833 = vpop.f32.mrf.mxu0
        %v1834 = vadd.f32 0.0, %v1833
        %1835 = vmatmul.f32.gmra.mxu0 %v1779
        %v1836 = vpop.f32.mrf.mxu0
        %v1837 = vadd.f32 0.0, %v1836
        %1838 = vmatmul.f32.gmra.mxu0 %v1781
        %v1839 = vpop.f32.mrf.mxu0
        %v1840 = vadd.f32 0.0, %v1839
        %1841 = vmatmul.f32.gmra.mxu0 %v1783
        %v1842 = vpop.f32.mrf.mxu0
        %v1843 = vadd.f32 0.0, %v1842
        %1844 = vmatmul.f32.gmra.mxu0 %v1785
        %v1845 = vpop.f32.mrf.mxu0
        %v1846 = vadd.f32 0.0, %v1845
        %1847 = vmatmul.f32.gmra.mxu0 %v1787
        %v1848 = vpop.f32.mrf.mxu0
        %v1849 = vadd.f32 0.0, %v1848
        %1850 = vmatmul.f32.gmra.mxu0 %v1789
        %v1851 = vpop.f32.mrf.mxu0
        %v1852 = vadd.f32 0.0, %v1851
        %1853 = vmatmul.f32.gmra.mxu0 %v1791
        %v1854 = vpop.f32.mrf.mxu0
        %v1855 = vadd.f32 0.0, %v1854
        %1856 = vmatmul.f32.gmra.mxu0 %v1793
        %v1857 = vpop.f32.mrf.mxu0
        %v1858 = vadd.f32 0.0, %v1857
        %1859 = vmatmul.f32.gmra.mxu0 %v1795
        %v1860 = vpop.f32.mrf.mxu0
        %v1861 = vadd.f32 0.0, %v1860
        %1862 = vmatmul.f32.gmra.mxu0 %v1797
        %v1863 = vpop.f32.mrf.mxu0
        %v1864 = vadd.f32 0.0, %v1863
        %1865 = vmatmul.f32.gmra.mxu0 %v1799
        %v1866 = vpop.f32.mrf.mxu0
        %v1867 = vadd.f32 0.0, %v1866
        %1868 = vdwg.mxu0
        %v1869 = vadd.f32 %v1607, %v1822
        %v1870 = vadd.f32 %v1608, %v1825
        %v1871 = vadd.f32 %v1609, %v1828
        %v1872 = vadd.f32 %v1610, %v1831
        %v1873 = vadd.f32 %v1611, %v1834
        %v1874 = vadd.f32 %v1612, %v1837
        %v1875 = vadd.f32 %v1613, %v1840
        %v1876 = vadd.f32 %v1614, %v1843
        %v1877 = vadd.f32 %v1615, %v1846
        %v1878 = vadd.f32 %v1616, %v1849
        %v1879 = vadd.f32 %v1617, %v1852
        %v1880 = vadd.f32 %v1618, %v1855
        %v1881 = vadd.f32 %v1619, %v1858
        %v1882 = vadd.f32 %v1620, %v1861
        %v1883 = vadd.f32 %v1621, %v1864
        %v1884 = vadd.f32 %v1622, %v1867
        %v1885 = vld [vmem:[%s1456] sm:$0xe]
        %v1886 = vld [vmem:[%s1456 + $0x8] sm:$0xe]
        %v1887 = vld [vmem:[%s1456 + $0x10] sm:$0xe]
        %v1888 = vld [vmem:[%s1456 + $0x18] sm:$0xe]
        %v1889 = vld [vmem:[%s1456 + $0x20] sm:$0xe]
        %v1890 = vld [vmem:[%s1456 + $0x28] sm:$0xe]
        %v1891 = vld [vmem:[%s1456 + $0x30] sm:$0xe]
        %v1892 = vld [vmem:[%s1456 + $0x38] sm:$0xe]
        %v1893 = vld [vmem:[%s1456 + $0x50] sm:$0xe]
        %v1894 = vld [vmem:[%s1456 + $0x58] sm:$0xe]
        %v1895 = vld [vmem:[%s1456 + $0x60] sm:$0xe]
        %v1896 = vld [vmem:[%s1456 + $0x68] sm:$0xe]
        %v1897 = vld [vmem:[%s1456 + $0x70] sm:$0xe]
        %v1898 = vld [vmem:[%s1456 + $0x78] sm:$0xe]
        %v1899 = vld [vmem:[%s1456 + $0x80] sm:$0xe]
        %v1900 = vld [vmem:[%s1456 + $0x88] sm:$0xe]
        %v1901 = vunpack.c.l.bf16 %v1885
        %v1902 = vunpack.c.l.bf16 %v1886
        %v1903 = vunpack.c.l.bf16 %v1887
        %v1904 = vunpack.c.l.bf16 %v1888
        %v1905 = vunpack.c.l.bf16 %v1889
        %v1906 = vunpack.c.l.bf16 %v1890
        %v1907 = vunpack.c.l.bf16 %v1891
        %v1908 = vunpack.c.l.bf16 %v1892
        %v1909 = vunpack.c.l.bf16 %v1893
        %v1910 = vunpack.c.l.bf16 %v1894
        %v1911 = vunpack.c.l.bf16 %v1895
        %v1912 = vunpack.c.l.bf16 %v1896
        %v1913 = vunpack.c.l.bf16 %v1897
        %v1914 = vunpack.c.l.bf16 %v1898
        %v1915 = vunpack.c.l.bf16 %v1899
        %v1916 = vunpack.c.l.bf16 %v1900
        %v1933 = vrot.slane %v1901, 2
        %v1934 = vrot.slane %v1656, 2
        %v1935 = vsel %vm642, %v1933, %v1934
        %v1936 = vrot.slane %v1902, 2
        %v1937 = vrot.slane %v1658, 2
        %v1938 = vsel %vm642, %v1936, %v1937
        %v1939 = vrot.slane %v1903, 2
        %v1940 = vrot.slane %v1660, 2
        %v1941 = vsel %vm642, %v1939, %v1940
        %v1942 = vrot.slane %v1904, 2
        %v1943 = vrot.slane %v1662, 2
        %v1944 = vsel %vm642, %v1942, %v1943
        %v1945 = vrot.slane %v1905, 2
        %v1946 = vrot.slane %v1664, 2
        %v1947 = vsel %vm642, %v1945, %v1946
        %v1948 = vrot.slane %v1906, 2
        %v1949 = vrot.slane %v1666, 2
        %v1950 = vsel %vm642, %v1948, %v1949
        %v1951 = vrot.slane %v1907, 2
        %v1952 = vrot.slane %v1668, 2
        %v1953 = vsel %vm642, %v1951, %v1952
        %v1954 = vrot.slane %v1908, 2
        %v1955 = vrot.slane %v1670, 2
        %v1956 = vsel %vm642, %v1954, %v1955
        %v1957 = vrot.slane %v1909, 2
        %v1958 = vrot.slane %v1672, 2
        %v1959 = vsel %vm642, %v1957, %v1958
        %v1960 = vrot.slane %v1910, 2
        %v1961 = vrot.slane %v1674, 2
        %v1962 = vsel %vm642, %v1960, %v1961
        %v1963 = vrot.slane %v1911, 2
        %v1964 = vrot.slane %v1676, 2
        %v1965 = vsel %vm642, %v1963, %v1964
        %v1966 = vrot.slane %v1912, 2
        %v1967 = vrot.slane %v1678, 2
        %v1968 = vsel %vm642, %v1966, %v1967
        %v1969 = vrot.slane %v1913, 2
        %v1970 = vrot.slane %v1680, 2
        %v1971 = vsel %vm642, %v1969, %v1970
        %v1972 = vrot.slane %v1914, 2
        %v1973 = vrot.slane %v1682, 2
        %v1974 = vsel %vm642, %v1972, %v1973
        %v1975 = vrot.slane %v1915, 2
        %v1976 = vrot.slane %v1684, 2
        %v1977 = vsel %vm642, %v1975, %v1976
        %v1978 = vrot.slane %v1916, 2
        %v1979 = vrot.slane %v1686, 2
        %v1980 = vsel %vm642, %v1978, %v1979
        %s1981 = scalar_lea.vmem %s233, 32
        %v1982 = vld [vmem:[%s1981] sm:$0xf]
        %v1983 = vsel %vm392, %v1935, 0
        %v1985 = vsel %vm392, %v1938, 0
        %v1987 = vsel %vm392, %v1941, 0
        %v1989 = vsel %vm392, %v1944, 0
        %v1991 = vsel %vm392, %v1947, 0
        %v1993 = vsel %vm392, %v1950, 0
        %v1995 = vsel %vm392, %v1953, 0
        %v1997 = vsel %vm392, %v1956, 0
        %v1999 = vsel %vm392, %v1959, 0
        %v2001 = vsel %vm392, %v1962, 0
        %v2003 = vsel %vm392, %v1965, 0
        %v2005 = vsel %vm392, %v1968, 0
        %v2007 = vsel %vm392, %v1971, 0
        %v2009 = vsel %vm392, %v1974, 0
        %v2011 = vsel %vm392, %v1977, 0
        %v2013 = vsel %vm392, %v1980, 0
        %v2016 = vsel %vm425, %v1982, 0
        %2018 = vmatpush.msra.mxu0 0.0
        %2019 = vmatpush.msra.mxu0 0.0
        %2020 = vmatpush.msra.mxu0 0.0
        %2021 = vmatpush.msra.mxu0 0.0
        %2022 = vmatpush.msra.mxu0 0.0
        %2023 = vmatpush.msra.mxu0 0.0
        %2024 = vmatpush.msra.mxu0 0.0
        %2025 = vmatpush.msra.mxu0 0.0
        %2026 = vmatpush.msra.mxu0 0.0
        %2027 = vmatpush.msra.mxu0 0.0
        %2028 = vmatpush.msra.mxu0 0.0
        %2029 = vmatpush.msra.mxu0 0.0
        %2030 = vmatpush.msra.mxu0 0.0
        %2031 = vmatpush.msra.mxu0 0.0
        %2032 = vmatpush.msra.mxu0 0.0
        %2033 = vmatpush.msra.mxu0 %v2016
        %2034 = vmatmul.f32.gmra.mxu0 %v1983
        %v2035 = vpop.f32.mrf.mxu0
        %v2036 = vadd.f32 0.0, %v2035
        %2037 = vmatmul.f32.gmra.mxu0 %v1985
        %v2038 = vpop.f32.mrf.mxu0
        %v2039 = vadd.f32 0.0, %v2038
        %2040 = vmatmul.f32.gmra.mxu0 %v1987
        %v2041 = vpop.f32.mrf.mxu0
        %v2042 = vadd.f32 0.0, %v2041
        %2043 = vmatmul.f32.gmra.mxu0 %v1989
        %v2044 = vpop.f32.mrf.mxu0
        %v2045 = vadd.f32 0.0, %v2044
        %2046 = vmatmul.f32.gmra.mxu0 %v1991
        %v2047 = vpop.f32.mrf.mxu0
        %v2048 = vadd.f32 0.0, %v2047
        %2049 = vmatmul.f32.gmra.mxu0 %v1993
        %v2050 = vpop.f32.mrf.mxu0
        %v2051 = vadd.f32 0.0, %v2050
        %2052 = vmatmul.f32.gmra.mxu0 %v1995
        %v2053 = vpop.f32.mrf.mxu0
        %v2054 = vadd.f32 0.0, %v2053
        %2055 = vmatmul.f32.gmra.mxu0 %v1997
        %v2056 = vpop.f32.mrf.mxu0
        %v2057 = vadd.f32 0.0, %v2056
        %2058 = vmatmul.f32.gmra.mxu0 %v1999
        %v2059 = vpop.f32.mrf.mxu0
        %v2060 = vadd.f32 0.0, %v2059
        %2061 = vmatmul.f32.gmra.mxu0 %v2001
        %v2062 = vpop.f32.mrf.mxu0
        %v2063 = vadd.f32 0.0, %v2062
        %2064 = vmatmul.f32.gmra.mxu0 %v2003
        %v2065 = vpop.f32.mrf.mxu0
        %v2066 = vadd.f32 0.0, %v2065
        %2067 = vmatmul.f32.gmra.mxu0 %v2005
        %v2068 = vpop.f32.mrf.mxu0
        %v2069 = vadd.f32 0.0, %v2068
        %2070 = vmatmul.f32.gmra.mxu0 %v2007
        %v2071 = vpop.f32.mrf.mxu0
        %v2072 = vadd.f32 0.0, %v2071
        %2073 = vmatmul.f32.gmra.mxu0 %v2009
        %v2074 = vpop.f32.mrf.mxu0
        %v2075 = vadd.f32 0.0, %v2074
        %2076 = vmatmul.f32.gmra.mxu0 %v2011
        %v2077 = vpop.f32.mrf.mxu0
        %v2078 = vadd.f32 0.0, %v2077
        %2079 = vmatmul.f32.gmra.mxu0 %v2013
        %v2080 = vpop.f32.mrf.mxu0
        %v2081 = vadd.f32 0.0, %v2080
        %2082 = vdwg.mxu0
        %v2083 = vadd.f32 %v1869, %v2036
        %v2084 = vadd.f32 %v1870, %v2039
        %v2085 = vadd.f32 %v1871, %v2042
        %v2086 = vadd.f32 %v1872, %v2045
        %v2087 = vadd.f32 %v1873, %v2048
        %v2088 = vadd.f32 %v1874, %v2051
        %v2089 = vadd.f32 %v1875, %v2054
        %v2090 = vadd.f32 %v1876, %v2057
        %v2091 = vadd.f32 %v1877, %v2060
        %v2092 = vadd.f32 %v1878, %v2063
        %v2093 = vadd.f32 %v1879, %v2066
        %v2094 = vadd.f32 %v1880, %v2069
        %v2095 = vadd.f32 %v1881, %v2072
        %v2096 = vadd.f32 %v1882, %v2075
        %v2097 = vadd.f32 %v1883, %v2078
        %v2098 = vadd.f32 %v1884, %v2081
        %s2099 = sadd.s32 %s240, 1
        %s2100 = smul.u32 %s2099, 20
        %s2101 = smul.addr %s2100, 4
        %s2102 = scalar_lea.vmem %s227, %s2101
        %v2103 = vld [vmem:[%s2102] sm:$0xf]
        %v2104 = vld [vmem:[%s2102 + $0x8] sm:$0xf]
        %v2105 = vld [vmem:[%s2102 + $0x10] sm:$0xf]
        %v2106 = vld [vmem:[%s2102 + $0x18] sm:$0xf]
        %v2107 = vld [vmem:[%s2102 + $0x20] sm:$0xf]
        %v2108 = vld [vmem:[%s2102 + $0x28] sm:$0xf]
        %v2109 = vld [vmem:[%s2102 + $0x30] sm:$0xf]
        %v2110 = vld [vmem:[%s2102 + $0x38] sm:$0xf]
        %v2111 = vld [vmem:[%s2102 + $0x50] sm:$0xf]
        %v2112 = vld [vmem:[%s2102 + $0x58] sm:$0xf]
        %v2113 = vld [vmem:[%s2102 + $0x60] sm:$0xf]
        %v2114 = vld [vmem:[%s2102 + $0x68] sm:$0xf]
        %v2115 = vld [vmem:[%s2102 + $0x70] sm:$0xf]
        %v2116 = vld [vmem:[%s2102 + $0x78] sm:$0xf]
        %v2117 = vld [vmem:[%s2102 + $0x80] sm:$0xf]
        %v2118 = vld [vmem:[%s2102 + $0x88] sm:$0xf]
        %v2119 = vunpack.c.l.bf16 %v2103
        %v2120 = vunpack.c.l.bf16 %v2104
        %v2121 = vunpack.c.l.bf16 %v2105
        %v2122 = vunpack.c.l.bf16 %v2106
        %v2123 = vunpack.c.l.bf16 %v2107
        %v2124 = vunpack.c.l.bf16 %v2108
        %v2125 = vunpack.c.l.bf16 %v2109
        %v2126 = vunpack.c.l.bf16 %v2110
        %v2127 = vunpack.c.l.bf16 %v2111
        %v2128 = vunpack.c.l.bf16 %v2112
        %v2129 = vunpack.c.l.bf16 %v2113
        %v2130 = vunpack.c.l.bf16 %v2114
        %v2131 = vunpack.c.l.bf16 %v2115
        %v2132 = vunpack.c.l.bf16 %v2116
        %v2133 = vunpack.c.l.bf16 %v2117
        %v2134 = vunpack.c.l.bf16 %v2118
        %s2135 = scalar_lea.vmem %s233, 36
        %v2136 = vld [vmem:[%s2135] sm:$0xf]
        %v2138 = vsel %vm392, %v2119, 0
        %v2141 = vsel %vm392, %v2120, 0
        %v2144 = vsel %vm392, %v2121, 0
        %v2147 = vsel %vm392, %v2122, 0
        %v2150 = vsel %vm392, %v2123, 0
        %v2153 = vsel %vm392, %v2124, 0
        %v2156 = vsel %vm392, %v2125, 0
        %v2159 = vsel %vm392, %v2126, 0
        %v2162 = vsel %vm392, %v2127, 0
        %v2165 = vsel %vm392, %v2128, 0
        %v2168 = vsel %vm392, %v2129, 0
        %v2171 = vsel %vm392, %v2130, 0
        %v2174 = vsel %vm392, %v2131, 0
        %v2177 = vsel %vm392, %v2132, 0
        %v2180 = vsel %vm392, %v2133, 0
        %v2183 = vsel %vm392, %v2134, 0
        %v2186 = vsel %vm425, %v2136, 0
        %2188 = vmatpush.msra.mxu0 0.0
        %2189 = vmatpush.msra.mxu0 0.0
        %2190 = vmatpush.msra.mxu0 0.0
        %2191 = vmatpush.msra.mxu0 0.0
        %2192 = vmatpush.msra.mxu0 0.0
        %2193 = vmatpush.msra.mxu0 0.0
        %2194 = vmatpush.msra.mxu0 0.0
        %2195 = vmatpush.msra.mxu0 0.0
        %2196 = vmatpush.msra.mxu0 0.0
        %2197 = vmatpush.msra.mxu0 0.0
        %2198 = vmatpush.msra.mxu0 0.0
        %2199 = vmatpush.msra.mxu0 0.0
        %2200 = vmatpush.msra.mxu0 0.0
        %2201 = vmatpush.msra.mxu0 0.0
        %2202 = vmatpush.msra.mxu0 0.0
        %2203 = vmatpush.msra.mxu0 %v2186
        %2204 = vmatmul.f32.gmra.mxu0 %v2138
        %v2205 = vpop.f32.mrf.mxu0
        %v2206 = vadd.f32 0.0, %v2205
        %2207 = vmatmul.f32.gmra.mxu0 %v2141
        %v2208 = vpop.f32.mrf.mxu0
        %v2209 = vadd.f32 0.0, %v2208
        %2210 = vmatmul.f32.gmra.mxu0 %v2144
        %v2211 = vpop.f32.mrf.mxu0
        %v2212 = vadd.f32 0.0, %v2211
        %2213 = vmatmul.f32.gmra.mxu0 %v2147
        %v2214 = vpop.f32.mrf.mxu0
        %v2215 = vadd.f32 0.0, %v2214
        %2216 = vmatmul.f32.gmra.mxu0 %v2150
        %v2217 = vpop.f32.mrf.mxu0
        %v2218 = vadd.f32 0.0, %v2217
        %2219 = vmatmul.f32.gmra.mxu0 %v2153
        %v2220 = vpop.f32.mrf.mxu0
        %v2221 = vadd.f32 0.0, %v2220
        %2222 = vmatmul.f32.gmra.mxu0 %v2156
        %v2223 = vpop.f32.mrf.mxu0
        %v2224 = vadd.f32 0.0, %v2223
        %2225 = vmatmul.f32.gmra.mxu0 %v2159
        %v2226 = vpop.f32.mrf.mxu0
        %v2227 = vadd.f32 0.0, %v2226
        %2228 = vmatmul.f32.gmra.mxu0 %v2162
        %v2229 = vpop.f32.mrf.mxu0
        %v2230 = vadd.f32 0.0, %v2229
        %2231 = vmatmul.f32.gmra.mxu0 %v2165
        %v2232 = vpop.f32.mrf.mxu0
        %v2233 = vadd.f32 0.0, %v2232
        %2234 = vmatmul.f32.gmra.mxu0 %v2168
        %v2235 = vpop.f32.mrf.mxu0
        %v2236 = vadd.f32 0.0, %v2235
        %2237 = vmatmul.f32.gmra.mxu0 %v2171
        %v2238 = vpop.f32.mrf.mxu0
        %v2239 = vadd.f32 0.0, %v2238
        %2240 = vmatmul.f32.gmra.mxu0 %v2174
        %v2241 = vpop.f32.mrf.mxu0
        %v2242 = vadd.f32 0.0, %v2241
        %2243 = vmatmul.f32.gmra.mxu0 %v2177
        %v2244 = vpop.f32.mrf.mxu0
        %v2245 = vadd.f32 0.0, %v2244
        %2246 = vmatmul.f32.gmra.mxu0 %v2180
        %v2247 = vpop.f32.mrf.mxu0
        %v2248 = vadd.f32 0.0, %v2247
        %2249 = vmatmul.f32.gmra.mxu0 %v2183
        %v2250 = vpop.f32.mrf.mxu0
        %v2251 = vadd.f32 0.0, %v2250
        %2252 = vdwg.mxu0
        %v2253 = vadd.f32 %v2083, %v2206
        %v2254 = vadd.f32 %v2084, %v2209
        %v2255 = vadd.f32 %v2085, %v2212
        %v2256 = vadd.f32 %v2086, %v2215
        %v2257 = vadd.f32 %v2087, %v2218
        %v2258 = vadd.f32 %v2088, %v2221
        %v2259 = vadd.f32 %v2089, %v2224
        %v2260 = vadd.f32 %v2090, %v2227
        %v2261 = vadd.f32 %v2091, %v2230
        %v2262 = vadd.f32 %v2092, %v2233
        %v2263 = vadd.f32 %v2093, %v2236
        %v2264 = vadd.f32 %v2094, %v2239
        %v2265 = vadd.f32 %v2095, %v2242
        %v2266 = vadd.f32 %v2096, %v2245
        %v2267 = vadd.f32 %v2097, %v2248
        %v2268 = vadd.f32 %v2098, %v2251
        %v2269 = vld [vmem:[%s2102] sm:$0xf]
        %v2270 = vld [vmem:[%s2102 + $0x4] sm:$0x1]
        %v2271 = vld [vmem:[%s2102 + $0x8] sm:$0xf]
        %v2272 = vld [vmem:[%s2102 + $0xc] sm:$0x1]
        %v2273 = vld [vmem:[%s2102 + $0x10] sm:$0xf]
        %v2274 = vld [vmem:[%s2102 + $0x14] sm:$0x1]
        %v2275 = vld [vmem:[%s2102 + $0x18] sm:$0xf]
        %v2276 = vld [vmem:[%s2102 + $0x1c] sm:$0x1]
        %v2277 = vld [vmem:[%s2102 + $0x20] sm:$0xf]
        %v2278 = vld [vmem:[%s2102 + $0x24] sm:$0x1]
        %v2279 = vld [vmem:[%s2102 + $0x28] sm:$0xf]
        %v2280 = vld [vmem:[%s2102 + $0x2c] sm:$0x1]
        %v2281 = vld [vmem:[%s2102 + $0x30] sm:$0xf]
        %v2282 = vld [vmem:[%s2102 + $0x34] sm:$0x1]
        %v2283 = vld [vmem:[%s2102 + $0x38] sm:$0xf]
        %v2284 = vld [vmem:[%s2102 + $0x3c] sm:$0x1]
        %v2285 = vld [vmem:[%s2102 + $0x50] sm:$0xf]
        %v2286 = vld [vmem:[%s2102 + $0x54] sm:$0x1]
        %v2287 = vld [vmem:[%s2102 + $0x58] sm:$0xf]
        %v2288 = vld [vmem:[%s2102 + $0x5c] sm:$0x1]
        %v2289 = vld [vmem:[%s2102 + $0x60] sm:$0xf]
        %v2290 = vld [vmem:[%s2102 + $0x64] sm:$0x1]
        %v2291 = vld [vmem:[%s2102 + $0x68] sm:$0xf]
        %v2292 = vld [vmem:[%s2102 + $0x6c] sm:$0x1]
        %v2293 = vld [vmem:[%s2102 + $0x70] sm:$0xf]
        %v2294 = vld [vmem:[%s2102 + $0x74] sm:$0x1]
        %v2295 = vld [vmem:[%s2102 + $0x78] sm:$0xf]
        %v2296 = vld [vmem:[%s2102 + $0x7c] sm:$0x1]
        %v2297 = vld [vmem:[%s2102 + $0x80] sm:$0xf]
        %v2298 = vld [vmem:[%s2102 + $0x84] sm:$0x1]
        %v2299 = vld [vmem:[%s2102 + $0x88] sm:$0xf]
        %v2300 = vld [vmem:[%s2102 + $0x8c] sm:$0x1]
        %v2301 = vunpack.c.l.bf16 %v2269
        %v2302 = vunpack.c.l.bf16 %v2270
        %v2303 = vunpack.c.l.bf16 %v2271
        %v2304 = vunpack.c.l.bf16 %v2272
        %v2305 = vunpack.c.l.bf16 %v2273
        %v2306 = vunpack.c.l.bf16 %v2274
        %v2307 = vunpack.c.l.bf16 %v2275
        %v2308 = vunpack.c.l.bf16 %v2276
        %v2309 = vunpack.c.l.bf16 %v2277
        %v2310 = vunpack.c.l.bf16 %v2278
        %v2311 = vunpack.c.l.bf16 %v2279
        %v2312 = vunpack.c.l.bf16 %v2280
        %v2313 = vunpack.c.l.bf16 %v2281
        %v2314 = vunpack.c.l.bf16 %v2282
        %v2315 = vunpack.c.l.bf16 %v2283
        %v2316 = vunpack.c.l.bf16 %v2284
        %v2317 = vunpack.c.l.bf16 %v2285
        %v2318 = vunpack.c.l.bf16 %v2286
        %v2319 = vunpack.c.l.bf16 %v2287
        %v2320 = vunpack.c.l.bf16 %v2288
        %v2321 = vunpack.c.l.bf16 %v2289
        %v2322 = vunpack.c.l.bf16 %v2290
        %v2323 = vunpack.c.l.bf16 %v2291
        %v2324 = vunpack.c.l.bf16 %v2292
        %v2325 = vunpack.c.l.bf16 %v2293
        %v2326 = vunpack.c.l.bf16 %v2294
        %v2327 = vunpack.c.l.bf16 %v2295
        %v2328 = vunpack.c.l.bf16 %v2296
        %v2329 = vunpack.c.l.bf16 %v2297
        %v2330 = vunpack.c.l.bf16 %v2298
        %v2331 = vunpack.c.l.bf16 %v2299
        %v2332 = vunpack.c.l.bf16 %v2300
        %v2365 = vrot.slane %v2301, 1
        %v2366 = vrot.slane %v2302, 1
        %v2367 = vsel %vm341, %v2365, %v2366
        %v2368 = vrot.slane %v2303, 1
        %v2369 = vrot.slane %v2304, 1
        %v2370 = vsel %vm341, %v2368, %v2369
        %v2371 = vrot.slane %v2305, 1
        %v2372 = vrot.slane %v2306, 1
        %v2373 = vsel %vm341, %v2371, %v2372
        %v2374 = vrot.slane %v2307, 1
        %v2375 = vrot.slane %v2308, 1
        %v2376 = vsel %vm341, %v2374, %v2375
        %v2377 = vrot.slane %v2309, 1
        %v2378 = vrot.slane %v2310, 1
        %v2379 = vsel %vm341, %v2377, %v2378
        %v2380 = vrot.slane %v2311, 1
        %v2381 = vrot.slane %v2312, 1
        %v2382 = vsel %vm341, %v2380, %v2381
        %v2383 = vrot.slane %v2313, 1
        %v2384 = vrot.slane %v2314, 1
        %v2385 = vsel %vm341, %v2383, %v2384
        %v2386 = vrot.slane %v2315, 1
        %v2387 = vrot.slane %v2316, 1
        %v2388 = vsel %vm341, %v2386, %v2387
        %v2389 = vrot.slane %v2317, 1
        %v2390 = vrot.slane %v2318, 1
        %v2391 = vsel %vm341, %v2389, %v2390
        %v2392 = vrot.slane %v2319, 1
        %v2393 = vrot.slane %v2320, 1
        %v2394 = vsel %vm341, %v2392, %v2393
        %v2395 = vrot.slane %v2321, 1
        %v2396 = vrot.slane %v2322, 1
        %v2397 = vsel %vm341, %v2395, %v2396
        %v2398 = vrot.slane %v2323, 1
        %v2399 = vrot.slane %v2324, 1
        %v2400 = vsel %vm341, %v2398, %v2399
        %v2401 = vrot.slane %v2325, 1
        %v2402 = vrot.slane %v2326, 1
        %v2403 = vsel %vm341, %v2401, %v2402
        %v2404 = vrot.slane %v2327, 1
        %v2405 = vrot.slane %v2328, 1
        %v2406 = vsel %vm341, %v2404, %v2405
        %v2407 = vrot.slane %v2329, 1
        %v2408 = vrot.slane %v2330, 1
        %v2409 = vsel %vm341, %v2407, %v2408
        %v2410 = vrot.slane %v2331, 1
        %v2411 = vrot.slane %v2332, 1
        %v2412 = vsel %vm341, %v2410, %v2411
        %s2413 = scalar_lea.vmem %s233, 40
        %v2414 = vld [vmem:[%s2413] sm:$0xf]
        %v2415 = vsel %vm392, %v2367, 0
        %v2417 = vsel %vm392, %v2370, 0
        %v2419 = vsel %vm392, %v2373, 0
        %v2421 = vsel %vm392, %v2376, 0
        %v2423 = vsel %vm392, %v2379, 0
        %v2425 = vsel %vm392, %v2382, 0
        %v2427 = vsel %vm392, %v2385, 0
        %v2429 = vsel %vm392, %v2388, 0
        %v2431 = vsel %vm392, %v2391, 0
        %v2433 = vsel %vm392, %v2394, 0
        %v2435 = vsel %vm392, %v2397, 0
        %v2437 = vsel %vm392, %v2400, 0
        %v2439 = vsel %vm392, %v2403, 0
        %v2441 = vsel %vm392, %v2406, 0
        %v2443 = vsel %vm392, %v2409, 0
        %v2445 = vsel %vm392, %v2412, 0
        %v2448 = vsel %vm425, %v2414, 0
        %2450 = vmatpush.msra.mxu0 0.0
        %2451 = vmatpush.msra.mxu0 0.0
        %2452 = vmatpush.msra.mxu0 0.0
        %2453 = vmatpush.msra.mxu0 0.0
        %2454 = vmatpush.msra.mxu0 0.0
        %2455 = vmatpush.msra.mxu0 0.0
        %2456 = vmatpush.msra.mxu0 0.0
        %2457 = vmatpush.msra.mxu0 0.0
        %2458 = vmatpush.msra.mxu0 0.0
        %2459 = vmatpush.msra.mxu0 0.0
        %2460 = vmatpush.msra.mxu0 0.0
        %2461 = vmatpush.msra.mxu0 0.0
        %2462 = vmatpush.msra.mxu0 0.0
        %2463 = vmatpush.msra.mxu0 0.0
        %2464 = vmatpush.msra.mxu0 0.0
        %2465 = vmatpush.msra.mxu0 %v2448
        %2466 = vmatmul.f32.gmra.mxu0 %v2415
        %v2467 = vpop.f32.mrf.mxu0
        %v2468 = vadd.f32 0.0, %v2467
        %2469 = vmatmul.f32.gmra.mxu0 %v2417
        %v2470 = vpop.f32.mrf.mxu0
        %v2471 = vadd.f32 0.0, %v2470
        %2472 = vmatmul.f32.gmra.mxu0 %v2419
        %v2473 = vpop.f32.mrf.mxu0
        %v2474 = vadd.f32 0.0, %v2473
        %2475 = vmatmul.f32.gmra.mxu0 %v2421
        %v2476 = vpop.f32.mrf.mxu0
        %v2477 = vadd.f32 0.0, %v2476
        %2478 = vmatmul.f32.gmra.mxu0 %v2423
        %v2479 = vpop.f32.mrf.mxu0
        %v2480 = vadd.f32 0.0, %v2479
        %2481 = vmatmul.f32.gmra.mxu0 %v2425
        %v2482 = vpop.f32.mrf.mxu0
        %v2483 = vadd.f32 0.0, %v2482
        %2484 = vmatmul.f32.gmra.mxu0 %v2427
        %v2485 = vpop.f32.mrf.mxu0
        %v2486 = vadd.f32 0.0, %v2485
        %2487 = vmatmul.f32.gmra.mxu0 %v2429
        %v2488 = vpop.f32.mrf.mxu0
        %v2489 = vadd.f32 0.0, %v2488
        %2490 = vmatmul.f32.gmra.mxu0 %v2431
        %v2491 = vpop.f32.mrf.mxu0
        %v2492 = vadd.f32 0.0, %v2491
        %2493 = vmatmul.f32.gmra.mxu0 %v2433
        %v2494 = vpop.f32.mrf.mxu0
        %v2495 = vadd.f32 0.0, %v2494
        %2496 = vmatmul.f32.gmra.mxu0 %v2435
        %v2497 = vpop.f32.mrf.mxu0
        %v2498 = vadd.f32 0.0, %v2497
        %2499 = vmatmul.f32.gmra.mxu0 %v2437
        %v2500 = vpop.f32.mrf.mxu0
        %v2501 = vadd.f32 0.0, %v2500
        %2502 = vmatmul.f32.gmra.mxu0 %v2439
        %v2503 = vpop.f32.mrf.mxu0
        %v2504 = vadd.f32 0.0, %v2503
        %2505 = vmatmul.f32.gmra.mxu0 %v2441
        %v2506 = vpop.f32.mrf.mxu0
        %v2507 = vadd.f32 0.0, %v2506
        %2508 = vmatmul.f32.gmra.mxu0 %v2443
        %v2509 = vpop.f32.mrf.mxu0
        %v2510 = vadd.f32 0.0, %v2509
        %2511 = vmatmul.f32.gmra.mxu0 %v2445
        %v2512 = vpop.f32.mrf.mxu0
        %v2513 = vadd.f32 0.0, %v2512
        %2514 = vdwg.mxu0
        %v2515 = vadd.f32 %v2253, %v2468
        %v2516 = vadd.f32 %v2254, %v2471
        %v2517 = vadd.f32 %v2255, %v2474
        %v2518 = vadd.f32 %v2256, %v2477
        %v2519 = vadd.f32 %v2257, %v2480
        %v2520 = vadd.f32 %v2258, %v2483
        %v2521 = vadd.f32 %v2259, %v2486
        %v2522 = vadd.f32 %v2260, %v2489
        %v2523 = vadd.f32 %v2261, %v2492
        %v2524 = vadd.f32 %v2262, %v2495
        %v2525 = vadd.f32 %v2263, %v2498
        %v2526 = vadd.f32 %v2264, %v2501
        %v2527 = vadd.f32 %v2265, %v2504
        %v2528 = vadd.f32 %v2266, %v2507
        %v2529 = vadd.f32 %v2267, %v2510
        %v2530 = vadd.f32 %v2268, %v2513
        %v2531 = vld [vmem:[%s2102] sm:$0xe]
        %v2532 = vld [vmem:[%s2102 + $0x8] sm:$0xe]
        %v2533 = vld [vmem:[%s2102 + $0x10] sm:$0xe]
        %v2534 = vld [vmem:[%s2102 + $0x18] sm:$0xe]
        %v2535 = vld [vmem:[%s2102 + $0x20] sm:$0xe]
        %v2536 = vld [vmem:[%s2102 + $0x28] sm:$0xe]
        %v2537 = vld [vmem:[%s2102 + $0x30] sm:$0xe]
        %v2538 = vld [vmem:[%s2102 + $0x38] sm:$0xe]
        %v2539 = vld [vmem:[%s2102 + $0x50] sm:$0xe]
        %v2540 = vld [vmem:[%s2102 + $0x58] sm:$0xe]
        %v2541 = vld [vmem:[%s2102 + $0x60] sm:$0xe]
        %v2542 = vld [vmem:[%s2102 + $0x68] sm:$0xe]
        %v2543 = vld [vmem:[%s2102 + $0x70] sm:$0xe]
        %v2544 = vld [vmem:[%s2102 + $0x78] sm:$0xe]
        %v2545 = vld [vmem:[%s2102 + $0x80] sm:$0xe]
        %v2546 = vld [vmem:[%s2102 + $0x88] sm:$0xe]
        %v2547 = vunpack.c.l.bf16 %v2531
        %v2548 = vunpack.c.l.bf16 %v2532
        %v2549 = vunpack.c.l.bf16 %v2533
        %v2550 = vunpack.c.l.bf16 %v2534
        %v2551 = vunpack.c.l.bf16 %v2535
        %v2552 = vunpack.c.l.bf16 %v2536
        %v2553 = vunpack.c.l.bf16 %v2537
        %v2554 = vunpack.c.l.bf16 %v2538
        %v2555 = vunpack.c.l.bf16 %v2539
        %v2556 = vunpack.c.l.bf16 %v2540
        %v2557 = vunpack.c.l.bf16 %v2541
        %v2558 = vunpack.c.l.bf16 %v2542
        %v2559 = vunpack.c.l.bf16 %v2543
        %v2560 = vunpack.c.l.bf16 %v2544
        %v2561 = vunpack.c.l.bf16 %v2545
        %v2562 = vunpack.c.l.bf16 %v2546
        %v2579 = vrot.slane %v2547, 2
        %v2580 = vrot.slane %v2302, 2
        %v2581 = vsel %vm642, %v2579, %v2580
        %v2582 = vrot.slane %v2548, 2
        %v2583 = vrot.slane %v2304, 2
        %v2584 = vsel %vm642, %v2582, %v2583
        %v2585 = vrot.slane %v2549, 2
        %v2586 = vrot.slane %v2306, 2
        %v2587 = vsel %vm642, %v2585, %v2586
        %v2588 = vrot.slane %v2550, 2
        %v2589 = vrot.slane %v2308, 2
        %v2590 = vsel %vm642, %v2588, %v2589
        %v2591 = vrot.slane %v2551, 2
        %v2592 = vrot.slane %v2310, 2
        %v2593 = vsel %vm642, %v2591, %v2592
        %v2594 = vrot.slane %v2552, 2
        %v2595 = vrot.slane %v2312, 2
        %v2596 = vsel %vm642, %v2594, %v2595
        %v2597 = vrot.slane %v2553, 2
        %v2598 = vrot.slane %v2314, 2
        %v2599 = vsel %vm642, %v2597, %v2598
        %v2600 = vrot.slane %v2554, 2
        %v2601 = vrot.slane %v2316, 2
        %v2602 = vsel %vm642, %v2600, %v2601
        %v2603 = vrot.slane %v2555, 2
        %v2604 = vrot.slane %v2318, 2
        %v2605 = vsel %vm642, %v2603, %v2604
        %v2606 = vrot.slane %v2556, 2
        %v2607 = vrot.slane %v2320, 2
        %v2608 = vsel %vm642, %v2606, %v2607
        %v2609 = vrot.slane %v2557, 2
        %v2610 = vrot.slane %v2322, 2
        %v2611 = vsel %vm642, %v2609, %v2610
        %v2612 = vrot.slane %v2558, 2
        %v2613 = vrot.slane %v2324, 2
        %v2614 = vsel %vm642, %v2612, %v2613
        %v2615 = vrot.slane %v2559, 2
        %v2616 = vrot.slane %v2326, 2
        %v2617 = vsel %vm642, %v2615, %v2616
        %v2618 = vrot.slane %v2560, 2
        %v2619 = vrot.slane %v2328, 2
        %v2620 = vsel %vm642, %v2618, %v2619
        %v2621 = vrot.slane %v2561, 2
        %v2622 = vrot.slane %v2330, 2
        %v2623 = vsel %vm642, %v2621, %v2622
        %v2624 = vrot.slane %v2562, 2
        %v2625 = vrot.slane %v2332, 2
        %v2626 = vsel %vm642, %v2624, %v2625
        %s2627 = scalar_lea.vmem %s233, 44
        %v2628 = vld [vmem:[%s2627] sm:$0xf]
        %v2629 = vsel %vm392, %v2581, 0
        %v2631 = vsel %vm392, %v2584, 0
        %v2633 = vsel %vm392, %v2587, 0
        %v2635 = vsel %vm392, %v2590, 0
        %v2637 = vsel %vm392, %v2593, 0
        %v2639 = vsel %vm392, %v2596, 0
        %v2641 = vsel %vm392, %v2599, 0
        %v2643 = vsel %vm392, %v2602, 0
        %v2645 = vsel %vm392, %v2605, 0
        %v2647 = vsel %vm392, %v2608, 0
        %v2649 = vsel %vm392, %v2611, 0
        %v2651 = vsel %vm392, %v2614, 0
        %v2653 = vsel %vm392, %v2617, 0
        %v2655 = vsel %vm392, %v2620, 0
        %v2657 = vsel %vm392, %v2623, 0
        %v2659 = vsel %vm392, %v2626, 0
        %v2662 = vsel %vm425, %v2628, 0
        %2664 = vmatpush.msra.mxu0 0.0
        %2665 = vmatpush.msra.mxu0 0.0
        %2666 = vmatpush.msra.mxu0 0.0
        %2667 = vmatpush.msra.mxu0 0.0
        %2668 = vmatpush.msra.mxu0 0.0
        %2669 = vmatpush.msra.mxu0 0.0
        %2670 = vmatpush.msra.mxu0 0.0
        %2671 = vmatpush.msra.mxu0 0.0
        %2672 = vmatpush.msra.mxu0 0.0
        %2673 = vmatpush.msra.mxu0 0.0
        %2674 = vmatpush.msra.mxu0 0.0
        %2675 = vmatpush.msra.mxu0 0.0
        %2676 = vmatpush.msra.mxu0 0.0
        %2677 = vmatpush.msra.mxu0 0.0
        %2678 = vmatpush.msra.mxu0 0.0
        %2679 = vmatpush.msra.mxu0 %v2662
        %2680 = vmatmul.f32.gmra.mxu0 %v2629
        %v2681 = vpop.f32.mrf.mxu0
        %v2682 = vadd.f32 0.0, %v2681
        %2683 = vmatmul.f32.gmra.mxu0 %v2631
        %v2684 = vpop.f32.mrf.mxu0
        %v2685 = vadd.f32 0.0, %v2684
        %2686 = vmatmul.f32.gmra.mxu0 %v2633
        %v2687 = vpop.f32.mrf.mxu0
        %v2688 = vadd.f32 0.0, %v2687
        %2689 = vmatmul.f32.gmra.mxu0 %v2635
        %v2690 = vpop.f32.mrf.mxu0
        %v2691 = vadd.f32 0.0, %v2690
        %2692 = vmatmul.f32.gmra.mxu0 %v2637
        %v2693 = vpop.f32.mrf.mxu0
        %v2694 = vadd.f32 0.0, %v2693
        %2695 = vmatmul.f32.gmra.mxu0 %v2639
        %v2696 = vpop.f32.mrf.mxu0
        %v2697 = vadd.f32 0.0, %v2696
        %2698 = vmatmul.f32.gmra.mxu0 %v2641
        %v2699 = vpop.f32.mrf.mxu0
        %v2700 = vadd.f32 0.0, %v2699
        %2701 = vmatmul.f32.gmra.mxu0 %v2643
        %v2702 = vpop.f32.mrf.mxu0
        %v2703 = vadd.f32 0.0, %v2702
        %2704 = vmatmul.f32.gmra.mxu0 %v2645
        %v2705 = vpop.f32.mrf.mxu0
        %v2706 = vadd.f32 0.0, %v2705
        %2707 = vmatmul.f32.gmra.mxu0 %v2647
        %v2708 = vpop.f32.mrf.mxu0
        %v2709 = vadd.f32 0.0, %v2708
        %2710 = vmatmul.f32.gmra.mxu0 %v2649
        %v2711 = vpop.f32.mrf.mxu0
        %v2712 = vadd.f32 0.0, %v2711
        %2713 = vmatmul.f32.gmra.mxu0 %v2651
        %v2714 = vpop.f32.mrf.mxu0
        %v2715 = vadd.f32 0.0, %v2714
        %2716 = vmatmul.f32.gmra.mxu0 %v2653
        %v2717 = vpop.f32.mrf.mxu0
        %v2718 = vadd.f32 0.0, %v2717
        %2719 = vmatmul.f32.gmra.mxu0 %v2655
        %v2720 = vpop.f32.mrf.mxu0
        %v2721 = vadd.f32 0.0, %v2720
        %2722 = vmatmul.f32.gmra.mxu0 %v2657
        %v2723 = vpop.f32.mrf.mxu0
        %v2724 = vadd.f32 0.0, %v2723
        %2725 = vmatmul.f32.gmra.mxu0 %v2659
        %v2726 = vpop.f32.mrf.mxu0
        %v2727 = vadd.f32 0.0, %v2726
        %2728 = vdwg.mxu0
        %v2729 = vadd.f32 %v2515, %v2682
        %v2730 = vadd.f32 %v2516, %v2685
        %v2731 = vadd.f32 %v2517, %v2688
        %v2732 = vadd.f32 %v2518, %v2691
        %v2733 = vadd.f32 %v2519, %v2694
        %v2734 = vadd.f32 %v2520, %v2697
        %v2735 = vadd.f32 %v2521, %v2700
        %v2736 = vadd.f32 %v2522, %v2703
        %v2737 = vadd.f32 %v2523, %v2706
        %v2738 = vadd.f32 %v2524, %v2709
        %v2739 = vadd.f32 %v2525, %v2712
        %v2740 = vadd.f32 %v2526, %v2715
        %v2741 = vadd.f32 %v2527, %v2718
        %v2742 = vadd.f32 %v2528, %v2721
        %v2743 = vadd.f32 %v2529, %v2724
        %v2744 = vadd.f32 %v2530, %v2727
        %s2745 = sadd.s32 2, %s2100
        %s2746 = smul.addr %s2745, 4
        %s2747 = scalar_lea.vmem %s227, %s2746
        %v2748 = vld [vmem:[%s2747] sm:$0xf]
        %v2749 = vld [vmem:[%s2747 + $0x8] sm:$0xf]
        %v2750 = vld [vmem:[%s2747 + $0x10] sm:$0xf]
        %v2751 = vld [vmem:[%s2747 + $0x18] sm:$0xf]
        %v2752 = vld [vmem:[%s2747 + $0x20] sm:$0xf]
        %v2753 = vld [vmem:[%s2747 + $0x28] sm:$0xf]
        %v2754 = vld [vmem:[%s2747 + $0x30] sm:$0xf]
        %v2755 = vld [vmem:[%s2747 + $0x38] sm:$0xf]
        %v2756 = vld [vmem:[%s2747 + $0x50] sm:$0xf]
        %v2757 = vld [vmem:[%s2747 + $0x58] sm:$0xf]
        %v2758 = vld [vmem:[%s2747 + $0x60] sm:$0xf]
        %v2759 = vld [vmem:[%s2747 + $0x68] sm:$0xf]
        %v2760 = vld [vmem:[%s2747 + $0x70] sm:$0xf]
        %v2761 = vld [vmem:[%s2747 + $0x78] sm:$0xf]
        %v2762 = vld [vmem:[%s2747 + $0x80] sm:$0xf]
        %v2763 = vld [vmem:[%s2747 + $0x88] sm:$0xf]
        %v2764 = vunpack.c.l.bf16 %v2748
        %v2765 = vunpack.c.l.bf16 %v2749
        %v2766 = vunpack.c.l.bf16 %v2750
        %v2767 = vunpack.c.l.bf16 %v2751
        %v2768 = vunpack.c.l.bf16 %v2752
        %v2769 = vunpack.c.l.bf16 %v2753
        %v2770 = vunpack.c.l.bf16 %v2754
        %v2771 = vunpack.c.l.bf16 %v2755
        %v2772 = vunpack.c.l.bf16 %v2756
        %v2773 = vunpack.c.l.bf16 %v2757
        %v2774 = vunpack.c.l.bf16 %v2758
        %v2775 = vunpack.c.l.bf16 %v2759
        %v2776 = vunpack.c.l.bf16 %v2760
        %v2777 = vunpack.c.l.bf16 %v2761
        %v2778 = vunpack.c.l.bf16 %v2762
        %v2779 = vunpack.c.l.bf16 %v2763
        %s2780 = scalar_lea.vmem %s233, 48
        %v2781 = vld [vmem:[%s2780] sm:$0xf]
        %v2783 = vsel %vm392, %v2764, 0
        %v2786 = vsel %vm392, %v2765, 0
        %v2789 = vsel %vm392, %v2766, 0
        %v2792 = vsel %vm392, %v2767, 0
        %v2795 = vsel %vm392, %v2768, 0
        %v2798 = vsel %vm392, %v2769, 0
        %v2801 = vsel %vm392, %v2770, 0
        %v2804 = vsel %vm392, %v2771, 0
        %v2807 = vsel %vm392, %v2772, 0
        %v2810 = vsel %vm392, %v2773, 0
        %v2813 = vsel %vm392, %v2774, 0
        %v2816 = vsel %vm392, %v2775, 0
        %v2819 = vsel %vm392, %v2776, 0
        %v2822 = vsel %vm392, %v2777, 0
        %v2825 = vsel %vm392, %v2778, 0
        %v2828 = vsel %vm392, %v2779, 0
        %v2831 = vsel %vm425, %v2781, 0
        %2833 = vmatpush.msra.mxu0 0.0
        %2834 = vmatpush.msra.mxu0 0.0
        %2835 = vmatpush.msra.mxu0 0.0
        %2836 = vmatpush.msra.mxu0 0.0
        %2837 = vmatpush.msra.mxu0 0.0
        %2838 = vmatpush.msra.mxu0 0.0
        %2839 = vmatpush.msra.mxu0 0.0
        %2840 = vmatpush.msra.mxu0 0.0
        %2841 = vmatpush.msra.mxu0 0.0
        %2842 = vmatpush.msra.mxu0 0.0
        %2843 = vmatpush.msra.mxu0 0.0
        %2844 = vmatpush.msra.mxu0 0.0
        %2845 = vmatpush.msra.mxu0 0.0
        %2846 = vmatpush.msra.mxu0 0.0
        %2847 = vmatpush.msra.mxu0 0.0
        %2848 = vmatpush.msra.mxu0 %v2831
        %2849 = vmatmul.f32.gmra.mxu0 %v2783
        %v2850 = vpop.f32.mrf.mxu0
        %v2851 = vadd.f32 0.0, %v2850
        %2852 = vmatmul.f32.gmra.mxu0 %v2786
        %v2853 = vpop.f32.mrf.mxu0
        %v2854 = vadd.f32 0.0, %v2853
        %2855 = vmatmul.f32.gmra.mxu0 %v2789
        %v2856 = vpop.f32.mrf.mxu0
        %v2857 = vadd.f32 0.0, %v2856
        %2858 = vmatmul.f32.gmra.mxu0 %v2792
        %v2859 = vpop.f32.mrf.mxu0
        %v2860 = vadd.f32 0.0, %v2859
        %2861 = vmatmul.f32.gmra.mxu0 %v2795
        %v2862 = vpop.f32.mrf.mxu0
        %v2863 = vadd.f32 0.0, %v2862
        %2864 = vmatmul.f32.gmra.mxu0 %v2798
        %v2865 = vpop.f32.mrf.mxu0
        %v2866 = vadd.f32 0.0, %v2865
        %2867 = vmatmul.f32.gmra.mxu0 %v2801
        %v2868 = vpop.f32.mrf.mxu0
        %v2869 = vadd.f32 0.0, %v2868
        %2870 = vmatmul.f32.gmra.mxu0 %v2804
        %v2871 = vpop.f32.mrf.mxu0
        %v2872 = vadd.f32 0.0, %v2871
        %2873 = vmatmul.f32.gmra.mxu0 %v2807
        %v2874 = vpop.f32.mrf.mxu0
        %v2875 = vadd.f32 0.0, %v2874
        %2876 = vmatmul.f32.gmra.mxu0 %v2810
        %v2877 = vpop.f32.mrf.mxu0
        %v2878 = vadd.f32 0.0, %v2877
        %2879 = vmatmul.f32.gmra.mxu0 %v2813
        %v2880 = vpop.f32.mrf.mxu0
        %v2881 = vadd.f32 0.0, %v2880
        %2882 = vmatmul.f32.gmra.mxu0 %v2816
        %v2883 = vpop.f32.mrf.mxu0
        %v2884 = vadd.f32 0.0, %v2883
        %2885 = vmatmul.f32.gmra.mxu0 %v2819
        %v2886 = vpop.f32.mrf.mxu0
        %v2887 = vadd.f32 0.0, %v2886
        %2888 = vmatmul.f32.gmra.mxu0 %v2822
        %v2889 = vpop.f32.mrf.mxu0
        %v2890 = vadd.f32 0.0, %v2889
        %2891 = vmatmul.f32.gmra.mxu0 %v2825
        %v2892 = vpop.f32.mrf.mxu0
        %v2893 = vadd.f32 0.0, %v2892
        %2894 = vmatmul.f32.gmra.mxu0 %v2828
        %v2895 = vpop.f32.mrf.mxu0
        %v2896 = vadd.f32 0.0, %v2895
        %2897 = vdwg.mxu0
        %v2898 = vadd.f32 %v2729, %v2851
        %v2899 = vadd.f32 %v2730, %v2854
        %v2900 = vadd.f32 %v2731, %v2857
        %v2901 = vadd.f32 %v2732, %v2860
        %v2902 = vadd.f32 %v2733, %v2863
        %v2903 = vadd.f32 %v2734, %v2866
        %v2904 = vadd.f32 %v2735, %v2869
        %v2905 = vadd.f32 %v2736, %v2872
        %v2906 = vadd.f32 %v2737, %v2875
        %v2907 = vadd.f32 %v2738, %v2878
        %v2908 = vadd.f32 %v2739, %v2881
        %v2909 = vadd.f32 %v2740, %v2884
        %v2910 = vadd.f32 %v2741, %v2887
        %v2911 = vadd.f32 %v2742, %v2890
        %v2912 = vadd.f32 %v2743, %v2893
        %v2913 = vadd.f32 %v2744, %v2896
        %v2914 = vld [vmem:[%s2747] sm:$0xf]
        %v2915 = vld [vmem:[%s2747 + $0x4] sm:$0x1]
        %v2916 = vld [vmem:[%s2747 + $0x8] sm:$0xf]
        %v2917 = vld [vmem:[%s2747 + $0xc] sm:$0x1]
        %v2918 = vld [vmem:[%s2747 + $0x10] sm:$0xf]
        %v2919 = vld [vmem:[%s2747 + $0x14] sm:$0x1]
        %v2920 = vld [vmem:[%s2747 + $0x18] sm:$0xf]
        %v2921 = vld [vmem:[%s2747 + $0x1c] sm:$0x1]
        %v2922 = vld [vmem:[%s2747 + $0x20] sm:$0xf]
        %v2923 = vld [vmem:[%s2747 + $0x24] sm:$0x1]
        %v2924 = vld [vmem:[%s2747 + $0x28] sm:$0xf]
        %v2925 = vld [vmem:[%s2747 + $0x2c] sm:$0x1]
        %v2926 = vld [vmem:[%s2747 + $0x30] sm:$0xf]
        %v2927 = vld [vmem:[%s2747 + $0x34] sm:$0x1]
        %v2928 = vld [vmem:[%s2747 + $0x38] sm:$0xf]
        %v2929 = vld [vmem:[%s2747 + $0x3c] sm:$0x1]
        %v2930 = vld [vmem:[%s2747 + $0x50] sm:$0xf]
        %v2931 = vld [vmem:[%s2747 + $0x54] sm:$0x1]
        %v2932 = vld [vmem:[%s2747 + $0x58] sm:$0xf]
        %v2933 = vld [vmem:[%s2747 + $0x5c] sm:$0x1]
        %v2934 = vld [vmem:[%s2747 + $0x60] sm:$0xf]
        %v2935 = vld [vmem:[%s2747 + $0x64] sm:$0x1]
        %v2936 = vld [vmem:[%s2747 + $0x68] sm:$0xf]
        %v2937 = vld [vmem:[%s2747 + $0x6c] sm:$0x1]
        %v2938 = vld [vmem:[%s2747 + $0x70] sm:$0xf]
        %v2939 = vld [vmem:[%s2747 + $0x74] sm:$0x1]
        %v2940 = vld [vmem:[%s2747 + $0x78] sm:$0xf]
        %v2941 = vld [vmem:[%s2747 + $0x7c] sm:$0x1]
        %v2942 = vld [vmem:[%s2747 + $0x80] sm:$0xf]
        %v2943 = vld [vmem:[%s2747 + $0x84] sm:$0x1]
        %v2944 = vld [vmem:[%s2747 + $0x88] sm:$0xf]
        %v2945 = vld [vmem:[%s2747 + $0x8c] sm:$0x1]
        %v2946 = vunpack.c.l.bf16 %v2914
        %v2947 = vunpack.c.l.bf16 %v2915
        %v2948 = vunpack.c.l.bf16 %v2916
        %v2949 = vunpack.c.l.bf16 %v2917
        %v2950 = vunpack.c.l.bf16 %v2918
        %v2951 = vunpack.c.l.bf16 %v2919
        %v2952 = vunpack.c.l.bf16 %v2920
        %v2953 = vunpack.c.l.bf16 %v2921
        %v2954 = vunpack.c.l.bf16 %v2922
        %v2955 = vunpack.c.l.bf16 %v2923
        %v2956 = vunpack.c.l.bf16 %v2924
        %v2957 = vunpack.c.l.bf16 %v2925
        %v2958 = vunpack.c.l.bf16 %v2926
        %v2959 = vunpack.c.l.bf16 %v2927
        %v2960 = vunpack.c.l.bf16 %v2928
        %v2961 = vunpack.c.l.bf16 %v2929
        %v2962 = vunpack.c.l.bf16 %v2930
        %v2963 = vunpack.c.l.bf16 %v2931
        %v2964 = vunpack.c.l.bf16 %v2932
        %v2965 = vunpack.c.l.bf16 %v2933
        %v2966 = vunpack.c.l.bf16 %v2934
        %v2967 = vunpack.c.l.bf16 %v2935
        %v2968 = vunpack.c.l.bf16 %v2936
        %v2969 = vunpack.c.l.bf16 %v2937
        %v2970 = vunpack.c.l.bf16 %v2938
        %v2971 = vunpack.c.l.bf16 %v2939
        %v2972 = vunpack.c.l.bf16 %v2940
        %v2973 = vunpack.c.l.bf16 %v2941
        %v2974 = vunpack.c.l.bf16 %v2942
        %v2975 = vunpack.c.l.bf16 %v2943
        %v2976 = vunpack.c.l.bf16 %v2944
        %v2977 = vunpack.c.l.bf16 %v2945
        %v3010 = vrot.slane %v2946, 1
        %v3011 = vrot.slane %v2947, 1
        %v3012 = vsel %vm341, %v3010, %v3011
        %v3013 = vrot.slane %v2948, 1
        %v3014 = vrot.slane %v2949, 1
        %v3015 = vsel %vm341, %v3013, %v3014
        %v3016 = vrot.slane %v2950, 1
        %v3017 = vrot.slane %v2951, 1
        %v3018 = vsel %vm341, %v3016, %v3017
        %v3019 = vrot.slane %v2952, 1
        %v3020 = vrot.slane %v2953, 1
        %v3021 = vsel %vm341, %v3019, %v3020
        %v3022 = vrot.slane %v2954, 1
        %v3023 = vrot.slane %v2955, 1
        %v3024 = vsel %vm341, %v3022, %v3023
        %v3025 = vrot.slane %v2956, 1
        %v3026 = vrot.slane %v2957, 1
        %v3027 = vsel %vm341, %v3025, %v3026
        %v3028 = vrot.slane %v2958, 1
        %v3029 = vrot.slane %v2959, 1
        %v3030 = vsel %vm341, %v3028, %v3029
        %v3031 = vrot.slane %v2960, 1
        %v3032 = vrot.slane %v2961, 1
        %v3033 = vsel %vm341, %v3031, %v3032
        %v3034 = vrot.slane %v2962, 1
        %v3035 = vrot.slane %v2963, 1
        %v3036 = vsel %vm341, %v3034, %v3035
        %v3037 = vrot.slane %v2964, 1
        %v3038 = vrot.slane %v2965, 1
        %v3039 = vsel %vm341, %v3037, %v3038
        %v3040 = vrot.slane %v2966, 1
        %v3041 = vrot.slane %v2967, 1
        %v3042 = vsel %vm341, %v3040, %v3041
        %v3043 = vrot.slane %v2968, 1
        %v3044 = vrot.slane %v2969, 1
        %v3045 = vsel %vm341, %v3043, %v3044
        %v3046 = vrot.slane %v2970, 1
        %v3047 = vrot.slane %v2971, 1
        %v3048 = vsel %vm341, %v3046, %v3047
        %v3049 = vrot.slane %v2972, 1
        %v3050 = vrot.slane %v2973, 1
        %v3051 = vsel %vm341, %v3049, %v3050
        %v3052 = vrot.slane %v2974, 1
        %v3053 = vrot.slane %v2975, 1
        %v3054 = vsel %vm341, %v3052, %v3053
        %v3055 = vrot.slane %v2976, 1
        %v3056 = vrot.slane %v2977, 1
        %v3057 = vsel %vm341, %v3055, %v3056
        %s3058 = scalar_lea.vmem %s233, 52
        %v3059 = vld [vmem:[%s3058] sm:$0xf]
        %v3060 = vsel %vm392, %v3012, 0
        %v3062 = vsel %vm392, %v3015, 0
        %v3064 = vsel %vm392, %v3018, 0
        %v3066 = vsel %vm392, %v3021, 0
        %v3068 = vsel %vm392, %v3024, 0
        %v3070 = vsel %vm392, %v3027, 0
        %v3072 = vsel %vm392, %v3030, 0
        %v3074 = vsel %vm392, %v3033, 0
        %v3076 = vsel %vm392, %v3036, 0
        %v3078 = vsel %vm392, %v3039, 0
        %v3080 = vsel %vm392, %v3042, 0
        %v3082 = vsel %vm392, %v3045, 0
        %v3084 = vsel %vm392, %v3048, 0
        %v3086 = vsel %vm392, %v3051, 0
        %v3088 = vsel %vm392, %v3054, 0
        %v3090 = vsel %vm392, %v3057, 0
        %v3093 = vsel %vm425, %v3059, 0
        %3095 = vmatpush.msra.mxu0 0.0
        %3096 = vmatpush.msra.mxu0 0.0
        %3097 = vmatpush.msra.mxu0 0.0
        %3098 = vmatpush.msra.mxu0 0.0
        %3099 = vmatpush.msra.mxu0 0.0
        %3100 = vmatpush.msra.mxu0 0.0
        %3101 = vmatpush.msra.mxu0 0.0
        %3102 = vmatpush.msra.mxu0 0.0
        %3103 = vmatpush.msra.mxu0 0.0
        %3104 = vmatpush.msra.mxu0 0.0
        %3105 = vmatpush.msra.mxu0 0.0
        %3106 = vmatpush.msra.mxu0 0.0
        %3107 = vmatpush.msra.mxu0 0.0
        %3108 = vmatpush.msra.mxu0 0.0
        %3109 = vmatpush.msra.mxu0 0.0
        %3110 = vmatpush.msra.mxu0 %v3093
        %3111 = vmatmul.f32.gmra.mxu0 %v3060
        %v3112 = vpop.f32.mrf.mxu0
        %v3113 = vadd.f32 0.0, %v3112
        %3114 = vmatmul.f32.gmra.mxu0 %v3062
        %v3115 = vpop.f32.mrf.mxu0
        %v3116 = vadd.f32 0.0, %v3115
        %3117 = vmatmul.f32.gmra.mxu0 %v3064
        %v3118 = vpop.f32.mrf.mxu0
        %v3119 = vadd.f32 0.0, %v3118
        %3120 = vmatmul.f32.gmra.mxu0 %v3066
        %v3121 = vpop.f32.mrf.mxu0
        %v3122 = vadd.f32 0.0, %v3121
        %3123 = vmatmul.f32.gmra.mxu0 %v3068
        %v3124 = vpop.f32.mrf.mxu0
        %v3125 = vadd.f32 0.0, %v3124
        %3126 = vmatmul.f32.gmra.mxu0 %v3070
        %v3127 = vpop.f32.mrf.mxu0
        %v3128 = vadd.f32 0.0, %v3127
        %3129 = vmatmul.f32.gmra.mxu0 %v3072
        %v3130 = vpop.f32.mrf.mxu0
        %v3131 = vadd.f32 0.0, %v3130
        %3132 = vmatmul.f32.gmra.mxu0 %v3074
        %v3133 = vpop.f32.mrf.mxu0
        %v3134 = vadd.f32 0.0, %v3133
        %3135 = vmatmul.f32.gmra.mxu0 %v3076
        %v3136 = vpop.f32.mrf.mxu0
        %v3137 = vadd.f32 0.0, %v3136
        %3138 = vmatmul.f32.gmra.mxu0 %v3078
        %v3139 = vpop.f32.mrf.mxu0
        %v3140 = vadd.f32 0.0, %v3139
        %3141 = vmatmul.f32.gmra.mxu0 %v3080
        %v3142 = vpop.f32.mrf.mxu0
        %v3143 = vadd.f32 0.0, %v3142
        %3144 = vmatmul.f32.gmra.mxu0 %v3082
        %v3145 = vpop.f32.mrf.mxu0
        %v3146 = vadd.f32 0.0, %v3145
        %3147 = vmatmul.f32.gmra.mxu0 %v3084
        %v3148 = vpop.f32.mrf.mxu0
        %v3149 = vadd.f32 0.0, %v3148
        %3150 = vmatmul.f32.gmra.mxu0 %v3086
        %v3151 = vpop.f32.mrf.mxu0
        %v3152 = vadd.f32 0.0, %v3151
        %3153 = vmatmul.f32.gmra.mxu0 %v3088
        %v3154 = vpop.f32.mrf.mxu0
        %v3155 = vadd.f32 0.0, %v3154
        %3156 = vmatmul.f32.gmra.mxu0 %v3090
        %v3157 = vpop.f32.mrf.mxu0
        %v3158 = vadd.f32 0.0, %v3157
        %3159 = vdwg.mxu0
        %v3160 = vadd.f32 %v2898, %v3113
        %v3161 = vadd.f32 %v2899, %v3116
        %v3162 = vadd.f32 %v2900, %v3119
        %v3163 = vadd.f32 %v2901, %v3122
        %v3164 = vadd.f32 %v2902, %v3125
        %v3165 = vadd.f32 %v2903, %v3128
        %v3166 = vadd.f32 %v2904, %v3131
        %v3167 = vadd.f32 %v2905, %v3134
        %v3168 = vadd.f32 %v2906, %v3137
        %v3169 = vadd.f32 %v2907, %v3140
        %v3170 = vadd.f32 %v2908, %v3143
        %v3171 = vadd.f32 %v2909, %v3146
        %v3172 = vadd.f32 %v2910, %v3149
        %v3173 = vadd.f32 %v2911, %v3152
        %v3174 = vadd.f32 %v2912, %v3155
        %v3175 = vadd.f32 %v2913, %v3158
        %v3176 = vld [vmem:[%s2747] sm:$0xe]
        %v3177 = vld [vmem:[%s2747 + $0x8] sm:$0xe]
        %v3178 = vld [vmem:[%s2747 + $0x10] sm:$0xe]
        %v3179 = vld [vmem:[%s2747 + $0x18] sm:$0xe]
        %v3180 = vld [vmem:[%s2747 + $0x20] sm:$0xe]
        %v3181 = vld [vmem:[%s2747 + $0x28] sm:$0xe]
        %v3182 = vld [vmem:[%s2747 + $0x30] sm:$0xe]
        %v3183 = vld [vmem:[%s2747 + $0x38] sm:$0xe]
        %v3184 = vld [vmem:[%s2747 + $0x50] sm:$0xe]
        %v3185 = vld [vmem:[%s2747 + $0x58] sm:$0xe]
        %v3186 = vld [vmem:[%s2747 + $0x60] sm:$0xe]
        %v3187 = vld [vmem:[%s2747 + $0x68] sm:$0xe]
        %v3188 = vld [vmem:[%s2747 + $0x70] sm:$0xe]
        %v3189 = vld [vmem:[%s2747 + $0x78] sm:$0xe]
        %v3190 = vld [vmem:[%s2747 + $0x80] sm:$0xe]
        %v3191 = vld [vmem:[%s2747 + $0x88] sm:$0xe]
        %v3192 = vunpack.c.l.bf16 %v3176
        %v3193 = vunpack.c.l.bf16 %v3177
        %v3194 = vunpack.c.l.bf16 %v3178
        %v3195 = vunpack.c.l.bf16 %v3179
        %v3196 = vunpack.c.l.bf16 %v3180
        %v3197 = vunpack.c.l.bf16 %v3181
        %v3198 = vunpack.c.l.bf16 %v3182
        %v3199 = vunpack.c.l.bf16 %v3183
        %v3200 = vunpack.c.l.bf16 %v3184
        %v3201 = vunpack.c.l.bf16 %v3185
        %v3202 = vunpack.c.l.bf16 %v3186
        %v3203 = vunpack.c.l.bf16 %v3187
        %v3204 = vunpack.c.l.bf16 %v3188
        %v3205 = vunpack.c.l.bf16 %v3189
        %v3206 = vunpack.c.l.bf16 %v3190
        %v3207 = vunpack.c.l.bf16 %v3191
        %v3224 = vrot.slane %v3192, 2
        %v3225 = vrot.slane %v2947, 2
        %v3226 = vsel %vm642, %v3224, %v3225
        %v3227 = vrot.slane %v3193, 2
        %v3228 = vrot.slane %v2949, 2
        %v3229 = vsel %vm642, %v3227, %v3228
        %v3230 = vrot.slane %v3194, 2
        %v3231 = vrot.slane %v2951, 2
        %v3232 = vsel %vm642, %v3230, %v3231
        %v3233 = vrot.slane %v3195, 2
        %v3234 = vrot.slane %v2953, 2
        %v3235 = vsel %vm642, %v3233, %v3234
        %v3236 = vrot.slane %v3196, 2
        %v3237 = vrot.slane %v2955, 2
        %v3238 = vsel %vm642, %v3236, %v3237
        %v3239 = vrot.slane %v3197, 2
        %v3240 = vrot.slane %v2957, 2
        %v3241 = vsel %vm642, %v3239, %v3240
        %v3242 = vrot.slane %v3198, 2
        %v3243 = vrot.slane %v2959, 2
        %v3244 = vsel %vm642, %v3242, %v3243
        %v3245 = vrot.slane %v3199, 2
        %v3246 = vrot.slane %v2961, 2
        %v3247 = vsel %vm642, %v3245, %v3246
        %v3248 = vrot.slane %v3200, 2
        %v3249 = vrot.slane %v2963, 2
        %v3250 = vsel %vm642, %v3248, %v3249
        %v3251 = vrot.slane %v3201, 2
        %v3252 = vrot.slane %v2965, 2
        %v3253 = vsel %vm642, %v3251, %v3252
        %v3254 = vrot.slane %v3202, 2
        %v3255 = vrot.slane %v2967, 2
        %v3256 = vsel %vm642, %v3254, %v3255
        %v3257 = vrot.slane %v3203, 2
        %v3258 = vrot.slane %v2969, 2
        %v3259 = vsel %vm642, %v3257, %v3258
        %v3260 = vrot.slane %v3204, 2
        %v3261 = vrot.slane %v2971, 2
        %v3262 = vsel %vm642, %v3260, %v3261
        %v3263 = vrot.slane %v3205, 2
        %v3264 = vrot.slane %v2973, 2
        %v3265 = vsel %vm642, %v3263, %v3264
        %v3266 = vrot.slane %v3206, 2
        %v3267 = vrot.slane %v2975, 2
        %v3268 = vsel %vm642, %v3266, %v3267
        %v3269 = vrot.slane %v3207, 2
        %v3270 = vrot.slane %v2977, 2
        %v3271 = vsel %vm642, %v3269, %v3270
        %s3272 = scalar_lea.vmem %s233, 56
        %v3273 = vld [vmem:[%s3272] sm:$0xf]
        %v3274 = vsel %vm392, %v3226, 0
        %v3276 = vsel %vm392, %v3229, 0
        %v3278 = vsel %vm392, %v3232, 0
        %v3280 = vsel %vm392, %v3235, 0
        %v3282 = vsel %vm392, %v3238, 0
        %v3284 = vsel %vm392, %v3241, 0
        %v3286 = vsel %vm392, %v3244, 0
        %v3288 = vsel %vm392, %v3247, 0
        %v3290 = vsel %vm392, %v3250, 0
        %v3292 = vsel %vm392, %v3253, 0
        %v3294 = vsel %vm392, %v3256, 0
        %v3296 = vsel %vm392, %v3259, 0
        %v3298 = vsel %vm392, %v3262, 0
        %v3300 = vsel %vm392, %v3265, 0
        %v3302 = vsel %vm392, %v3268, 0
        %v3304 = vsel %vm392, %v3271, 0
        %v3307 = vsel %vm425, %v3273, 0
        %3309 = vmatpush.msra.mxu0 0.0
        %3310 = vmatpush.msra.mxu0 0.0
        %3311 = vmatpush.msra.mxu0 0.0
        %3312 = vmatpush.msra.mxu0 0.0
        %3313 = vmatpush.msra.mxu0 0.0
        %3314 = vmatpush.msra.mxu0 0.0
        %3315 = vmatpush.msra.mxu0 0.0
        %3316 = vmatpush.msra.mxu0 0.0
        %3317 = vmatpush.msra.mxu0 0.0
        %3318 = vmatpush.msra.mxu0 0.0
        %3319 = vmatpush.msra.mxu0 0.0
        %3320 = vmatpush.msra.mxu0 0.0
        %3321 = vmatpush.msra.mxu0 0.0
        %3322 = vmatpush.msra.mxu0 0.0
        %3323 = vmatpush.msra.mxu0 0.0
        %3324 = vmatpush.msra.mxu0 %v3307
        %3325 = vmatmul.f32.gmra.mxu0 %v3274
        %v3326 = vpop.f32.mrf.mxu0
        %v3327 = vadd.f32 0.0, %v3326
        %3328 = vmatmul.f32.gmra.mxu0 %v3276
        %v3329 = vpop.f32.mrf.mxu0
        %v3330 = vadd.f32 0.0, %v3329
        %3331 = vmatmul.f32.gmra.mxu0 %v3278
        %v3332 = vpop.f32.mrf.mxu0
        %v3333 = vadd.f32 0.0, %v3332
        %3334 = vmatmul.f32.gmra.mxu0 %v3280
        %v3335 = vpop.f32.mrf.mxu0
        %v3336 = vadd.f32 0.0, %v3335
        %3337 = vmatmul.f32.gmra.mxu0 %v3282
        %v3338 = vpop.f32.mrf.mxu0
        %v3339 = vadd.f32 0.0, %v3338
        %3340 = vmatmul.f32.gmra.mxu0 %v3284
        %v3341 = vpop.f32.mrf.mxu0
        %v3342 = vadd.f32 0.0, %v3341
        %3343 = vmatmul.f32.gmra.mxu0 %v3286
        %v3344 = vpop.f32.mrf.mxu0
        %v3345 = vadd.f32 0.0, %v3344
        %3346 = vmatmul.f32.gmra.mxu0 %v3288
        %v3347 = vpop.f32.mrf.mxu0
        %v3348 = vadd.f32 0.0, %v3347
        %3349 = vmatmul.f32.gmra.mxu0 %v3290
        %v3350 = vpop.f32.mrf.mxu0
        %v3351 = vadd.f32 0.0, %v3350
        %3352 = vmatmul.f32.gmra.mxu0 %v3292
        %v3353 = vpop.f32.mrf.mxu0
        %v3354 = vadd.f32 0.0, %v3353
        %3355 = vmatmul.f32.gmra.mxu0 %v3294
        %v3356 = vpop.f32.mrf.mxu0
        %v3357 = vadd.f32 0.0, %v3356
        %3358 = vmatmul.f32.gmra.mxu0 %v3296
        %v3359 = vpop.f32.mrf.mxu0
        %v3360 = vadd.f32 0.0, %v3359
        %3361 = vmatmul.f32.gmra.mxu0 %v3298
        %v3362 = vpop.f32.mrf.mxu0
        %v3363 = vadd.f32 0.0, %v3362
        %3364 = vmatmul.f32.gmra.mxu0 %v3300
        %v3365 = vpop.f32.mrf.mxu0
        %v3366 = vadd.f32 0.0, %v3365
        %3367 = vmatmul.f32.gmra.mxu0 %v3302
        %v3368 = vpop.f32.mrf.mxu0
        %v3369 = vadd.f32 0.0, %v3368
        %3370 = vmatmul.f32.gmra.mxu0 %v3304
        %v3371 = vpop.f32.mrf.mxu0
        %v3372 = vadd.f32 0.0, %v3371
        %3373 = vdwg.mxu0
        %v3374 = vadd.f32 %v3160, %v3327
        %v3375 = vadd.f32 %v3161, %v3330
        %v3376 = vadd.f32 %v3162, %v3333
        %v3377 = vadd.f32 %v3163, %v3336
        %v3378 = vadd.f32 %v3164, %v3339
        %v3379 = vadd.f32 %v3165, %v3342
        %v3380 = vadd.f32 %v3166, %v3345
        %v3381 = vadd.f32 %v3167, %v3348
        %v3382 = vadd.f32 %v3168, %v3351
        %v3383 = vadd.f32 %v3169, %v3354
        %v3384 = vadd.f32 %v3170, %v3357
        %v3385 = vadd.f32 %v3171, %v3360
        %v3386 = vadd.f32 %v3172, %v3363
        %v3387 = vadd.f32 %v3173, %v3366
        %v3388 = vadd.f32 %v3174, %v3369
        %v3389 = vadd.f32 %v3175, %v3372
        %s3390 = sadd.s32 4, %s2100
        %s3391 = smul.addr %s3390, 4
        %s3392 = scalar_lea.vmem %s227, %s3391
        %v3393 = vld [vmem:[%s3392] sm:$0xf]
        %v3394 = vld [vmem:[%s3392 + $0x8] sm:$0xf]
        %v3395 = vld [vmem:[%s3392 + $0x10] sm:$0xf]
        %v3396 = vld [vmem:[%s3392 + $0x18] sm:$0xf]
        %v3397 = vld [vmem:[%s3392 + $0x20] sm:$0xf]
        %v3398 = vld [vmem:[%s3392 + $0x28] sm:$0xf]
        %v3399 = vld [vmem:[%s3392 + $0x30] sm:$0xf]
        %v3400 = vld [vmem:[%s3392 + $0x38] sm:$0xf]
        %v3401 = vld [vmem:[%s3392 + $0x50] sm:$0xf]
        %v3402 = vld [vmem:[%s3392 + $0x58] sm:$0xf]
        %v3403 = vld [vmem:[%s3392 + $0x60] sm:$0xf]
        %v3404 = vld [vmem:[%s3392 + $0x68] sm:$0xf]
        %v3405 = vld [vmem:[%s3392 + $0x70] sm:$0xf]
        %v3406 = vld [vmem:[%s3392 + $0x78] sm:$0xf]
        %v3407 = vld [vmem:[%s3392 + $0x80] sm:$0xf]
        %v3408 = vld [vmem:[%s3392 + $0x88] sm:$0xf]
        %v3409 = vunpack.c.l.bf16 %v3393
        %v3410 = vunpack.c.l.bf16 %v3394
        %v3411 = vunpack.c.l.bf16 %v3395
        %v3412 = vunpack.c.l.bf16 %v3396
        %v3413 = vunpack.c.l.bf16 %v3397
        %v3414 = vunpack.c.l.bf16 %v3398
        %v3415 = vunpack.c.l.bf16 %v3399
        %v3416 = vunpack.c.l.bf16 %v3400
        %v3417 = vunpack.c.l.bf16 %v3401
        %v3418 = vunpack.c.l.bf16 %v3402
        %v3419 = vunpack.c.l.bf16 %v3403
        %v3420 = vunpack.c.l.bf16 %v3404
        %v3421 = vunpack.c.l.bf16 %v3405
        %v3422 = vunpack.c.l.bf16 %v3406
        %v3423 = vunpack.c.l.bf16 %v3407
        %v3424 = vunpack.c.l.bf16 %v3408
        %s3425 = scalar_lea.vmem %s233, 60
        %v3426 = vld [vmem:[%s3425] sm:$0xf]
        %v3428 = vsel %vm392, %v3409, 0
        %v3431 = vsel %vm392, %v3410, 0
        %v3434 = vsel %vm392, %v3411, 0
        %v3437 = vsel %vm392, %v3412, 0
        %v3440 = vsel %vm392, %v3413, 0
        %v3443 = vsel %vm392, %v3414, 0
        %v3446 = vsel %vm392, %v3415, 0
        %v3449 = vsel %vm392, %v3416, 0
        %v3452 = vsel %vm392, %v3417, 0
        %v3455 = vsel %vm392, %v3418, 0
        %v3458 = vsel %vm392, %v3419, 0
        %v3461 = vsel %vm392, %v3420, 0
        %v3464 = vsel %vm392, %v3421, 0
        %v3467 = vsel %vm392, %v3422, 0
        %v3470 = vsel %vm392, %v3423, 0
        %v3473 = vsel %vm392, %v3424, 0
        %v3476 = vsel %vm425, %v3426, 0
        %3478 = vmatpush.msra.mxu0 0.0
        %3479 = vmatpush.msra.mxu0 0.0
        %3480 = vmatpush.msra.mxu0 0.0
        %3481 = vmatpush.msra.mxu0 0.0
        %3482 = vmatpush.msra.mxu0 0.0
        %3483 = vmatpush.msra.mxu0 0.0
        %3484 = vmatpush.msra.mxu0 0.0
        %3485 = vmatpush.msra.mxu0 0.0
        %3486 = vmatpush.msra.mxu0 0.0
        %3487 = vmatpush.msra.mxu0 0.0
        %3488 = vmatpush.msra.mxu0 0.0
        %3489 = vmatpush.msra.mxu0 0.0
        %3490 = vmatpush.msra.mxu0 0.0
        %3491 = vmatpush.msra.mxu0 0.0
        %3492 = vmatpush.msra.mxu0 0.0
        %3493 = vmatpush.msra.mxu0 %v3476
        %3494 = vmatmul.f32.gmra.mxu0 %v3428
        %v3495 = vpop.f32.mrf.mxu0
        %v3496 = vadd.f32 0.0, %v3495
        %3497 = vmatmul.f32.gmra.mxu0 %v3431
        %v3498 = vpop.f32.mrf.mxu0
        %v3499 = vadd.f32 0.0, %v3498
        %3500 = vmatmul.f32.gmra.mxu0 %v3434
        %v3501 = vpop.f32.mrf.mxu0
        %v3502 = vadd.f32 0.0, %v3501
        %3503 = vmatmul.f32.gmra.mxu0 %v3437
        %v3504 = vpop.f32.mrf.mxu0
        %v3505 = vadd.f32 0.0, %v3504
        %3506 = vmatmul.f32.gmra.mxu0 %v3440
        %v3507 = vpop.f32.mrf.mxu0
        %v3508 = vadd.f32 0.0, %v3507
        %3509 = vmatmul.f32.gmra.mxu0 %v3443
        %v3510 = vpop.f32.mrf.mxu0
        %v3511 = vadd.f32 0.0, %v3510
        %3512 = vmatmul.f32.gmra.mxu0 %v3446
        %v3513 = vpop.f32.mrf.mxu0
        %v3514 = vadd.f32 0.0, %v3513
        %3515 = vmatmul.f32.gmra.mxu0 %v3449
        %v3516 = vpop.f32.mrf.mxu0
        %v3517 = vadd.f32 0.0, %v3516
        %3518 = vmatmul.f32.gmra.mxu0 %v3452
        %v3519 = vpop.f32.mrf.mxu0
        %v3520 = vadd.f32 0.0, %v3519
        %3521 = vmatmul.f32.gmra.mxu0 %v3455
        %v3522 = vpop.f32.mrf.mxu0
        %v3523 = vadd.f32 0.0, %v3522
        %3524 = vmatmul.f32.gmra.mxu0 %v3458
        %v3525 = vpop.f32.mrf.mxu0
        %v3526 = vadd.f32 0.0, %v3525
        %3527 = vmatmul.f32.gmra.mxu0 %v3461
        %v3528 = vpop.f32.mrf.mxu0
        %v3529 = vadd.f32 0.0, %v3528
        %3530 = vmatmul.f32.gmra.mxu0 %v3464
        %v3531 = vpop.f32.mrf.mxu0
        %v3532 = vadd.f32 0.0, %v3531
        %3533 = vmatmul.f32.gmra.mxu0 %v3467
        %v3534 = vpop.f32.mrf.mxu0
        %v3535 = vadd.f32 0.0, %v3534
        %3536 = vmatmul.f32.gmra.mxu0 %v3470
        %v3537 = vpop.f32.mrf.mxu0
        %v3538 = vadd.f32 0.0, %v3537
        %3539 = vmatmul.f32.gmra.mxu0 %v3473
        %v3540 = vpop.f32.mrf.mxu0
        %v3541 = vadd.f32 0.0, %v3540
        %3542 = vdwg.mxu0
        %v3543 = vadd.f32 %v3374, %v3496
        %v3544 = vadd.f32 %v3375, %v3499
        %v3545 = vadd.f32 %v3376, %v3502
        %v3546 = vadd.f32 %v3377, %v3505
        %v3547 = vadd.f32 %v3378, %v3508
        %v3548 = vadd.f32 %v3379, %v3511
        %v3549 = vadd.f32 %v3380, %v3514
        %v3550 = vadd.f32 %v3381, %v3517
        %v3551 = vadd.f32 %v3382, %v3520
        %v3552 = vadd.f32 %v3383, %v3523
        %v3553 = vadd.f32 %v3384, %v3526
        %v3554 = vadd.f32 %v3385, %v3529
        %v3555 = vadd.f32 %v3386, %v3532
        %v3556 = vadd.f32 %v3387, %v3535
        %v3557 = vadd.f32 %v3388, %v3538
        %v3558 = vadd.f32 %v3389, %v3541
        %v3559 = vld [vmem:[%s3392] sm:$0xf]
        %v3560 = vld [vmem:[%s3392 + $0x4] sm:$0x1]
        %v3561 = vld [vmem:[%s3392 + $0x8] sm:$0xf]
        %v3562 = vld [vmem:[%s3392 + $0xc] sm:$0x1]
        %v3563 = vld [vmem:[%s3392 + $0x10] sm:$0xf]
        %v3564 = vld [vmem:[%s3392 + $0x14] sm:$0x1]
        %v3565 = vld [vmem:[%s3392 + $0x18] sm:$0xf]
        %v3566 = vld [vmem:[%s3392 + $0x1c] sm:$0x1]
        %v3567 = vld [vmem:[%s3392 + $0x20] sm:$0xf]
        %v3568 = vld [vmem:[%s3392 + $0x24] sm:$0x1]
        %v3569 = vld [vmem:[%s3392 + $0x28] sm:$0xf]
        %v3570 = vld [vmem:[%s3392 + $0x2c] sm:$0x1]
        %v3571 = vld [vmem:[%s3392 + $0x30] sm:$0xf]
        %v3572 = vld [vmem:[%s3392 + $0x34] sm:$0x1]
        %v3573 = vld [vmem:[%s3392 + $0x38] sm:$0xf]
        %v3574 = vld [vmem:[%s3392 + $0x3c] sm:$0x1]
        %v3575 = vld [vmem:[%s3392 + $0x50] sm:$0xf]
        %v3576 = vld [vmem:[%s3392 + $0x54] sm:$0x1]
        %v3577 = vld [vmem:[%s3392 + $0x58] sm:$0xf]
        %v3578 = vld [vmem:[%s3392 + $0x5c] sm:$0x1]
        %v3579 = vld [vmem:[%s3392 + $0x60] sm:$0xf]
        %v3580 = vld [vmem:[%s3392 + $0x64] sm:$0x1]
        %v3581 = vld [vmem:[%s3392 + $0x68] sm:$0xf]
        %v3582 = vld [vmem:[%s3392 + $0x6c] sm:$0x1]
        %v3583 = vld [vmem:[%s3392 + $0x70] sm:$0xf]
        %v3584 = vld [vmem:[%s3392 + $0x74] sm:$0x1]
        %v3585 = vld [vmem:[%s3392 + $0x78] sm:$0xf]
        %v3586 = vld [vmem:[%s3392 + $0x7c] sm:$0x1]
        %v3587 = vld [vmem:[%s3392 + $0x80] sm:$0xf]
        %v3588 = vld [vmem:[%s3392 + $0x84] sm:$0x1]
        %v3589 = vld [vmem:[%s3392 + $0x88] sm:$0xf]
        %v3590 = vld [vmem:[%s3392 + $0x8c] sm:$0x1]
        %v3591 = vunpack.c.l.bf16 %v3559
        %v3592 = vunpack.c.l.bf16 %v3560
        %v3593 = vunpack.c.l.bf16 %v3561
        %v3594 = vunpack.c.l.bf16 %v3562
        %v3595 = vunpack.c.l.bf16 %v3563
        %v3596 = vunpack.c.l.bf16 %v3564
        %v3597 = vunpack.c.l.bf16 %v3565
        %v3598 = vunpack.c.l.bf16 %v3566
        %v3599 = vunpack.c.l.bf16 %v3567
        %v3600 = vunpack.c.l.bf16 %v3568
        %v3601 = vunpack.c.l.bf16 %v3569
        %v3602 = vunpack.c.l.bf16 %v3570
        %v3603 = vunpack.c.l.bf16 %v3571
        %v3604 = vunpack.c.l.bf16 %v3572
        %v3605 = vunpack.c.l.bf16 %v3573
        %v3606 = vunpack.c.l.bf16 %v3574
        %v3607 = vunpack.c.l.bf16 %v3575
        %v3608 = vunpack.c.l.bf16 %v3576
        %v3609 = vunpack.c.l.bf16 %v3577
        %v3610 = vunpack.c.l.bf16 %v3578
        %v3611 = vunpack.c.l.bf16 %v3579
        %v3612 = vunpack.c.l.bf16 %v3580
        %v3613 = vunpack.c.l.bf16 %v3581
        %v3614 = vunpack.c.l.bf16 %v3582
        %v3615 = vunpack.c.l.bf16 %v3583
        %v3616 = vunpack.c.l.bf16 %v3584
        %v3617 = vunpack.c.l.bf16 %v3585
        %v3618 = vunpack.c.l.bf16 %v3586
        %v3619 = vunpack.c.l.bf16 %v3587
        %v3620 = vunpack.c.l.bf16 %v3588
        %v3621 = vunpack.c.l.bf16 %v3589
        %v3622 = vunpack.c.l.bf16 %v3590
        %v3655 = vrot.slane %v3591, 1
        %v3656 = vrot.slane %v3592, 1
        %v3657 = vsel %vm341, %v3655, %v3656
        %v3658 = vrot.slane %v3593, 1
        %v3659 = vrot.slane %v3594, 1
        %v3660 = vsel %vm341, %v3658, %v3659
        %v3661 = vrot.slane %v3595, 1
        %v3662 = vrot.slane %v3596, 1
        %v3663 = vsel %vm341, %v3661, %v3662
        %v3664 = vrot.slane %v3597, 1
        %v3665 = vrot.slane %v3598, 1
        %v3666 = vsel %vm341, %v3664, %v3665
        %v3667 = vrot.slane %v3599, 1
        %v3668 = vrot.slane %v3600, 1
        %v3669 = vsel %vm341, %v3667, %v3668
        %v3670 = vrot.slane %v3601, 1
        %v3671 = vrot.slane %v3602, 1
        %v3672 = vsel %vm341, %v3670, %v3671
        %v3673 = vrot.slane %v3603, 1
        %v3674 = vrot.slane %v3604, 1
        %v3675 = vsel %vm341, %v3673, %v3674
        %v3676 = vrot.slane %v3605, 1
        %v3677 = vrot.slane %v3606, 1
        %v3678 = vsel %vm341, %v3676, %v3677
        %v3679 = vrot.slane %v3607, 1
        %v3680 = vrot.slane %v3608, 1
        %v3681 = vsel %vm341, %v3679, %v3680
        %v3682 = vrot.slane %v3609, 1
        %v3683 = vrot.slane %v3610, 1
        %v3684 = vsel %vm341, %v3682, %v3683
        %v3685 = vrot.slane %v3611, 1
        %v3686 = vrot.slane %v3612, 1
        %v3687 = vsel %vm341, %v3685, %v3686
        %v3688 = vrot.slane %v3613, 1
        %v3689 = vrot.slane %v3614, 1
        %v3690 = vsel %vm341, %v3688, %v3689
        %v3691 = vrot.slane %v3615, 1
        %v3692 = vrot.slane %v3616, 1
        %v3693 = vsel %vm341, %v3691, %v3692
        %v3694 = vrot.slane %v3617, 1
        %v3695 = vrot.slane %v3618, 1
        %v3696 = vsel %vm341, %v3694, %v3695
        %v3697 = vrot.slane %v3619, 1
        %v3698 = vrot.slane %v3620, 1
        %v3699 = vsel %vm341, %v3697, %v3698
        %v3700 = vrot.slane %v3621, 1
        %v3701 = vrot.slane %v3622, 1
        %v3702 = vsel %vm341, %v3700, %v3701
        %s3703 = scalar_lea.vmem %s233, 64
        %v3704 = vld [vmem:[%s3703] sm:$0xf]
        %v3705 = vsel %vm392, %v3657, 0
        %v3707 = vsel %vm392, %v3660, 0
        %v3709 = vsel %vm392, %v3663, 0
        %v3711 = vsel %vm392, %v3666, 0
        %v3713 = vsel %vm392, %v3669, 0
        %v3715 = vsel %vm392, %v3672, 0
        %v3717 = vsel %vm392, %v3675, 0
        %v3719 = vsel %vm392, %v3678, 0
        %v3721 = vsel %vm392, %v3681, 0
        %v3723 = vsel %vm392, %v3684, 0
        %v3725 = vsel %vm392, %v3687, 0
        %v3727 = vsel %vm392, %v3690, 0
        %v3729 = vsel %vm392, %v3693, 0
        %v3731 = vsel %vm392, %v3696, 0
        %v3733 = vsel %vm392, %v3699, 0
        %v3735 = vsel %vm392, %v3702, 0
        %v3738 = vsel %vm425, %v3704, 0
        %3740 = vmatpush.msra.mxu0 0.0
        %3741 = vmatpush.msra.mxu0 0.0
        %3742 = vmatpush.msra.mxu0 0.0
        %3743 = vmatpush.msra.mxu0 0.0
        %3744 = vmatpush.msra.mxu0 0.0
        %3745 = vmatpush.msra.mxu0 0.0
        %3746 = vmatpush.msra.mxu0 0.0
        %3747 = vmatpush.msra.mxu0 0.0
        %3748 = vmatpush.msra.mxu0 0.0
        %3749 = vmatpush.msra.mxu0 0.0
        %3750 = vmatpush.msra.mxu0 0.0
        %3751 = vmatpush.msra.mxu0 0.0
        %3752 = vmatpush.msra.mxu0 0.0
        %3753 = vmatpush.msra.mxu0 0.0
        %3754 = vmatpush.msra.mxu0 0.0
        %3755 = vmatpush.msra.mxu0 %v3738
        %3756 = vmatmul.f32.gmra.mxu0 %v3705
        %v3757 = vpop.f32.mrf.mxu0
        %v3758 = vadd.f32 0.0, %v3757
        %3759 = vmatmul.f32.gmra.mxu0 %v3707
        %v3760 = vpop.f32.mrf.mxu0
        %v3761 = vadd.f32 0.0, %v3760
        %3762 = vmatmul.f32.gmra.mxu0 %v3709
        %v3763 = vpop.f32.mrf.mxu0
        %v3764 = vadd.f32 0.0, %v3763
        %3765 = vmatmul.f32.gmra.mxu0 %v3711
        %v3766 = vpop.f32.mrf.mxu0
        %v3767 = vadd.f32 0.0, %v3766
        %3768 = vmatmul.f32.gmra.mxu0 %v3713
        %v3769 = vpop.f32.mrf.mxu0
        %v3770 = vadd.f32 0.0, %v3769
        %3771 = vmatmul.f32.gmra.mxu0 %v3715
        %v3772 = vpop.f32.mrf.mxu0
        %v3773 = vadd.f32 0.0, %v3772
        %3774 = vmatmul.f32.gmra.mxu0 %v3717
        %v3775 = vpop.f32.mrf.mxu0
        %v3776 = vadd.f32 0.0, %v3775
        %3777 = vmatmul.f32.gmra.mxu0 %v3719
        %v3778 = vpop.f32.mrf.mxu0
        %v3779 = vadd.f32 0.0, %v3778
        %3780 = vmatmul.f32.gmra.mxu0 %v3721
        %v3781 = vpop.f32.mrf.mxu0
        %v3782 = vadd.f32 0.0, %v3781
        %3783 = vmatmul.f32.gmra.mxu0 %v3723
        %v3784 = vpop.f32.mrf.mxu0
        %v3785 = vadd.f32 0.0, %v3784
        %3786 = vmatmul.f32.gmra.mxu0 %v3725
        %v3787 = vpop.f32.mrf.mxu0
        %v3788 = vadd.f32 0.0, %v3787
        %3789 = vmatmul.f32.gmra.mxu0 %v3727
        %v3790 = vpop.f32.mrf.mxu0
        %v3791 = vadd.f32 0.0, %v3790
        %3792 = vmatmul.f32.gmra.mxu0 %v3729
        %v3793 = vpop.f32.mrf.mxu0
        %v3794 = vadd.f32 0.0, %v3793
        %3795 = vmatmul.f32.gmra.mxu0 %v3731
        %v3796 = vpop.f32.mrf.mxu0
        %v3797 = vadd.f32 0.0, %v3796
        %3798 = vmatmul.f32.gmra.mxu0 %v3733
        %v3799 = vpop.f32.mrf.mxu0
        %v3800 = vadd.f32 0.0, %v3799
        %3801 = vmatmul.f32.gmra.mxu0 %v3735
        %v3802 = vpop.f32.mrf.mxu0
        %v3803 = vadd.f32 0.0, %v3802
        %3804 = vdwg.mxu0
        %v3805 = vadd.f32 %v3543, %v3758
        %v3806 = vadd.f32 %v3544, %v3761
        %v3807 = vadd.f32 %v3545, %v3764
        %v3808 = vadd.f32 %v3546, %v3767
        %v3809 = vadd.f32 %v3547, %v3770
        %v3810 = vadd.f32 %v3548, %v3773
        %v3811 = vadd.f32 %v3549, %v3776
        %v3812 = vadd.f32 %v3550, %v3779
        %v3813 = vadd.f32 %v3551, %v3782
        %v3814 = vadd.f32 %v3552, %v3785
        %v3815 = vadd.f32 %v3553, %v3788
        %v3816 = vadd.f32 %v3554, %v3791
        %v3817 = vadd.f32 %v3555, %v3794
        %v3818 = vadd.f32 %v3556, %v3797
        %v3819 = vadd.f32 %v3557, %v3800
        %v3820 = vadd.f32 %v3558, %v3803
        %v3821 = vld [vmem:[%s3392] sm:$0xe]
        %v3822 = vld [vmem:[%s3392 + $0x8] sm:$0xe]
        %v3823 = vld [vmem:[%s3392 + $0x10] sm:$0xe]
        %v3824 = vld [vmem:[%s3392 + $0x18] sm:$0xe]
        %v3825 = vld [vmem:[%s3392 + $0x20] sm:$0xe]
        %v3826 = vld [vmem:[%s3392 + $0x28] sm:$0xe]
        %v3827 = vld [vmem:[%s3392 + $0x30] sm:$0xe]
        %v3828 = vld [vmem:[%s3392 + $0x38] sm:$0xe]
        %v3829 = vld [vmem:[%s3392 + $0x50] sm:$0xe]
        %v3830 = vld [vmem:[%s3392 + $0x58] sm:$0xe]
        %v3831 = vld [vmem:[%s3392 + $0x60] sm:$0xe]
        %v3832 = vld [vmem:[%s3392 + $0x68] sm:$0xe]
        %v3833 = vld [vmem:[%s3392 + $0x70] sm:$0xe]
        %v3834 = vld [vmem:[%s3392 + $0x78] sm:$0xe]
        %v3835 = vld [vmem:[%s3392 + $0x80] sm:$0xe]
        %v3836 = vld [vmem:[%s3392 + $0x88] sm:$0xe]
        %v3837 = vunpack.c.l.bf16 %v3821
        %v3838 = vunpack.c.l.bf16 %v3822
        %v3839 = vunpack.c.l.bf16 %v3823
        %v3840 = vunpack.c.l.bf16 %v3824
        %v3841 = vunpack.c.l.bf16 %v3825
        %v3842 = vunpack.c.l.bf16 %v3826
        %v3843 = vunpack.c.l.bf16 %v3827
        %v3844 = vunpack.c.l.bf16 %v3828
        %v3845 = vunpack.c.l.bf16 %v3829
        %v3846 = vunpack.c.l.bf16 %v3830
        %v3847 = vunpack.c.l.bf16 %v3831
        %v3848 = vunpack.c.l.bf16 %v3832
        %v3849 = vunpack.c.l.bf16 %v3833
        %v3850 = vunpack.c.l.bf16 %v3834
        %v3851 = vunpack.c.l.bf16 %v3835
        %v3852 = vunpack.c.l.bf16 %v3836
        %v3869 = vrot.slane %v3837, 2
        %v3870 = vrot.slane %v3592, 2
        %v3871 = vsel %vm642, %v3869, %v3870
        %v3872 = vrot.slane %v3838, 2
        %v3873 = vrot.slane %v3594, 2
        %v3874 = vsel %vm642, %v3872, %v3873
        %v3875 = vrot.slane %v3839, 2
        %v3876 = vrot.slane %v3596, 2
        %v3877 = vsel %vm642, %v3875, %v3876
        %v3878 = vrot.slane %v3840, 2
        %v3879 = vrot.slane %v3598, 2
        %v3880 = vsel %vm642, %v3878, %v3879
        %v3881 = vrot.slane %v3841, 2
        %v3882 = vrot.slane %v3600, 2
        %v3883 = vsel %vm642, %v3881, %v3882
        %v3884 = vrot.slane %v3842, 2
        %v3885 = vrot.slane %v3602, 2
        %v3886 = vsel %vm642, %v3884, %v3885
        %v3887 = vrot.slane %v3843, 2
        %v3888 = vrot.slane %v3604, 2
        %v3889 = vsel %vm642, %v3887, %v3888
        %v3890 = vrot.slane %v3844, 2
        %v3891 = vrot.slane %v3606, 2
        %v3892 = vsel %vm642, %v3890, %v3891
        %v3893 = vrot.slane %v3845, 2
        %v3894 = vrot.slane %v3608, 2
        %v3895 = vsel %vm642, %v3893, %v3894
        %v3896 = vrot.slane %v3846, 2
        %v3897 = vrot.slane %v3610, 2
        %v3898 = vsel %vm642, %v3896, %v3897
        %v3899 = vrot.slane %v3847, 2
        %v3900 = vrot.slane %v3612, 2
        %v3901 = vsel %vm642, %v3899, %v3900
        %v3902 = vrot.slane %v3848, 2
        %v3903 = vrot.slane %v3614, 2
        %v3904 = vsel %vm642, %v3902, %v3903
        %v3905 = vrot.slane %v3849, 2
        %v3906 = vrot.slane %v3616, 2
        %v3907 = vsel %vm642, %v3905, %v3906
        %v3908 = vrot.slane %v3850, 2
        %v3909 = vrot.slane %v3618, 2
        %v3910 = vsel %vm642, %v3908, %v3909
        %v3911 = vrot.slane %v3851, 2
        %v3912 = vrot.slane %v3620, 2
        %v3913 = vsel %vm642, %v3911, %v3912
        %v3914 = vrot.slane %v3852, 2
        %v3915 = vrot.slane %v3622, 2
        %v3916 = vsel %vm642, %v3914, %v3915
        %s3917 = scalar_lea.vmem %s233, 68
        %v3918 = vld [vmem:[%s3917] sm:$0xf]
        %v3919 = vsel %vm392, %v3871, 0
        %v3921 = vsel %vm392, %v3874, 0
        %v3923 = vsel %vm392, %v3877, 0
        %v3925 = vsel %vm392, %v3880, 0
        %v3927 = vsel %vm392, %v3883, 0
        %v3929 = vsel %vm392, %v3886, 0
        %v3931 = vsel %vm392, %v3889, 0
        %v3933 = vsel %vm392, %v3892, 0
        %v3935 = vsel %vm392, %v3895, 0
        %v3937 = vsel %vm392, %v3898, 0
        %v3939 = vsel %vm392, %v3901, 0
        %v3941 = vsel %vm392, %v3904, 0
        %v3943 = vsel %vm392, %v3907, 0
        %v3945 = vsel %vm392, %v3910, 0
        %v3947 = vsel %vm392, %v3913, 0
        %v3949 = vsel %vm392, %v3916, 0
        %v3952 = vsel %vm425, %v3918, 0
        %3954 = vmatpush.msra.mxu0 0.0
        %3955 = vmatpush.msra.mxu0 0.0
        %3956 = vmatpush.msra.mxu0 0.0
        %3957 = vmatpush.msra.mxu0 0.0
        %3958 = vmatpush.msra.mxu0 0.0
        %3959 = vmatpush.msra.mxu0 0.0
        %3960 = vmatpush.msra.mxu0 0.0
        %3961 = vmatpush.msra.mxu0 0.0
        %3962 = vmatpush.msra.mxu0 0.0
        %3963 = vmatpush.msra.mxu0 0.0
        %3964 = vmatpush.msra.mxu0 0.0
        %3965 = vmatpush.msra.mxu0 0.0
        %3966 = vmatpush.msra.mxu0 0.0
        %3967 = vmatpush.msra.mxu0 0.0
        %3968 = vmatpush.msra.mxu0 0.0
        %3969 = vmatpush.msra.mxu0 %v3952
        %3970 = vmatmul.f32.gmra.mxu0 %v3919
        %v3971 = vpop.f32.mrf.mxu0
        %v3972 = vadd.f32 0.0, %v3971
        %3973 = vmatmul.f32.gmra.mxu0 %v3921
        %v3974 = vpop.f32.mrf.mxu0
        %v3975 = vadd.f32 0.0, %v3974
        %3976 = vmatmul.f32.gmra.mxu0 %v3923
        %v3977 = vpop.f32.mrf.mxu0
        %v3978 = vadd.f32 0.0, %v3977
        %3979 = vmatmul.f32.gmra.mxu0 %v3925
        %v3980 = vpop.f32.mrf.mxu0
        %v3981 = vadd.f32 0.0, %v3980
        %3982 = vmatmul.f32.gmra.mxu0 %v3927
        %v3983 = vpop.f32.mrf.mxu0
        %v3984 = vadd.f32 0.0, %v3983
        %3985 = vmatmul.f32.gmra.mxu0 %v3929
        %v3986 = vpop.f32.mrf.mxu0
        %v3987 = vadd.f32 0.0, %v3986
        %3988 = vmatmul.f32.gmra.mxu0 %v3931
        %v3989 = vpop.f32.mrf.mxu0
        %v3990 = vadd.f32 0.0, %v3989
        %3991 = vmatmul.f32.gmra.mxu0 %v3933
        %v3992 = vpop.f32.mrf.mxu0
        %v3993 = vadd.f32 0.0, %v3992
        %3994 = vmatmul.f32.gmra.mxu0 %v3935
        %v3995 = vpop.f32.mrf.mxu0
        %v3996 = vadd.f32 0.0, %v3995
        %3997 = vmatmul.f32.gmra.mxu0 %v3937
        %v3998 = vpop.f32.mrf.mxu0
        %v3999 = vadd.f32 0.0, %v3998
        %4000 = vmatmul.f32.gmra.mxu0 %v3939
        %v4001 = vpop.f32.mrf.mxu0
        %v4002 = vadd.f32 0.0, %v4001
        %4003 = vmatmul.f32.gmra.mxu0 %v3941
        %v4004 = vpop.f32.mrf.mxu0
        %v4005 = vadd.f32 0.0, %v4004
        %4006 = vmatmul.f32.gmra.mxu0 %v3943
        %v4007 = vpop.f32.mrf.mxu0
        %v4008 = vadd.f32 0.0, %v4007
        %4009 = vmatmul.f32.gmra.mxu0 %v3945
        %v4010 = vpop.f32.mrf.mxu0
        %v4011 = vadd.f32 0.0, %v4010
        %4012 = vmatmul.f32.gmra.mxu0 %v3947
        %v4013 = vpop.f32.mrf.mxu0
        %v4014 = vadd.f32 0.0, %v4013
        %4015 = vmatmul.f32.gmra.mxu0 %v3949
        %v4016 = vpop.f32.mrf.mxu0
        %v4017 = vadd.f32 0.0, %v4016
        %4018 = vdwg.mxu0
        %v4019 = vadd.f32 %v3805, %v3972
        %v4020 = vadd.f32 %v3806, %v3975
        %v4021 = vadd.f32 %v3807, %v3978
        %v4022 = vadd.f32 %v3808, %v3981
        %v4023 = vadd.f32 %v3809, %v3984
        %v4024 = vadd.f32 %v3810, %v3987
        %v4025 = vadd.f32 %v3811, %v3990
        %v4026 = vadd.f32 %v3812, %v3993
        %v4027 = vadd.f32 %v3813, %v3996
        %v4028 = vadd.f32 %v3814, %v3999
        %v4029 = vadd.f32 %v3815, %v4002
        %v4030 = vadd.f32 %v3816, %v4005
        %v4031 = vadd.f32 %v3817, %v4008
        %v4032 = vadd.f32 %v3818, %v4011
        %v4033 = vadd.f32 %v3819, %v4014
        %v4034 = vadd.f32 %v3820, %v4017
        %s4035 = sadd.s32 %s240, 2
        %s4036 = smul.u32 %s4035, 20
        %s4037 = smul.addr %s4036, 4
        %s4038 = scalar_lea.vmem %s227, %s4037
        %v4039 = vld [vmem:[%s4038] sm:$0xf]
        %v4040 = vld [vmem:[%s4038 + $0x8] sm:$0xf]
        %v4041 = vld [vmem:[%s4038 + $0x10] sm:$0xf]
        %v4042 = vld [vmem:[%s4038 + $0x18] sm:$0xf]
        %v4043 = vld [vmem:[%s4038 + $0x20] sm:$0xf]
        %v4044 = vld [vmem:[%s4038 + $0x28] sm:$0xf]
        %v4045 = vld [vmem:[%s4038 + $0x30] sm:$0xf]
        %v4046 = vld [vmem:[%s4038 + $0x38] sm:$0xf]
        %v4047 = vld [vmem:[%s4038 + $0x50] sm:$0xf]
        %v4048 = vld [vmem:[%s4038 + $0x58] sm:$0xf]
        %v4049 = vld [vmem:[%s4038 + $0x60] sm:$0xf]
        %v4050 = vld [vmem:[%s4038 + $0x68] sm:$0xf]
        %v4051 = vld [vmem:[%s4038 + $0x70] sm:$0xf]
        %v4052 = vld [vmem:[%s4038 + $0x78] sm:$0xf]
        %v4053 = vld [vmem:[%s4038 + $0x80] sm:$0xf]
        %v4054 = vld [vmem:[%s4038 + $0x88] sm:$0xf]
        %v4055 = vunpack.c.l.bf16 %v4039
        %v4056 = vunpack.c.l.bf16 %v4040
        %v4057 = vunpack.c.l.bf16 %v4041
        %v4058 = vunpack.c.l.bf16 %v4042
        %v4059 = vunpack.c.l.bf16 %v4043
        %v4060 = vunpack.c.l.bf16 %v4044
        %v4061 = vunpack.c.l.bf16 %v4045
        %v4062 = vunpack.c.l.bf16 %v4046
        %v4063 = vunpack.c.l.bf16 %v4047
        %v4064 = vunpack.c.l.bf16 %v4048
        %v4065 = vunpack.c.l.bf16 %v4049
        %v4066 = vunpack.c.l.bf16 %v4050
        %v4067 = vunpack.c.l.bf16 %v4051
        %v4068 = vunpack.c.l.bf16 %v4052
        %v4069 = vunpack.c.l.bf16 %v4053
        %v4070 = vunpack.c.l.bf16 %v4054
        %s4071 = scalar_lea.vmem %s233, 72
        %v4072 = vld [vmem:[%s4071] sm:$0xf]
        %v4074 = vsel %vm392, %v4055, 0
        %v4077 = vsel %vm392, %v4056, 0
        %v4080 = vsel %vm392, %v4057, 0
        %v4083 = vsel %vm392, %v4058, 0
        %v4086 = vsel %vm392, %v4059, 0
        %v4089 = vsel %vm392, %v4060, 0
        %v4092 = vsel %vm392, %v4061, 0
        %v4095 = vsel %vm392, %v4062, 0
        %v4098 = vsel %vm392, %v4063, 0
        %v4101 = vsel %vm392, %v4064, 0
        %v4104 = vsel %vm392, %v4065, 0
        %v4107 = vsel %vm392, %v4066, 0
        %v4110 = vsel %vm392, %v4067, 0
        %v4113 = vsel %vm392, %v4068, 0
        %v4116 = vsel %vm392, %v4069, 0
        %v4119 = vsel %vm392, %v4070, 0
        %v4122 = vsel %vm425, %v4072, 0
        %4124 = vmatpush.msra.mxu0 0.0
        %4125 = vmatpush.msra.mxu0 0.0
        %4126 = vmatpush.msra.mxu0 0.0
        %4127 = vmatpush.msra.mxu0 0.0
        %4128 = vmatpush.msra.mxu0 0.0
        %4129 = vmatpush.msra.mxu0 0.0
        %4130 = vmatpush.msra.mxu0 0.0
        %4131 = vmatpush.msra.mxu0 0.0
        %4132 = vmatpush.msra.mxu0 0.0
        %4133 = vmatpush.msra.mxu0 0.0
        %4134 = vmatpush.msra.mxu0 0.0
        %4135 = vmatpush.msra.mxu0 0.0
        %4136 = vmatpush.msra.mxu0 0.0
        %4137 = vmatpush.msra.mxu0 0.0
        %4138 = vmatpush.msra.mxu0 0.0
        %4139 = vmatpush.msra.mxu0 %v4122
        %4140 = vmatmul.f32.gmra.mxu0 %v4074
        %v4141 = vpop.f32.mrf.mxu0
        %v4142 = vadd.f32 0.0, %v4141
        %4143 = vmatmul.f32.gmra.mxu0 %v4077
        %v4144 = vpop.f32.mrf.mxu0
        %v4145 = vadd.f32 0.0, %v4144
        %4146 = vmatmul.f32.gmra.mxu0 %v4080
        %v4147 = vpop.f32.mrf.mxu0
        %v4148 = vadd.f32 0.0, %v4147
        %4149 = vmatmul.f32.gmra.mxu0 %v4083
        %v4150 = vpop.f32.mrf.mxu0
        %v4151 = vadd.f32 0.0, %v4150
        %4152 = vmatmul.f32.gmra.mxu0 %v4086
        %v4153 = vpop.f32.mrf.mxu0
        %v4154 = vadd.f32 0.0, %v4153
        %4155 = vmatmul.f32.gmra.mxu0 %v4089
        %v4156 = vpop.f32.mrf.mxu0
        %v4157 = vadd.f32 0.0, %v4156
        %4158 = vmatmul.f32.gmra.mxu0 %v4092
        %v4159 = vpop.f32.mrf.mxu0
        %v4160 = vadd.f32 0.0, %v4159
        %4161 = vmatmul.f32.gmra.mxu0 %v4095
        %v4162 = vpop.f32.mrf.mxu0
        %v4163 = vadd.f32 0.0, %v4162
        %4164 = vmatmul.f32.gmra.mxu0 %v4098
        %v4165 = vpop.f32.mrf.mxu0
        %v4166 = vadd.f32 0.0, %v4165
        %4167 = vmatmul.f32.gmra.mxu0 %v4101
        %v4168 = vpop.f32.mrf.mxu0
        %v4169 = vadd.f32 0.0, %v4168
        %4170 = vmatmul.f32.gmra.mxu0 %v4104
        %v4171 = vpop.f32.mrf.mxu0
        %v4172 = vadd.f32 0.0, %v4171
        %4173 = vmatmul.f32.gmra.mxu0 %v4107
        %v4174 = vpop.f32.mrf.mxu0
        %v4175 = vadd.f32 0.0, %v4174
        %4176 = vmatmul.f32.gmra.mxu0 %v4110
        %v4177 = vpop.f32.mrf.mxu0
        %v4178 = vadd.f32 0.0, %v4177
        %4179 = vmatmul.f32.gmra.mxu0 %v4113
        %v4180 = vpop.f32.mrf.mxu0
        %v4181 = vadd.f32 0.0, %v4180
        %4182 = vmatmul.f32.gmra.mxu0 %v4116
        %v4183 = vpop.f32.mrf.mxu0
        %v4184 = vadd.f32 0.0, %v4183
        %4185 = vmatmul.f32.gmra.mxu0 %v4119
        %v4186 = vpop.f32.mrf.mxu0
        %v4187 = vadd.f32 0.0, %v4186
        %4188 = vdwg.mxu0
        %v4189 = vadd.f32 %v4019, %v4142
        %v4190 = vadd.f32 %v4020, %v4145
        %v4191 = vadd.f32 %v4021, %v4148
        %v4192 = vadd.f32 %v4022, %v4151
        %v4193 = vadd.f32 %v4023, %v4154
        %v4194 = vadd.f32 %v4024, %v4157
        %v4195 = vadd.f32 %v4025, %v4160
        %v4196 = vadd.f32 %v4026, %v4163
        %v4197 = vadd.f32 %v4027, %v4166
        %v4198 = vadd.f32 %v4028, %v4169
        %v4199 = vadd.f32 %v4029, %v4172
        %v4200 = vadd.f32 %v4030, %v4175
        %v4201 = vadd.f32 %v4031, %v4178
        %v4202 = vadd.f32 %v4032, %v4181
        %v4203 = vadd.f32 %v4033, %v4184
        %v4204 = vadd.f32 %v4034, %v4187
        %v4205 = vld [vmem:[%s4038] sm:$0xf]
        %v4206 = vld [vmem:[%s4038 + $0x4] sm:$0x1]
        %v4207 = vld [vmem:[%s4038 + $0x8] sm:$0xf]
        %v4208 = vld [vmem:[%s4038 + $0xc] sm:$0x1]
        %v4209 = vld [vmem:[%s4038 + $0x10] sm:$0xf]
        %v4210 = vld [vmem:[%s4038 + $0x14] sm:$0x1]
        %v4211 = vld [vmem:[%s4038 + $0x18] sm:$0xf]
        %v4212 = vld [vmem:[%s4038 + $0x1c] sm:$0x1]
        %v4213 = vld [vmem:[%s4038 + $0x20] sm:$0xf]
        %v4214 = vld [vmem:[%s4038 + $0x24] sm:$0x1]
        %v4215 = vld [vmem:[%s4038 + $0x28] sm:$0xf]
        %v4216 = vld [vmem:[%s4038 + $0x2c] sm:$0x1]
        %v4217 = vld [vmem:[%s4038 + $0x30] sm:$0xf]
        %v4218 = vld [vmem:[%s4038 + $0x34] sm:$0x1]
        %v4219 = vld [vmem:[%s4038 + $0x38] sm:$0xf]
        %v4220 = vld [vmem:[%s4038 + $0x3c] sm:$0x1]
        %v4221 = vld [vmem:[%s4038 + $0x50] sm:$0xf]
        %v4222 = vld [vmem:[%s4038 + $0x54] sm:$0x1]
        %v4223 = vld [vmem:[%s4038 + $0x58] sm:$0xf]
        %v4224 = vld [vmem:[%s4038 + $0x5c] sm:$0x1]
        %v4225 = vld [vmem:[%s4038 + $0x60] sm:$0xf]
        %v4226 = vld [vmem:[%s4038 + $0x64] sm:$0x1]
        %v4227 = vld [vmem:[%s4038 + $0x68] sm:$0xf]
        %v4228 = vld [vmem:[%s4038 + $0x6c] sm:$0x1]
        %v4229 = vld [vmem:[%s4038 + $0x70] sm:$0xf]
        %v4230 = vld [vmem:[%s4038 + $0x74] sm:$0x1]
        %v4231 = vld [vmem:[%s4038 + $0x78] sm:$0xf]
        %v4232 = vld [vmem:[%s4038 + $0x7c] sm:$0x1]
        %v4233 = vld [vmem:[%s4038 + $0x80] sm:$0xf]
        %v4234 = vld [vmem:[%s4038 + $0x84] sm:$0x1]
        %v4235 = vld [vmem:[%s4038 + $0x88] sm:$0xf]
        %v4236 = vld [vmem:[%s4038 + $0x8c] sm:$0x1]
        %v4237 = vunpack.c.l.bf16 %v4205
        %v4238 = vunpack.c.l.bf16 %v4206
        %v4239 = vunpack.c.l.bf16 %v4207
        %v4240 = vunpack.c.l.bf16 %v4208
        %v4241 = vunpack.c.l.bf16 %v4209
        %v4242 = vunpack.c.l.bf16 %v4210
        %v4243 = vunpack.c.l.bf16 %v4211
        %v4244 = vunpack.c.l.bf16 %v4212
        %v4245 = vunpack.c.l.bf16 %v4213
        %v4246 = vunpack.c.l.bf16 %v4214
        %v4247 = vunpack.c.l.bf16 %v4215
        %v4248 = vunpack.c.l.bf16 %v4216
        %v4249 = vunpack.c.l.bf16 %v4217
        %v4250 = vunpack.c.l.bf16 %v4218
        %v4251 = vunpack.c.l.bf16 %v4219
        %v4252 = vunpack.c.l.bf16 %v4220
        %v4253 = vunpack.c.l.bf16 %v4221
        %v4254 = vunpack.c.l.bf16 %v4222
        %v4255 = vunpack.c.l.bf16 %v4223
        %v4256 = vunpack.c.l.bf16 %v4224
        %v4257 = vunpack.c.l.bf16 %v4225
        %v4258 = vunpack.c.l.bf16 %v4226
        %v4259 = vunpack.c.l.bf16 %v4227
        %v4260 = vunpack.c.l.bf16 %v4228
        %v4261 = vunpack.c.l.bf16 %v4229
        %v4262 = vunpack.c.l.bf16 %v4230
        %v4263 = vunpack.c.l.bf16 %v4231
        %v4264 = vunpack.c.l.bf16 %v4232
        %v4265 = vunpack.c.l.bf16 %v4233
        %v4266 = vunpack.c.l.bf16 %v4234
        %v4267 = vunpack.c.l.bf16 %v4235
        %v4268 = vunpack.c.l.bf16 %v4236
        %v4301 = vrot.slane %v4237, 1
        %v4302 = vrot.slane %v4238, 1
        %v4303 = vsel %vm341, %v4301, %v4302
        %v4304 = vrot.slane %v4239, 1
        %v4305 = vrot.slane %v4240, 1
        %v4306 = vsel %vm341, %v4304, %v4305
        %v4307 = vrot.slane %v4241, 1
        %v4308 = vrot.slane %v4242, 1
        %v4309 = vsel %vm341, %v4307, %v4308
        %v4310 = vrot.slane %v4243, 1
        %v4311 = vrot.slane %v4244, 1
        %v4312 = vsel %vm341, %v4310, %v4311
        %v4313 = vrot.slane %v4245, 1
        %v4314 = vrot.slane %v4246, 1
        %v4315 = vsel %vm341, %v4313, %v4314
        %v4316 = vrot.slane %v4247, 1
        %v4317 = vrot.slane %v4248, 1
        %v4318 = vsel %vm341, %v4316, %v4317
        %v4319 = vrot.slane %v4249, 1
        %v4320 = vrot.slane %v4250, 1
        %v4321 = vsel %vm341, %v4319, %v4320
        %v4322 = vrot.slane %v4251, 1
        %v4323 = vrot.slane %v4252, 1
        %v4324 = vsel %vm341, %v4322, %v4323
        %v4325 = vrot.slane %v4253, 1
        %v4326 = vrot.slane %v4254, 1
        %v4327 = vsel %vm341, %v4325, %v4326
        %v4328 = vrot.slane %v4255, 1
        %v4329 = vrot.slane %v4256, 1
        %v4330 = vsel %vm341, %v4328, %v4329
        %v4331 = vrot.slane %v4257, 1
        %v4332 = vrot.slane %v4258, 1
        %v4333 = vsel %vm341, %v4331, %v4332
        %v4334 = vrot.slane %v4259, 1
        %v4335 = vrot.slane %v4260, 1
        %v4336 = vsel %vm341, %v4334, %v4335
        %v4337 = vrot.slane %v4261, 1
        %v4338 = vrot.slane %v4262, 1
        %v4339 = vsel %vm341, %v4337, %v4338
        %v4340 = vrot.slane %v4263, 1
        %v4341 = vrot.slane %v4264, 1
        %v4342 = vsel %vm341, %v4340, %v4341
        %v4343 = vrot.slane %v4265, 1
        %v4344 = vrot.slane %v4266, 1
        %v4345 = vsel %vm341, %v4343, %v4344
        %v4346 = vrot.slane %v4267, 1
        %v4347 = vrot.slane %v4268, 1
        %v4348 = vsel %vm341, %v4346, %v4347
        %s4349 = scalar_lea.vmem %s233, 76
        %v4350 = vld [vmem:[%s4349] sm:$0xf]
        %v4351 = vsel %vm392, %v4303, 0
        %v4353 = vsel %vm392, %v4306, 0
        %v4355 = vsel %vm392, %v4309, 0
        %v4357 = vsel %vm392, %v4312, 0
        %v4359 = vsel %vm392, %v4315, 0
        %v4361 = vsel %vm392, %v4318, 0
        %v4363 = vsel %vm392, %v4321, 0
        %v4365 = vsel %vm392, %v4324, 0
        %v4367 = vsel %vm392, %v4327, 0
        %v4369 = vsel %vm392, %v4330, 0
        %v4371 = vsel %vm392, %v4333, 0
        %v4373 = vsel %vm392, %v4336, 0
        %v4375 = vsel %vm392, %v4339, 0
        %v4377 = vsel %vm392, %v4342, 0
        %v4379 = vsel %vm392, %v4345, 0
        %v4381 = vsel %vm392, %v4348, 0
        %v4384 = vsel %vm425, %v4350, 0
        %4386 = vmatpush.msra.mxu0 0.0
        %4387 = vmatpush.msra.mxu0 0.0
        %4388 = vmatpush.msra.mxu0 0.0
        %4389 = vmatpush.msra.mxu0 0.0
        %4390 = vmatpush.msra.mxu0 0.0
        %4391 = vmatpush.msra.mxu0 0.0
        %4392 = vmatpush.msra.mxu0 0.0
        %4393 = vmatpush.msra.mxu0 0.0
        %4394 = vmatpush.msra.mxu0 0.0
        %4395 = vmatpush.msra.mxu0 0.0
        %4396 = vmatpush.msra.mxu0 0.0
        %4397 = vmatpush.msra.mxu0 0.0
        %4398 = vmatpush.msra.mxu0 0.0
        %4399 = vmatpush.msra.mxu0 0.0
        %4400 = vmatpush.msra.mxu0 0.0
        %4401 = vmatpush.msra.mxu0 %v4384
        %4402 = vmatmul.f32.gmra.mxu0 %v4351
        %v4403 = vpop.f32.mrf.mxu0
        %v4404 = vadd.f32 0.0, %v4403
        %4405 = vmatmul.f32.gmra.mxu0 %v4353
        %v4406 = vpop.f32.mrf.mxu0
        %v4407 = vadd.f32 0.0, %v4406
        %4408 = vmatmul.f32.gmra.mxu0 %v4355
        %v4409 = vpop.f32.mrf.mxu0
        %v4410 = vadd.f32 0.0, %v4409
        %4411 = vmatmul.f32.gmra.mxu0 %v4357
        %v4412 = vpop.f32.mrf.mxu0
        %v4413 = vadd.f32 0.0, %v4412
        %4414 = vmatmul.f32.gmra.mxu0 %v4359
        %v4415 = vpop.f32.mrf.mxu0
        %v4416 = vadd.f32 0.0, %v4415
        %4417 = vmatmul.f32.gmra.mxu0 %v4361
        %v4418 = vpop.f32.mrf.mxu0
        %v4419 = vadd.f32 0.0, %v4418
        %4420 = vmatmul.f32.gmra.mxu0 %v4363
        %v4421 = vpop.f32.mrf.mxu0
        %v4422 = vadd.f32 0.0, %v4421
        %4423 = vmatmul.f32.gmra.mxu0 %v4365
        %v4424 = vpop.f32.mrf.mxu0
        %v4425 = vadd.f32 0.0, %v4424
        %4426 = vmatmul.f32.gmra.mxu0 %v4367
        %v4427 = vpop.f32.mrf.mxu0
        %v4428 = vadd.f32 0.0, %v4427
        %4429 = vmatmul.f32.gmra.mxu0 %v4369
        %v4430 = vpop.f32.mrf.mxu0
        %v4431 = vadd.f32 0.0, %v4430
        %4432 = vmatmul.f32.gmra.mxu0 %v4371
        %v4433 = vpop.f32.mrf.mxu0
        %v4434 = vadd.f32 0.0, %v4433
        %4435 = vmatmul.f32.gmra.mxu0 %v4373
        %v4436 = vpop.f32.mrf.mxu0
        %v4437 = vadd.f32 0.0, %v4436
        %4438 = vmatmul.f32.gmra.mxu0 %v4375
        %v4439 = vpop.f32.mrf.mxu0
        %v4440 = vadd.f32 0.0, %v4439
        %4441 = vmatmul.f32.gmra.mxu0 %v4377
        %v4442 = vpop.f32.mrf.mxu0
        %v4443 = vadd.f32 0.0, %v4442
        %4444 = vmatmul.f32.gmra.mxu0 %v4379
        %v4445 = vpop.f32.mrf.mxu0
        %v4446 = vadd.f32 0.0, %v4445
        %4447 = vmatmul.f32.gmra.mxu0 %v4381
        %v4448 = vpop.f32.mrf.mxu0
        %v4449 = vadd.f32 0.0, %v4448
        %4450 = vdwg.mxu0
        %v4451 = vadd.f32 %v4189, %v4404
        %v4452 = vadd.f32 %v4190, %v4407
        %v4453 = vadd.f32 %v4191, %v4410
        %v4454 = vadd.f32 %v4192, %v4413
        %v4455 = vadd.f32 %v4193, %v4416
        %v4456 = vadd.f32 %v4194, %v4419
        %v4457 = vadd.f32 %v4195, %v4422
        %v4458 = vadd.f32 %v4196, %v4425
        %v4459 = vadd.f32 %v4197, %v4428
        %v4460 = vadd.f32 %v4198, %v4431
        %v4461 = vadd.f32 %v4199, %v4434
        %v4462 = vadd.f32 %v4200, %v4437
        %v4463 = vadd.f32 %v4201, %v4440
        %v4464 = vadd.f32 %v4202, %v4443
        %v4465 = vadd.f32 %v4203, %v4446
        %v4466 = vadd.f32 %v4204, %v4449
        %v4467 = vld [vmem:[%s4038] sm:$0xe]
        %v4468 = vld [vmem:[%s4038 + $0x8] sm:$0xe]
        %v4469 = vld [vmem:[%s4038 + $0x10] sm:$0xe]
        %v4470 = vld [vmem:[%s4038 + $0x18] sm:$0xe]
        %v4471 = vld [vmem:[%s4038 + $0x20] sm:$0xe]
        %v4472 = vld [vmem:[%s4038 + $0x28] sm:$0xe]
        %v4473 = vld [vmem:[%s4038 + $0x30] sm:$0xe]
        %v4474 = vld [vmem:[%s4038 + $0x38] sm:$0xe]
        %v4475 = vld [vmem:[%s4038 + $0x50] sm:$0xe]
        %v4476 = vld [vmem:[%s4038 + $0x58] sm:$0xe]
        %v4477 = vld [vmem:[%s4038 + $0x60] sm:$0xe]
        %v4478 = vld [vmem:[%s4038 + $0x68] sm:$0xe]
        %v4479 = vld [vmem:[%s4038 + $0x70] sm:$0xe]
        %v4480 = vld [vmem:[%s4038 + $0x78] sm:$0xe]
        %v4481 = vld [vmem:[%s4038 + $0x80] sm:$0xe]
        %v4482 = vld [vmem:[%s4038 + $0x88] sm:$0xe]
        %v4483 = vunpack.c.l.bf16 %v4467
        %v4484 = vunpack.c.l.bf16 %v4468
        %v4485 = vunpack.c.l.bf16 %v4469
        %v4486 = vunpack.c.l.bf16 %v4470
        %v4487 = vunpack.c.l.bf16 %v4471
        %v4488 = vunpack.c.l.bf16 %v4472
        %v4489 = vunpack.c.l.bf16 %v4473
        %v4490 = vunpack.c.l.bf16 %v4474
        %v4491 = vunpack.c.l.bf16 %v4475
        %v4492 = vunpack.c.l.bf16 %v4476
        %v4493 = vunpack.c.l.bf16 %v4477
        %v4494 = vunpack.c.l.bf16 %v4478
        %v4495 = vunpack.c.l.bf16 %v4479
        %v4496 = vunpack.c.l.bf16 %v4480
        %v4497 = vunpack.c.l.bf16 %v4481
        %v4498 = vunpack.c.l.bf16 %v4482
        %v4515 = vrot.slane %v4483, 2
        %v4516 = vrot.slane %v4238, 2
        %v4517 = vsel %vm642, %v4515, %v4516
        %v4518 = vrot.slane %v4484, 2
        %v4519 = vrot.slane %v4240, 2
        %v4520 = vsel %vm642, %v4518, %v4519
        %v4521 = vrot.slane %v4485, 2
        %v4522 = vrot.slane %v4242, 2
        %v4523 = vsel %vm642, %v4521, %v4522
        %v4524 = vrot.slane %v4486, 2
        %v4525 = vrot.slane %v4244, 2
        %v4526 = vsel %vm642, %v4524, %v4525
        %v4527 = vrot.slane %v4487, 2
        %v4528 = vrot.slane %v4246, 2
        %v4529 = vsel %vm642, %v4527, %v4528
        %v4530 = vrot.slane %v4488, 2
        %v4531 = vrot.slane %v4248, 2
        %v4532 = vsel %vm642, %v4530, %v4531
        %v4533 = vrot.slane %v4489, 2
        %v4534 = vrot.slane %v4250, 2
        %v4535 = vsel %vm642, %v4533, %v4534
        %v4536 = vrot.slane %v4490, 2
        %v4537 = vrot.slane %v4252, 2
        %v4538 = vsel %vm642, %v4536, %v4537
        %v4539 = vrot.slane %v4491, 2
        %v4540 = vrot.slane %v4254, 2
        %v4541 = vsel %vm642, %v4539, %v4540
        %v4542 = vrot.slane %v4492, 2
        %v4543 = vrot.slane %v4256, 2
        %v4544 = vsel %vm642, %v4542, %v4543
        %v4545 = vrot.slane %v4493, 2
        %v4546 = vrot.slane %v4258, 2
        %v4547 = vsel %vm642, %v4545, %v4546
        %v4548 = vrot.slane %v4494, 2
        %v4549 = vrot.slane %v4260, 2
        %v4550 = vsel %vm642, %v4548, %v4549
        %v4551 = vrot.slane %v4495, 2
        %v4552 = vrot.slane %v4262, 2
        %v4553 = vsel %vm642, %v4551, %v4552
        %v4554 = vrot.slane %v4496, 2
        %v4555 = vrot.slane %v4264, 2
        %v4556 = vsel %vm642, %v4554, %v4555
        %v4557 = vrot.slane %v4497, 2
        %v4558 = vrot.slane %v4266, 2
        %v4559 = vsel %vm642, %v4557, %v4558
        %v4560 = vrot.slane %v4498, 2
        %v4561 = vrot.slane %v4268, 2
        %v4562 = vsel %vm642, %v4560, %v4561
        %s4563 = scalar_lea.vmem %s233, 80
        %v4564 = vld [vmem:[%s4563] sm:$0xf]
        %v4565 = vsel %vm392, %v4517, 0
        %v4567 = vsel %vm392, %v4520, 0
        %v4569 = vsel %vm392, %v4523, 0
        %v4571 = vsel %vm392, %v4526, 0
        %v4573 = vsel %vm392, %v4529, 0
        %v4575 = vsel %vm392, %v4532, 0
        %v4577 = vsel %vm392, %v4535, 0
        %v4579 = vsel %vm392, %v4538, 0
        %v4581 = vsel %vm392, %v4541, 0
        %v4583 = vsel %vm392, %v4544, 0
        %v4585 = vsel %vm392, %v4547, 0
        %v4587 = vsel %vm392, %v4550, 0
        %v4589 = vsel %vm392, %v4553, 0
        %v4591 = vsel %vm392, %v4556, 0
        %v4593 = vsel %vm392, %v4559, 0
        %v4595 = vsel %vm392, %v4562, 0
        %v4598 = vsel %vm425, %v4564, 0
        %4600 = vmatpush.msra.mxu0 0.0
        %4601 = vmatpush.msra.mxu0 0.0
        %4602 = vmatpush.msra.mxu0 0.0
        %4603 = vmatpush.msra.mxu0 0.0
        %4604 = vmatpush.msra.mxu0 0.0
        %4605 = vmatpush.msra.mxu0 0.0
        %4606 = vmatpush.msra.mxu0 0.0
        %4607 = vmatpush.msra.mxu0 0.0
        %4608 = vmatpush.msra.mxu0 0.0
        %4609 = vmatpush.msra.mxu0 0.0
        %4610 = vmatpush.msra.mxu0 0.0
        %4611 = vmatpush.msra.mxu0 0.0
        %4612 = vmatpush.msra.mxu0 0.0
        %4613 = vmatpush.msra.mxu0 0.0
        %4614 = vmatpush.msra.mxu0 0.0
        %4615 = vmatpush.msra.mxu0 %v4598
        %4616 = vmatmul.f32.gmra.mxu0 %v4565
        %v4617 = vpop.f32.mrf.mxu0
        %v4618 = vadd.f32 0.0, %v4617
        %4619 = vmatmul.f32.gmra.mxu0 %v4567
        %v4620 = vpop.f32.mrf.mxu0
        %v4621 = vadd.f32 0.0, %v4620
        %4622 = vmatmul.f32.gmra.mxu0 %v4569
        %v4623 = vpop.f32.mrf.mxu0
        %v4624 = vadd.f32 0.0, %v4623
        %4625 = vmatmul.f32.gmra.mxu0 %v4571
        %v4626 = vpop.f32.mrf.mxu0
        %v4627 = vadd.f32 0.0, %v4626
        %4628 = vmatmul.f32.gmra.mxu0 %v4573
        %v4629 = vpop.f32.mrf.mxu0
        %v4630 = vadd.f32 0.0, %v4629
        %4631 = vmatmul.f32.gmra.mxu0 %v4575
        %v4632 = vpop.f32.mrf.mxu0
        %v4633 = vadd.f32 0.0, %v4632
        %4634 = vmatmul.f32.gmra.mxu0 %v4577
        %v4635 = vpop.f32.mrf.mxu0
        %v4636 = vadd.f32 0.0, %v4635
        %4637 = vmatmul.f32.gmra.mxu0 %v4579
        %v4638 = vpop.f32.mrf.mxu0
        %v4639 = vadd.f32 0.0, %v4638
        %4640 = vmatmul.f32.gmra.mxu0 %v4581
        %v4641 = vpop.f32.mrf.mxu0
        %v4642 = vadd.f32 0.0, %v4641
        %4643 = vmatmul.f32.gmra.mxu0 %v4583
        %v4644 = vpop.f32.mrf.mxu0
        %v4645 = vadd.f32 0.0, %v4644
        %4646 = vmatmul.f32.gmra.mxu0 %v4585
        %v4647 = vpop.f32.mrf.mxu0
        %v4648 = vadd.f32 0.0, %v4647
        %4649 = vmatmul.f32.gmra.mxu0 %v4587
        %v4650 = vpop.f32.mrf.mxu0
        %v4651 = vadd.f32 0.0, %v4650
        %4652 = vmatmul.f32.gmra.mxu0 %v4589
        %v4653 = vpop.f32.mrf.mxu0
        %v4654 = vadd.f32 0.0, %v4653
        %4655 = vmatmul.f32.gmra.mxu0 %v4591
        %v4656 = vpop.f32.mrf.mxu0
        %v4657 = vadd.f32 0.0, %v4656
        %4658 = vmatmul.f32.gmra.mxu0 %v4593
        %v4659 = vpop.f32.mrf.mxu0
        %v4660 = vadd.f32 0.0, %v4659
        %4661 = vmatmul.f32.gmra.mxu0 %v4595
        %v4662 = vpop.f32.mrf.mxu0
        %v4663 = vadd.f32 0.0, %v4662
        %4664 = vdwg.mxu0
        %v4665 = vadd.f32 %v4451, %v4618
        %v4666 = vadd.f32 %v4452, %v4621
        %v4667 = vadd.f32 %v4453, %v4624
        %v4668 = vadd.f32 %v4454, %v4627
        %v4669 = vadd.f32 %v4455, %v4630
        %v4670 = vadd.f32 %v4456, %v4633
        %v4671 = vadd.f32 %v4457, %v4636
        %v4672 = vadd.f32 %v4458, %v4639
        %v4673 = vadd.f32 %v4459, %v4642
        %v4674 = vadd.f32 %v4460, %v4645
        %v4675 = vadd.f32 %v4461, %v4648
        %v4676 = vadd.f32 %v4462, %v4651
        %v4677 = vadd.f32 %v4463, %v4654
        %v4678 = vadd.f32 %v4464, %v4657
        %v4679 = vadd.f32 %v4465, %v4660
        %v4680 = vadd.f32 %v4466, %v4663
        %s4681 = sadd.s32 2, %s4036
        %s4682 = smul.addr %s4681, 4
        %s4683 = scalar_lea.vmem %s227, %s4682
        %v4684 = vld [vmem:[%s4683] sm:$0xf]
        %v4685 = vld [vmem:[%s4683 + $0x8] sm:$0xf]
        %v4686 = vld [vmem:[%s4683 + $0x10] sm:$0xf]
        %v4687 = vld [vmem:[%s4683 + $0x18] sm:$0xf]
        %v4688 = vld [vmem:[%s4683 + $0x20] sm:$0xf]
        %v4689 = vld [vmem:[%s4683 + $0x28] sm:$0xf]
        %v4690 = vld [vmem:[%s4683 + $0x30] sm:$0xf]
        %v4691 = vld [vmem:[%s4683 + $0x38] sm:$0xf]
        %v4692 = vld [vmem:[%s4683 + $0x50] sm:$0xf]
        %v4693 = vld [vmem:[%s4683 + $0x58] sm:$0xf]
        %v4694 = vld [vmem:[%s4683 + $0x60] sm:$0xf]
        %v4695 = vld [vmem:[%s4683 + $0x68] sm:$0xf]
        %v4696 = vld [vmem:[%s4683 + $0x70] sm:$0xf]
        %v4697 = vld [vmem:[%s4683 + $0x78] sm:$0xf]
        %v4698 = vld [vmem:[%s4683 + $0x80] sm:$0xf]
        %v4699 = vld [vmem:[%s4683 + $0x88] sm:$0xf]
        %v4700 = vunpack.c.l.bf16 %v4684
        %v4701 = vunpack.c.l.bf16 %v4685
        %v4702 = vunpack.c.l.bf16 %v4686
        %v4703 = vunpack.c.l.bf16 %v4687
        %v4704 = vunpack.c.l.bf16 %v4688
        %v4705 = vunpack.c.l.bf16 %v4689
        %v4706 = vunpack.c.l.bf16 %v4690
        %v4707 = vunpack.c.l.bf16 %v4691
        %v4708 = vunpack.c.l.bf16 %v4692
        %v4709 = vunpack.c.l.bf16 %v4693
        %v4710 = vunpack.c.l.bf16 %v4694
        %v4711 = vunpack.c.l.bf16 %v4695
        %v4712 = vunpack.c.l.bf16 %v4696
        %v4713 = vunpack.c.l.bf16 %v4697
        %v4714 = vunpack.c.l.bf16 %v4698
        %v4715 = vunpack.c.l.bf16 %v4699
        %s4716 = scalar_lea.vmem %s233, 84
        %v4717 = vld [vmem:[%s4716] sm:$0xf]
        %v4719 = vsel %vm392, %v4700, 0
        %v4722 = vsel %vm392, %v4701, 0
        %v4725 = vsel %vm392, %v4702, 0
        %v4728 = vsel %vm392, %v4703, 0
        %v4731 = vsel %vm392, %v4704, 0
        %v4734 = vsel %vm392, %v4705, 0
        %v4737 = vsel %vm392, %v4706, 0
        %v4740 = vsel %vm392, %v4707, 0
        %v4743 = vsel %vm392, %v4708, 0
        %v4746 = vsel %vm392, %v4709, 0
        %v4749 = vsel %vm392, %v4710, 0
        %v4752 = vsel %vm392, %v4711, 0
        %v4755 = vsel %vm392, %v4712, 0
        %v4758 = vsel %vm392, %v4713, 0
        %v4761 = vsel %vm392, %v4714, 0
        %v4764 = vsel %vm392, %v4715, 0
        %v4767 = vsel %vm425, %v4717, 0
        %4769 = vmatpush.msra.mxu0 0.0
        %4770 = vmatpush.msra.mxu0 0.0
        %4771 = vmatpush.msra.mxu0 0.0
        %4772 = vmatpush.msra.mxu0 0.0
        %4773 = vmatpush.msra.mxu0 0.0
        %4774 = vmatpush.msra.mxu0 0.0
        %4775 = vmatpush.msra.mxu0 0.0
        %4776 = vmatpush.msra.mxu0 0.0
        %4777 = vmatpush.msra.mxu0 0.0
        %4778 = vmatpush.msra.mxu0 0.0
        %4779 = vmatpush.msra.mxu0 0.0
        %4780 = vmatpush.msra.mxu0 0.0
        %4781 = vmatpush.msra.mxu0 0.0
        %4782 = vmatpush.msra.mxu0 0.0
        %4783 = vmatpush.msra.mxu0 0.0
        %4784 = vmatpush.msra.mxu0 %v4767
        %4785 = vmatmul.f32.gmra.mxu0 %v4719
        %v4786 = vpop.f32.mrf.mxu0
        %v4787 = vadd.f32 0.0, %v4786
        %4788 = vmatmul.f32.gmra.mxu0 %v4722
        %v4789 = vpop.f32.mrf.mxu0
        %v4790 = vadd.f32 0.0, %v4789
        %4791 = vmatmul.f32.gmra.mxu0 %v4725
        %v4792 = vpop.f32.mrf.mxu0
        %v4793 = vadd.f32 0.0, %v4792
        %4794 = vmatmul.f32.gmra.mxu0 %v4728
        %v4795 = vpop.f32.mrf.mxu0
        %v4796 = vadd.f32 0.0, %v4795
        %4797 = vmatmul.f32.gmra.mxu0 %v4731
        %v4798 = vpop.f32.mrf.mxu0
        %v4799 = vadd.f32 0.0, %v4798
        %4800 = vmatmul.f32.gmra.mxu0 %v4734
        %v4801 = vpop.f32.mrf.mxu0
        %v4802 = vadd.f32 0.0, %v4801
        %4803 = vmatmul.f32.gmra.mxu0 %v4737
        %v4804 = vpop.f32.mrf.mxu0
        %v4805 = vadd.f32 0.0, %v4804
        %4806 = vmatmul.f32.gmra.mxu0 %v4740
        %v4807 = vpop.f32.mrf.mxu0
        %v4808 = vadd.f32 0.0, %v4807
        %4809 = vmatmul.f32.gmra.mxu0 %v4743
        %v4810 = vpop.f32.mrf.mxu0
        %v4811 = vadd.f32 0.0, %v4810
        %4812 = vmatmul.f32.gmra.mxu0 %v4746
        %v4813 = vpop.f32.mrf.mxu0
        %v4814 = vadd.f32 0.0, %v4813
        %4815 = vmatmul.f32.gmra.mxu0 %v4749
        %v4816 = vpop.f32.mrf.mxu0
        %v4817 = vadd.f32 0.0, %v4816
        %4818 = vmatmul.f32.gmra.mxu0 %v4752
        %v4819 = vpop.f32.mrf.mxu0
        %v4820 = vadd.f32 0.0, %v4819
        %4821 = vmatmul.f32.gmra.mxu0 %v4755
        %v4822 = vpop.f32.mrf.mxu0
        %v4823 = vadd.f32 0.0, %v4822
        %4824 = vmatmul.f32.gmra.mxu0 %v4758
        %v4825 = vpop.f32.mrf.mxu0
        %v4826 = vadd.f32 0.0, %v4825
        %4827 = vmatmul.f32.gmra.mxu0 %v4761
        %v4828 = vpop.f32.mrf.mxu0
        %v4829 = vadd.f32 0.0, %v4828
        %4830 = vmatmul.f32.gmra.mxu0 %v4764
        %v4831 = vpop.f32.mrf.mxu0
        %v4832 = vadd.f32 0.0, %v4831
        %4833 = vdwg.mxu0
        %v4834 = vadd.f32 %v4665, %v4787
        %v4835 = vadd.f32 %v4666, %v4790
        %v4836 = vadd.f32 %v4667, %v4793
        %v4837 = vadd.f32 %v4668, %v4796
        %v4838 = vadd.f32 %v4669, %v4799
        %v4839 = vadd.f32 %v4670, %v4802
        %v4840 = vadd.f32 %v4671, %v4805
        %v4841 = vadd.f32 %v4672, %v4808
        %v4842 = vadd.f32 %v4673, %v4811
        %v4843 = vadd.f32 %v4674, %v4814
        %v4844 = vadd.f32 %v4675, %v4817
        %v4845 = vadd.f32 %v4676, %v4820
        %v4846 = vadd.f32 %v4677, %v4823
        %v4847 = vadd.f32 %v4678, %v4826
        %v4848 = vadd.f32 %v4679, %v4829
        %v4849 = vadd.f32 %v4680, %v4832
        %v4850 = vld [vmem:[%s4683] sm:$0xf]
        %v4851 = vld [vmem:[%s4683 + $0x4] sm:$0x1]
        %v4852 = vld [vmem:[%s4683 + $0x8] sm:$0xf]
        %v4853 = vld [vmem:[%s4683 + $0xc] sm:$0x1]
        %v4854 = vld [vmem:[%s4683 + $0x10] sm:$0xf]
        %v4855 = vld [vmem:[%s4683 + $0x14] sm:$0x1]
        %v4856 = vld [vmem:[%s4683 + $0x18] sm:$0xf]
        %v4857 = vld [vmem:[%s4683 + $0x1c] sm:$0x1]
        %v4858 = vld [vmem:[%s4683 + $0x20] sm:$0xf]
        %v4859 = vld [vmem:[%s4683 + $0x24] sm:$0x1]
        %v4860 = vld [vmem:[%s4683 + $0x28] sm:$0xf]
        %v4861 = vld [vmem:[%s4683 + $0x2c] sm:$0x1]
        %v4862 = vld [vmem:[%s4683 + $0x30] sm:$0xf]
        %v4863 = vld [vmem:[%s4683 + $0x34] sm:$0x1]
        %v4864 = vld [vmem:[%s4683 + $0x38] sm:$0xf]
        %v4865 = vld [vmem:[%s4683 + $0x3c] sm:$0x1]
        %v4866 = vld [vmem:[%s4683 + $0x50] sm:$0xf]
        %v4867 = vld [vmem:[%s4683 + $0x54] sm:$0x1]
        %v4868 = vld [vmem:[%s4683 + $0x58] sm:$0xf]
        %v4869 = vld [vmem:[%s4683 + $0x5c] sm:$0x1]
        %v4870 = vld [vmem:[%s4683 + $0x60] sm:$0xf]
        %v4871 = vld [vmem:[%s4683 + $0x64] sm:$0x1]
        %v4872 = vld [vmem:[%s4683 + $0x68] sm:$0xf]
        %v4873 = vld [vmem:[%s4683 + $0x6c] sm:$0x1]
        %v4874 = vld [vmem:[%s4683 + $0x70] sm:$0xf]
        %v4875 = vld [vmem:[%s4683 + $0x74] sm:$0x1]
        %v4876 = vld [vmem:[%s4683 + $0x78] sm:$0xf]
        %v4877 = vld [vmem:[%s4683 + $0x7c] sm:$0x1]
        %v4878 = vld [vmem:[%s4683 + $0x80] sm:$0xf]
        %v4879 = vld [vmem:[%s4683 + $0x84] sm:$0x1]
        %v4880 = vld [vmem:[%s4683 + $0x88] sm:$0xf]
        %v4881 = vld [vmem:[%s4683 + $0x8c] sm:$0x1]
        %v4882 = vunpack.c.l.bf16 %v4850
        %v4883 = vunpack.c.l.bf16 %v4851
        %v4884 = vunpack.c.l.bf16 %v4852
        %v4885 = vunpack.c.l.bf16 %v4853
        %v4886 = vunpack.c.l.bf16 %v4854
        %v4887 = vunpack.c.l.bf16 %v4855
        %v4888 = vunpack.c.l.bf16 %v4856
        %v4889 = vunpack.c.l.bf16 %v4857
        %v4890 = vunpack.c.l.bf16 %v4858
        %v4891 = vunpack.c.l.bf16 %v4859
        %v4892 = vunpack.c.l.bf16 %v4860
        %v4893 = vunpack.c.l.bf16 %v4861
        %v4894 = vunpack.c.l.bf16 %v4862
        %v4895 = vunpack.c.l.bf16 %v4863
        %v4896 = vunpack.c.l.bf16 %v4864
        %v4897 = vunpack.c.l.bf16 %v4865
        %v4898 = vunpack.c.l.bf16 %v4866
        %v4899 = vunpack.c.l.bf16 %v4867
        %v4900 = vunpack.c.l.bf16 %v4868
        %v4901 = vunpack.c.l.bf16 %v4869
        %v4902 = vunpack.c.l.bf16 %v4870
        %v4903 = vunpack.c.l.bf16 %v4871
        %v4904 = vunpack.c.l.bf16 %v4872
        %v4905 = vunpack.c.l.bf16 %v4873
        %v4906 = vunpack.c.l.bf16 %v4874
        %v4907 = vunpack.c.l.bf16 %v4875
        %v4908 = vunpack.c.l.bf16 %v4876
        %v4909 = vunpack.c.l.bf16 %v4877
        %v4910 = vunpack.c.l.bf16 %v4878
        %v4911 = vunpack.c.l.bf16 %v4879
        %v4912 = vunpack.c.l.bf16 %v4880
        %v4913 = vunpack.c.l.bf16 %v4881
        %v4946 = vrot.slane %v4882, 1
        %v4947 = vrot.slane %v4883, 1
        %v4948 = vsel %vm341, %v4946, %v4947
        %v4949 = vrot.slane %v4884, 1
        %v4950 = vrot.slane %v4885, 1
        %v4951 = vsel %vm341, %v4949, %v4950
        %v4952 = vrot.slane %v4886, 1
        %v4953 = vrot.slane %v4887, 1
        %v4954 = vsel %vm341, %v4952, %v4953
        %v4955 = vrot.slane %v4888, 1
        %v4956 = vrot.slane %v4889, 1
        %v4957 = vsel %vm341, %v4955, %v4956
        %v4958 = vrot.slane %v4890, 1
        %v4959 = vrot.slane %v4891, 1
        %v4960 = vsel %vm341, %v4958, %v4959
        %v4961 = vrot.slane %v4892, 1
        %v4962 = vrot.slane %v4893, 1
        %v4963 = vsel %vm341, %v4961, %v4962
        %v4964 = vrot.slane %v4894, 1
        %v4965 = vrot.slane %v4895, 1
        %v4966 = vsel %vm341, %v4964, %v4965
        %v4967 = vrot.slane %v4896, 1
        %v4968 = vrot.slane %v4897, 1
        %v4969 = vsel %vm341, %v4967, %v4968
        %v4970 = vrot.slane %v4898, 1
        %v4971 = vrot.slane %v4899, 1
        %v4972 = vsel %vm341, %v4970, %v4971
        %v4973 = vrot.slane %v4900, 1
        %v4974 = vrot.slane %v4901, 1
        %v4975 = vsel %vm341, %v4973, %v4974
        %v4976 = vrot.slane %v4902, 1
        %v4977 = vrot.slane %v4903, 1
        %v4978 = vsel %vm341, %v4976, %v4977
        %v4979 = vrot.slane %v4904, 1
        %v4980 = vrot.slane %v4905, 1
        %v4981 = vsel %vm341, %v4979, %v4980
        %v4982 = vrot.slane %v4906, 1
        %v4983 = vrot.slane %v4907, 1
        %v4984 = vsel %vm341, %v4982, %v4983
        %v4985 = vrot.slane %v4908, 1
        %v4986 = vrot.slane %v4909, 1
        %v4987 = vsel %vm341, %v4985, %v4986
        %v4988 = vrot.slane %v4910, 1
        %v4989 = vrot.slane %v4911, 1
        %v4990 = vsel %vm341, %v4988, %v4989
        %v4991 = vrot.slane %v4912, 1
        %v4992 = vrot.slane %v4913, 1
        %v4993 = vsel %vm341, %v4991, %v4992
        %s4994 = scalar_lea.vmem %s233, 88
        %v4995 = vld [vmem:[%s4994] sm:$0xf]
        %v4996 = vsel %vm392, %v4948, 0
        %v4998 = vsel %vm392, %v4951, 0
        %v5000 = vsel %vm392, %v4954, 0
        %v5002 = vsel %vm392, %v4957, 0
        %v5004 = vsel %vm392, %v4960, 0
        %v5006 = vsel %vm392, %v4963, 0
        %v5008 = vsel %vm392, %v4966, 0
        %v5010 = vsel %vm392, %v4969, 0
        %v5012 = vsel %vm392, %v4972, 0
        %v5014 = vsel %vm392, %v4975, 0
        %v5016 = vsel %vm392, %v4978, 0
        %v5018 = vsel %vm392, %v4981, 0
        %v5020 = vsel %vm392, %v4984, 0
        %v5022 = vsel %vm392, %v4987, 0
        %v5024 = vsel %vm392, %v4990, 0
        %v5026 = vsel %vm392, %v4993, 0
        %v5029 = vsel %vm425, %v4995, 0
        %5031 = vmatpush.msra.mxu0 0.0
        %5032 = vmatpush.msra.mxu0 0.0
        %5033 = vmatpush.msra.mxu0 0.0
        %5034 = vmatpush.msra.mxu0 0.0
        %5035 = vmatpush.msra.mxu0 0.0
        %5036 = vmatpush.msra.mxu0 0.0
        %5037 = vmatpush.msra.mxu0 0.0
        %5038 = vmatpush.msra.mxu0 0.0
        %5039 = vmatpush.msra.mxu0 0.0
        %5040 = vmatpush.msra.mxu0 0.0
        %5041 = vmatpush.msra.mxu0 0.0
        %5042 = vmatpush.msra.mxu0 0.0
        %5043 = vmatpush.msra.mxu0 0.0
        %5044 = vmatpush.msra.mxu0 0.0
        %5045 = vmatpush.msra.mxu0 0.0
        %5046 = vmatpush.msra.mxu0 %v5029
        %5047 = vmatmul.f32.gmra.mxu0 %v4996
        %v5048 = vpop.f32.mrf.mxu0
        %v5049 = vadd.f32 0.0, %v5048
        %5050 = vmatmul.f32.gmra.mxu0 %v4998
        %v5051 = vpop.f32.mrf.mxu0
        %v5052 = vadd.f32 0.0, %v5051
        %5053 = vmatmul.f32.gmra.mxu0 %v5000
        %v5054 = vpop.f32.mrf.mxu0
        %v5055 = vadd.f32 0.0, %v5054
        %5056 = vmatmul.f32.gmra.mxu0 %v5002
        %v5057 = vpop.f32.mrf.mxu0
        %v5058 = vadd.f32 0.0, %v5057
        %5059 = vmatmul.f32.gmra.mxu0 %v5004
        %v5060 = vpop.f32.mrf.mxu0
        %v5061 = vadd.f32 0.0, %v5060
        %5062 = vmatmul.f32.gmra.mxu0 %v5006
        %v5063 = vpop.f32.mrf.mxu0
        %v5064 = vadd.f32 0.0, %v5063
        %5065 = vmatmul.f32.gmra.mxu0 %v5008
        %v5066 = vpop.f32.mrf.mxu0
        %v5067 = vadd.f32 0.0, %v5066
        %5068 = vmatmul.f32.gmra.mxu0 %v5010
        %v5069 = vpop.f32.mrf.mxu0
        %v5070 = vadd.f32 0.0, %v5069
        %5071 = vmatmul.f32.gmra.mxu0 %v5012
        %v5072 = vpop.f32.mrf.mxu0
        %v5073 = vadd.f32 0.0, %v5072
        %5074 = vmatmul.f32.gmra.mxu0 %v5014
        %v5075 = vpop.f32.mrf.mxu0
        %v5076 = vadd.f32 0.0, %v5075
        %5077 = vmatmul.f32.gmra.mxu0 %v5016
        %v5078 = vpop.f32.mrf.mxu0
        %v5079 = vadd.f32 0.0, %v5078
        %5080 = vmatmul.f32.gmra.mxu0 %v5018
        %v5081 = vpop.f32.mrf.mxu0
        %v5082 = vadd.f32 0.0, %v5081
        %5083 = vmatmul.f32.gmra.mxu0 %v5020
        %v5084 = vpop.f32.mrf.mxu0
        %v5085 = vadd.f32 0.0, %v5084
        %5086 = vmatmul.f32.gmra.mxu0 %v5022
        %v5087 = vpop.f32.mrf.mxu0
        %v5088 = vadd.f32 0.0, %v5087
        %5089 = vmatmul.f32.gmra.mxu0 %v5024
        %v5090 = vpop.f32.mrf.mxu0
        %v5091 = vadd.f32 0.0, %v5090
        %5092 = vmatmul.f32.gmra.mxu0 %v5026
        %v5093 = vpop.f32.mrf.mxu0
        %v5094 = vadd.f32 0.0, %v5093
        %5095 = vdwg.mxu0
        %v5096 = vadd.f32 %v4834, %v5049
        %v5097 = vadd.f32 %v4835, %v5052
        %v5098 = vadd.f32 %v4836, %v5055
        %v5099 = vadd.f32 %v4837, %v5058
        %v5100 = vadd.f32 %v4838, %v5061
        %v5101 = vadd.f32 %v4839, %v5064
        %v5102 = vadd.f32 %v4840, %v5067
        %v5103 = vadd.f32 %v4841, %v5070
        %v5104 = vadd.f32 %v4842, %v5073
        %v5105 = vadd.f32 %v4843, %v5076
        %v5106 = vadd.f32 %v4844, %v5079
        %v5107 = vadd.f32 %v4845, %v5082
        %v5108 = vadd.f32 %v4846, %v5085
        %v5109 = vadd.f32 %v4847, %v5088
        %v5110 = vadd.f32 %v4848, %v5091
        %v5111 = vadd.f32 %v4849, %v5094
        %v5112 = vld [vmem:[%s4683] sm:$0xe]
        %v5113 = vld [vmem:[%s4683 + $0x8] sm:$0xe]
        %v5114 = vld [vmem:[%s4683 + $0x10] sm:$0xe]
        %v5115 = vld [vmem:[%s4683 + $0x18] sm:$0xe]
        %v5116 = vld [vmem:[%s4683 + $0x20] sm:$0xe]
        %v5117 = vld [vmem:[%s4683 + $0x28] sm:$0xe]
        %v5118 = vld [vmem:[%s4683 + $0x30] sm:$0xe]
        %v5119 = vld [vmem:[%s4683 + $0x38] sm:$0xe]
        %v5120 = vld [vmem:[%s4683 + $0x50] sm:$0xe]
        %v5121 = vld [vmem:[%s4683 + $0x58] sm:$0xe]
        %v5122 = vld [vmem:[%s4683 + $0x60] sm:$0xe]
        %v5123 = vld [vmem:[%s4683 + $0x68] sm:$0xe]
        %v5124 = vld [vmem:[%s4683 + $0x70] sm:$0xe]
        %v5125 = vld [vmem:[%s4683 + $0x78] sm:$0xe]
        %v5126 = vld [vmem:[%s4683 + $0x80] sm:$0xe]
        %v5127 = vld [vmem:[%s4683 + $0x88] sm:$0xe]
        %v5128 = vunpack.c.l.bf16 %v5112
        %v5129 = vunpack.c.l.bf16 %v5113
        %v5130 = vunpack.c.l.bf16 %v5114
        %v5131 = vunpack.c.l.bf16 %v5115
        %v5132 = vunpack.c.l.bf16 %v5116
        %v5133 = vunpack.c.l.bf16 %v5117
        %v5134 = vunpack.c.l.bf16 %v5118
        %v5135 = vunpack.c.l.bf16 %v5119
        %v5136 = vunpack.c.l.bf16 %v5120
        %v5137 = vunpack.c.l.bf16 %v5121
        %v5138 = vunpack.c.l.bf16 %v5122
        %v5139 = vunpack.c.l.bf16 %v5123
        %v5140 = vunpack.c.l.bf16 %v5124
        %v5141 = vunpack.c.l.bf16 %v5125
        %v5142 = vunpack.c.l.bf16 %v5126
        %v5143 = vunpack.c.l.bf16 %v5127
        %v5160 = vrot.slane %v5128, 2
        %v5161 = vrot.slane %v4883, 2
        %v5162 = vsel %vm642, %v5160, %v5161
        %v5163 = vrot.slane %v5129, 2
        %v5164 = vrot.slane %v4885, 2
        %v5165 = vsel %vm642, %v5163, %v5164
        %v5166 = vrot.slane %v5130, 2
        %v5167 = vrot.slane %v4887, 2
        %v5168 = vsel %vm642, %v5166, %v5167
        %v5169 = vrot.slane %v5131, 2
        %v5170 = vrot.slane %v4889, 2
        %v5171 = vsel %vm642, %v5169, %v5170
        %v5172 = vrot.slane %v5132, 2
        %v5173 = vrot.slane %v4891, 2
        %v5174 = vsel %vm642, %v5172, %v5173
        %v5175 = vrot.slane %v5133, 2
        %v5176 = vrot.slane %v4893, 2
        %v5177 = vsel %vm642, %v5175, %v5176
        %v5178 = vrot.slane %v5134, 2
        %v5179 = vrot.slane %v4895, 2
        %v5180 = vsel %vm642, %v5178, %v5179
        %v5181 = vrot.slane %v5135, 2
        %v5182 = vrot.slane %v4897, 2
        %v5183 = vsel %vm642, %v5181, %v5182
        %v5184 = vrot.slane %v5136, 2
        %v5185 = vrot.slane %v4899, 2
        %v5186 = vsel %vm642, %v5184, %v5185
        %v5187 = vrot.slane %v5137, 2
        %v5188 = vrot.slane %v4901, 2
        %v5189 = vsel %vm642, %v5187, %v5188
        %v5190 = vrot.slane %v5138, 2
        %v5191 = vrot.slane %v4903, 2
        %v5192 = vsel %vm642, %v5190, %v5191
        %v5193 = vrot.slane %v5139, 2
        %v5194 = vrot.slane %v4905, 2
        %v5195 = vsel %vm642, %v5193, %v5194
        %v5196 = vrot.slane %v5140, 2
        %v5197 = vrot.slane %v4907, 2
        %v5198 = vsel %vm642, %v5196, %v5197
        %v5199 = vrot.slane %v5141, 2
        %v5200 = vrot.slane %v4909, 2
        %v5201 = vsel %vm642, %v5199, %v5200
        %v5202 = vrot.slane %v5142, 2
        %v5203 = vrot.slane %v4911, 2
        %v5204 = vsel %vm642, %v5202, %v5203
        %v5205 = vrot.slane %v5143, 2
        %v5206 = vrot.slane %v4913, 2
        %v5207 = vsel %vm642, %v5205, %v5206
        %s5208 = scalar_lea.vmem %s233, 92
        %v5209 = vld [vmem:[%s5208] sm:$0xf]
        %v5210 = vsel %vm392, %v5162, 0
        %v5212 = vsel %vm392, %v5165, 0
        %v5214 = vsel %vm392, %v5168, 0
        %v5216 = vsel %vm392, %v5171, 0
        %v5218 = vsel %vm392, %v5174, 0
        %v5220 = vsel %vm392, %v5177, 0
        %v5222 = vsel %vm392, %v5180, 0
        %v5224 = vsel %vm392, %v5183, 0
        %v5226 = vsel %vm392, %v5186, 0
        %v5228 = vsel %vm392, %v5189, 0
        %v5230 = vsel %vm392, %v5192, 0
        %v5232 = vsel %vm392, %v5195, 0
        %v5234 = vsel %vm392, %v5198, 0
        %v5236 = vsel %vm392, %v5201, 0
        %v5238 = vsel %vm392, %v5204, 0
        %v5240 = vsel %vm392, %v5207, 0
        %v5243 = vsel %vm425, %v5209, 0
        %5245 = vmatpush.msra.mxu0 0.0
        %5246 = vmatpush.msra.mxu0 0.0
        %5247 = vmatpush.msra.mxu0 0.0
        %5248 = vmatpush.msra.mxu0 0.0
        %5249 = vmatpush.msra.mxu0 0.0
        %5250 = vmatpush.msra.mxu0 0.0
        %5251 = vmatpush.msra.mxu0 0.0
        %5252 = vmatpush.msra.mxu0 0.0
        %5253 = vmatpush.msra.mxu0 0.0
        %5254 = vmatpush.msra.mxu0 0.0
        %5255 = vmatpush.msra.mxu0 0.0
        %5256 = vmatpush.msra.mxu0 0.0
        %5257 = vmatpush.msra.mxu0 0.0
        %5258 = vmatpush.msra.mxu0 0.0
        %5259 = vmatpush.msra.mxu0 0.0
        %5260 = vmatpush.msra.mxu0 %v5243
        %5261 = vmatmul.f32.gmra.mxu0 %v5210
        %v5262 = vpop.f32.mrf.mxu0
        %v5263 = vadd.f32 0.0, %v5262
        %5264 = vmatmul.f32.gmra.mxu0 %v5212
        %v5265 = vpop.f32.mrf.mxu0
        %v5266 = vadd.f32 0.0, %v5265
        %5267 = vmatmul.f32.gmra.mxu0 %v5214
        %v5268 = vpop.f32.mrf.mxu0
        %v5269 = vadd.f32 0.0, %v5268
        %5270 = vmatmul.f32.gmra.mxu0 %v5216
        %v5271 = vpop.f32.mrf.mxu0
        %v5272 = vadd.f32 0.0, %v5271
        %5273 = vmatmul.f32.gmra.mxu0 %v5218
        %v5274 = vpop.f32.mrf.mxu0
        %v5275 = vadd.f32 0.0, %v5274
        %5276 = vmatmul.f32.gmra.mxu0 %v5220
        %v5277 = vpop.f32.mrf.mxu0
        %v5278 = vadd.f32 0.0, %v5277
        %5279 = vmatmul.f32.gmra.mxu0 %v5222
        %v5280 = vpop.f32.mrf.mxu0
        %v5281 = vadd.f32 0.0, %v5280
        %5282 = vmatmul.f32.gmra.mxu0 %v5224
        %v5283 = vpop.f32.mrf.mxu0
        %v5284 = vadd.f32 0.0, %v5283
        %5285 = vmatmul.f32.gmra.mxu0 %v5226
        %v5286 = vpop.f32.mrf.mxu0
        %v5287 = vadd.f32 0.0, %v5286
        %5288 = vmatmul.f32.gmra.mxu0 %v5228
        %v5289 = vpop.f32.mrf.mxu0
        %v5290 = vadd.f32 0.0, %v5289
        %5291 = vmatmul.f32.gmra.mxu0 %v5230
        %v5292 = vpop.f32.mrf.mxu0
        %v5293 = vadd.f32 0.0, %v5292
        %5294 = vmatmul.f32.gmra.mxu0 %v5232
        %v5295 = vpop.f32.mrf.mxu0
        %v5296 = vadd.f32 0.0, %v5295
        %5297 = vmatmul.f32.gmra.mxu0 %v5234
        %v5298 = vpop.f32.mrf.mxu0
        %v5299 = vadd.f32 0.0, %v5298
        %5300 = vmatmul.f32.gmra.mxu0 %v5236
        %v5301 = vpop.f32.mrf.mxu0
        %v5302 = vadd.f32 0.0, %v5301
        %5303 = vmatmul.f32.gmra.mxu0 %v5238
        %v5304 = vpop.f32.mrf.mxu0
        %v5305 = vadd.f32 0.0, %v5304
        %5306 = vmatmul.f32.gmra.mxu0 %v5240
        %v5307 = vpop.f32.mrf.mxu0
        %v5308 = vadd.f32 0.0, %v5307
        %5309 = vdwg.mxu0
        %v5310 = vadd.f32 %v5096, %v5263
        %v5311 = vadd.f32 %v5097, %v5266
        %v5312 = vadd.f32 %v5098, %v5269
        %v5313 = vadd.f32 %v5099, %v5272
        %v5314 = vadd.f32 %v5100, %v5275
        %v5315 = vadd.f32 %v5101, %v5278
        %v5316 = vadd.f32 %v5102, %v5281
        %v5317 = vadd.f32 %v5103, %v5284
        %v5318 = vadd.f32 %v5104, %v5287
        %v5319 = vadd.f32 %v5105, %v5290
        %v5320 = vadd.f32 %v5106, %v5293
        %v5321 = vadd.f32 %v5107, %v5296
        %v5322 = vadd.f32 %v5108, %v5299
        %v5323 = vadd.f32 %v5109, %v5302
        %v5324 = vadd.f32 %v5110, %v5305
        %v5325 = vadd.f32 %v5111, %v5308
        %s5326 = sadd.s32 4, %s4036
        %s5327 = smul.addr %s5326, 4
        %s5328 = scalar_lea.vmem %s227, %s5327
        %v5329 = vld [vmem:[%s5328] sm:$0xf]
        %v5330 = vld [vmem:[%s5328 + $0x8] sm:$0xf]
        %v5331 = vld [vmem:[%s5328 + $0x10] sm:$0xf]
        %v5332 = vld [vmem:[%s5328 + $0x18] sm:$0xf]
        %v5333 = vld [vmem:[%s5328 + $0x20] sm:$0xf]
        %v5334 = vld [vmem:[%s5328 + $0x28] sm:$0xf]
        %v5335 = vld [vmem:[%s5328 + $0x30] sm:$0xf]
        %v5336 = vld [vmem:[%s5328 + $0x38] sm:$0xf]
        %v5337 = vld [vmem:[%s5328 + $0x50] sm:$0xf]
        %v5338 = vld [vmem:[%s5328 + $0x58] sm:$0xf]
        %v5339 = vld [vmem:[%s5328 + $0x60] sm:$0xf]
        %v5340 = vld [vmem:[%s5328 + $0x68] sm:$0xf]
        %v5341 = vld [vmem:[%s5328 + $0x70] sm:$0xf]
        %v5342 = vld [vmem:[%s5328 + $0x78] sm:$0xf]
        %v5343 = vld [vmem:[%s5328 + $0x80] sm:$0xf]
        %v5344 = vld [vmem:[%s5328 + $0x88] sm:$0xf]
        %v5345 = vunpack.c.l.bf16 %v5329
        %v5346 = vunpack.c.l.bf16 %v5330
        %v5347 = vunpack.c.l.bf16 %v5331
        %v5348 = vunpack.c.l.bf16 %v5332
        %v5349 = vunpack.c.l.bf16 %v5333
        %v5350 = vunpack.c.l.bf16 %v5334
        %v5351 = vunpack.c.l.bf16 %v5335
        %v5352 = vunpack.c.l.bf16 %v5336
        %v5353 = vunpack.c.l.bf16 %v5337
        %v5354 = vunpack.c.l.bf16 %v5338
        %v5355 = vunpack.c.l.bf16 %v5339
        %v5356 = vunpack.c.l.bf16 %v5340
        %v5357 = vunpack.c.l.bf16 %v5341
        %v5358 = vunpack.c.l.bf16 %v5342
        %v5359 = vunpack.c.l.bf16 %v5343
        %v5360 = vunpack.c.l.bf16 %v5344
        %s5361 = scalar_lea.vmem %s233, 96
        %v5362 = vld [vmem:[%s5361] sm:$0xf]
        %v5364 = vsel %vm392, %v5345, 0
        %v5367 = vsel %vm392, %v5346, 0
        %v5370 = vsel %vm392, %v5347, 0
        %v5373 = vsel %vm392, %v5348, 0
        %v5376 = vsel %vm392, %v5349, 0
        %v5379 = vsel %vm392, %v5350, 0
        %v5382 = vsel %vm392, %v5351, 0
        %v5385 = vsel %vm392, %v5352, 0
        %v5388 = vsel %vm392, %v5353, 0
        %v5391 = vsel %vm392, %v5354, 0
        %v5394 = vsel %vm392, %v5355, 0
        %v5397 = vsel %vm392, %v5356, 0
        %v5400 = vsel %vm392, %v5357, 0
        %v5403 = vsel %vm392, %v5358, 0
        %v5406 = vsel %vm392, %v5359, 0
        %v5409 = vsel %vm392, %v5360, 0
        %v5412 = vsel %vm425, %v5362, 0
        %5414 = vmatpush.msra.mxu0 0.0
        %5415 = vmatpush.msra.mxu0 0.0
        %5416 = vmatpush.msra.mxu0 0.0
        %5417 = vmatpush.msra.mxu0 0.0
        %5418 = vmatpush.msra.mxu0 0.0
        %5419 = vmatpush.msra.mxu0 0.0
        %5420 = vmatpush.msra.mxu0 0.0
        %5421 = vmatpush.msra.mxu0 0.0
        %5422 = vmatpush.msra.mxu0 0.0
        %5423 = vmatpush.msra.mxu0 0.0
        %5424 = vmatpush.msra.mxu0 0.0
        %5425 = vmatpush.msra.mxu0 0.0
        %5426 = vmatpush.msra.mxu0 0.0
        %5427 = vmatpush.msra.mxu0 0.0
        %5428 = vmatpush.msra.mxu0 0.0
        %5429 = vmatpush.msra.mxu0 %v5412
        %5430 = vmatmul.f32.gmra.mxu0 %v5364
        %v5431 = vpop.f32.mrf.mxu0
        %v5432 = vadd.f32 0.0, %v5431
        %5433 = vmatmul.f32.gmra.mxu0 %v5367
        %v5434 = vpop.f32.mrf.mxu0
        %v5435 = vadd.f32 0.0, %v5434
        %5436 = vmatmul.f32.gmra.mxu0 %v5370
        %v5437 = vpop.f32.mrf.mxu0
        %v5438 = vadd.f32 0.0, %v5437
        %5439 = vmatmul.f32.gmra.mxu0 %v5373
        %v5440 = vpop.f32.mrf.mxu0
        %v5441 = vadd.f32 0.0, %v5440
        %5442 = vmatmul.f32.gmra.mxu0 %v5376
        %v5443 = vpop.f32.mrf.mxu0
        %v5444 = vadd.f32 0.0, %v5443
        %5445 = vmatmul.f32.gmra.mxu0 %v5379
        %v5446 = vpop.f32.mrf.mxu0
        %v5447 = vadd.f32 0.0, %v5446
        %5448 = vmatmul.f32.gmra.mxu0 %v5382
        %v5449 = vpop.f32.mrf.mxu0
        %v5450 = vadd.f32 0.0, %v5449
        %5451 = vmatmul.f32.gmra.mxu0 %v5385
        %v5452 = vpop.f32.mrf.mxu0
        %v5453 = vadd.f32 0.0, %v5452
        %5454 = vmatmul.f32.gmra.mxu0 %v5388
        %v5455 = vpop.f32.mrf.mxu0
        %v5456 = vadd.f32 0.0, %v5455
        %5457 = vmatmul.f32.gmra.mxu0 %v5391
        %v5458 = vpop.f32.mrf.mxu0
        %v5459 = vadd.f32 0.0, %v5458
        %5460 = vmatmul.f32.gmra.mxu0 %v5394
        %v5461 = vpop.f32.mrf.mxu0
        %v5462 = vadd.f32 0.0, %v5461
        %5463 = vmatmul.f32.gmra.mxu0 %v5397
        %v5464 = vpop.f32.mrf.mxu0
        %v5465 = vadd.f32 0.0, %v5464
        %5466 = vmatmul.f32.gmra.mxu0 %v5400
        %v5467 = vpop.f32.mrf.mxu0
        %v5468 = vadd.f32 0.0, %v5467
        %5469 = vmatmul.f32.gmra.mxu0 %v5403
        %v5470 = vpop.f32.mrf.mxu0
        %v5471 = vadd.f32 0.0, %v5470
        %5472 = vmatmul.f32.gmra.mxu0 %v5406
        %v5473 = vpop.f32.mrf.mxu0
        %v5474 = vadd.f32 0.0, %v5473
        %5475 = vmatmul.f32.gmra.mxu0 %v5409
        %v5476 = vpop.f32.mrf.mxu0
        %v5477 = vadd.f32 0.0, %v5476
        %5478 = vdwg.mxu0
        %v5479 = vadd.f32 %v5310, %v5432
        %v5480 = vadd.f32 %v5311, %v5435
        %v5481 = vadd.f32 %v5312, %v5438
        %v5482 = vadd.f32 %v5313, %v5441
        %v5483 = vadd.f32 %v5314, %v5444
        %v5484 = vadd.f32 %v5315, %v5447
        %v5485 = vadd.f32 %v5316, %v5450
        %v5486 = vadd.f32 %v5317, %v5453
        %v5487 = vadd.f32 %v5318, %v5456
        %v5488 = vadd.f32 %v5319, %v5459
        %v5489 = vadd.f32 %v5320, %v5462
        %v5490 = vadd.f32 %v5321, %v5465
        %v5491 = vadd.f32 %v5322, %v5468
        %v5492 = vadd.f32 %v5323, %v5471
        %v5493 = vadd.f32 %v5324, %v5474
        %v5494 = vadd.f32 %v5325, %v5477
        %v5495 = vld [vmem:[%s5328] sm:$0xf]
        %v5496 = vld [vmem:[%s5328 + $0x4] sm:$0x1]
        %v5497 = vld [vmem:[%s5328 + $0x8] sm:$0xf]
        %v5498 = vld [vmem:[%s5328 + $0xc] sm:$0x1]
        %v5499 = vld [vmem:[%s5328 + $0x10] sm:$0xf]
        %v5500 = vld [vmem:[%s5328 + $0x14] sm:$0x1]
        %v5501 = vld [vmem:[%s5328 + $0x18] sm:$0xf]
        %v5502 = vld [vmem:[%s5328 + $0x1c] sm:$0x1]
        %v5503 = vld [vmem:[%s5328 + $0x20] sm:$0xf]
        %v5504 = vld [vmem:[%s5328 + $0x24] sm:$0x1]
        %v5505 = vld [vmem:[%s5328 + $0x28] sm:$0xf]
        %v5506 = vld [vmem:[%s5328 + $0x2c] sm:$0x1]
        %v5507 = vld [vmem:[%s5328 + $0x30] sm:$0xf]
        %v5508 = vld [vmem:[%s5328 + $0x34] sm:$0x1]
        %v5509 = vld [vmem:[%s5328 + $0x38] sm:$0xf]
        %v5510 = vld [vmem:[%s5328 + $0x3c] sm:$0x1]
        %v5511 = vld [vmem:[%s5328 + $0x50] sm:$0xf]
        %v5512 = vld [vmem:[%s5328 + $0x54] sm:$0x1]
        %v5513 = vld [vmem:[%s5328 + $0x58] sm:$0xf]
        %v5514 = vld [vmem:[%s5328 + $0x5c] sm:$0x1]
        %v5515 = vld [vmem:[%s5328 + $0x60] sm:$0xf]
        %v5516 = vld [vmem:[%s5328 + $0x64] sm:$0x1]
        %v5517 = vld [vmem:[%s5328 + $0x68] sm:$0xf]
        %v5518 = vld [vmem:[%s5328 + $0x6c] sm:$0x1]
        %v5519 = vld [vmem:[%s5328 + $0x70] sm:$0xf]
        %v5520 = vld [vmem:[%s5328 + $0x74] sm:$0x1]
        %v5521 = vld [vmem:[%s5328 + $0x78] sm:$0xf]
        %v5522 = vld [vmem:[%s5328 + $0x7c] sm:$0x1]
        %v5523 = vld [vmem:[%s5328 + $0x80] sm:$0xf]
        %v5524 = vld [vmem:[%s5328 + $0x84] sm:$0x1]
        %v5525 = vld [vmem:[%s5328 + $0x88] sm:$0xf]
        %v5526 = vld [vmem:[%s5328 + $0x8c] sm:$0x1]
        %v5527 = vunpack.c.l.bf16 %v5495
        %v5528 = vunpack.c.l.bf16 %v5496
        %v5529 = vunpack.c.l.bf16 %v5497
        %v5530 = vunpack.c.l.bf16 %v5498
        %v5531 = vunpack.c.l.bf16 %v5499
        %v5532 = vunpack.c.l.bf16 %v5500
        %v5533 = vunpack.c.l.bf16 %v5501
        %v5534 = vunpack.c.l.bf16 %v5502
        %v5535 = vunpack.c.l.bf16 %v5503
        %v5536 = vunpack.c.l.bf16 %v5504
        %v5537 = vunpack.c.l.bf16 %v5505
        %v5538 = vunpack.c.l.bf16 %v5506
        %v5539 = vunpack.c.l.bf16 %v5507
        %v5540 = vunpack.c.l.bf16 %v5508
        %v5541 = vunpack.c.l.bf16 %v5509
        %v5542 = vunpack.c.l.bf16 %v5510
        %v5543 = vunpack.c.l.bf16 %v5511
        %v5544 = vunpack.c.l.bf16 %v5512
        %v5545 = vunpack.c.l.bf16 %v5513
        %v5546 = vunpack.c.l.bf16 %v5514
        %v5547 = vunpack.c.l.bf16 %v5515
        %v5548 = vunpack.c.l.bf16 %v5516
        %v5549 = vunpack.c.l.bf16 %v5517
        %v5550 = vunpack.c.l.bf16 %v5518
        %v5551 = vunpack.c.l.bf16 %v5519
        %v5552 = vunpack.c.l.bf16 %v5520
        %v5553 = vunpack.c.l.bf16 %v5521
        %v5554 = vunpack.c.l.bf16 %v5522
        %v5555 = vunpack.c.l.bf16 %v5523
        %v5556 = vunpack.c.l.bf16 %v5524
        %v5557 = vunpack.c.l.bf16 %v5525
        %v5558 = vunpack.c.l.bf16 %v5526
        %v5591 = vrot.slane %v5527, 1
        %v5592 = vrot.slane %v5528, 1
        %v5593 = vsel %vm341, %v5591, %v5592
        %v5594 = vrot.slane %v5529, 1
        %v5595 = vrot.slane %v5530, 1
        %v5596 = vsel %vm341, %v5594, %v5595
        %v5597 = vrot.slane %v5531, 1
        %v5598 = vrot.slane %v5532, 1
        %v5599 = vsel %vm341, %v5597, %v5598
        %v5600 = vrot.slane %v5533, 1
        %v5601 = vrot.slane %v5534, 1
        %v5602 = vsel %vm341, %v5600, %v5601
        %v5603 = vrot.slane %v5535, 1
        %v5604 = vrot.slane %v5536, 1
        %v5605 = vsel %vm341, %v5603, %v5604
        %v5606 = vrot.slane %v5537, 1
        %v5607 = vrot.slane %v5538, 1
        %v5608 = vsel %vm341, %v5606, %v5607
        %v5609 = vrot.slane %v5539, 1
        %v5610 = vrot.slane %v5540, 1
        %v5611 = vsel %vm341, %v5609, %v5610
        %v5612 = vrot.slane %v5541, 1
        %v5613 = vrot.slane %v5542, 1
        %v5614 = vsel %vm341, %v5612, %v5613
        %v5615 = vrot.slane %v5543, 1
        %v5616 = vrot.slane %v5544, 1
        %v5617 = vsel %vm341, %v5615, %v5616
        %v5618 = vrot.slane %v5545, 1
        %v5619 = vrot.slane %v5546, 1
        %v5620 = vsel %vm341, %v5618, %v5619
        %v5621 = vrot.slane %v5547, 1
        %v5622 = vrot.slane %v5548, 1
        %v5623 = vsel %vm341, %v5621, %v5622
        %v5624 = vrot.slane %v5549, 1
        %v5625 = vrot.slane %v5550, 1
        %v5626 = vsel %vm341, %v5624, %v5625
        %v5627 = vrot.slane %v5551, 1
        %v5628 = vrot.slane %v5552, 1
        %v5629 = vsel %vm341, %v5627, %v5628
        %v5630 = vrot.slane %v5553, 1
        %v5631 = vrot.slane %v5554, 1
        %v5632 = vsel %vm341, %v5630, %v5631
        %v5633 = vrot.slane %v5555, 1
        %v5634 = vrot.slane %v5556, 1
        %v5635 = vsel %vm341, %v5633, %v5634
        %v5636 = vrot.slane %v5557, 1
        %v5637 = vrot.slane %v5558, 1
        %v5638 = vsel %vm341, %v5636, %v5637
        %s5639 = scalar_lea.vmem %s233, 100
        %v5640 = vld [vmem:[%s5639] sm:$0xf]
        %v5641 = vsel %vm392, %v5593, 0
        %v5643 = vsel %vm392, %v5596, 0
        %v5645 = vsel %vm392, %v5599, 0
        %v5647 = vsel %vm392, %v5602, 0
        %v5649 = vsel %vm392, %v5605, 0
        %v5651 = vsel %vm392, %v5608, 0
        %v5653 = vsel %vm392, %v5611, 0
        %v5655 = vsel %vm392, %v5614, 0
        %v5657 = vsel %vm392, %v5617, 0
        %v5659 = vsel %vm392, %v5620, 0
        %v5661 = vsel %vm392, %v5623, 0
        %v5663 = vsel %vm392, %v5626, 0
        %v5665 = vsel %vm392, %v5629, 0
        %v5667 = vsel %vm392, %v5632, 0
        %v5669 = vsel %vm392, %v5635, 0
        %v5671 = vsel %vm392, %v5638, 0
        %v5674 = vsel %vm425, %v5640, 0
        %5676 = vmatpush.msra.mxu0 0.0
        %5677 = vmatpush.msra.mxu0 0.0
        %5678 = vmatpush.msra.mxu0 0.0
        %5679 = vmatpush.msra.mxu0 0.0
        %5680 = vmatpush.msra.mxu0 0.0
        %5681 = vmatpush.msra.mxu0 0.0
        %5682 = vmatpush.msra.mxu0 0.0
        %5683 = vmatpush.msra.mxu0 0.0
        %5684 = vmatpush.msra.mxu0 0.0
        %5685 = vmatpush.msra.mxu0 0.0
        %5686 = vmatpush.msra.mxu0 0.0
        %5687 = vmatpush.msra.mxu0 0.0
        %5688 = vmatpush.msra.mxu0 0.0
        %5689 = vmatpush.msra.mxu0 0.0
        %5690 = vmatpush.msra.mxu0 0.0
        %5691 = vmatpush.msra.mxu0 %v5674
        %5692 = vmatmul.f32.gmra.mxu0 %v5641
        %v5693 = vpop.f32.mrf.mxu0
        %v5694 = vadd.f32 0.0, %v5693
        %5695 = vmatmul.f32.gmra.mxu0 %v5643
        %v5696 = vpop.f32.mrf.mxu0
        %v5697 = vadd.f32 0.0, %v5696
        %5698 = vmatmul.f32.gmra.mxu0 %v5645
        %v5699 = vpop.f32.mrf.mxu0
        %v5700 = vadd.f32 0.0, %v5699
        %5701 = vmatmul.f32.gmra.mxu0 %v5647
        %v5702 = vpop.f32.mrf.mxu0
        %v5703 = vadd.f32 0.0, %v5702
        %5704 = vmatmul.f32.gmra.mxu0 %v5649
        %v5705 = vpop.f32.mrf.mxu0
        %v5706 = vadd.f32 0.0, %v5705
        %5707 = vmatmul.f32.gmra.mxu0 %v5651
        %v5708 = vpop.f32.mrf.mxu0
        %v5709 = vadd.f32 0.0, %v5708
        %5710 = vmatmul.f32.gmra.mxu0 %v5653
        %v5711 = vpop.f32.mrf.mxu0
        %v5712 = vadd.f32 0.0, %v5711
        %5713 = vmatmul.f32.gmra.mxu0 %v5655
        %v5714 = vpop.f32.mrf.mxu0
        %v5715 = vadd.f32 0.0, %v5714
        %5716 = vmatmul.f32.gmra.mxu0 %v5657
        %v5717 = vpop.f32.mrf.mxu0
        %v5718 = vadd.f32 0.0, %v5717
        %5719 = vmatmul.f32.gmra.mxu0 %v5659
        %v5720 = vpop.f32.mrf.mxu0
        %v5721 = vadd.f32 0.0, %v5720
        %5722 = vmatmul.f32.gmra.mxu0 %v5661
        %v5723 = vpop.f32.mrf.mxu0
        %v5724 = vadd.f32 0.0, %v5723
        %5725 = vmatmul.f32.gmra.mxu0 %v5663
        %v5726 = vpop.f32.mrf.mxu0
        %v5727 = vadd.f32 0.0, %v5726
        %5728 = vmatmul.f32.gmra.mxu0 %v5665
        %v5729 = vpop.f32.mrf.mxu0
        %v5730 = vadd.f32 0.0, %v5729
        %5731 = vmatmul.f32.gmra.mxu0 %v5667
        %v5732 = vpop.f32.mrf.mxu0
        %v5733 = vadd.f32 0.0, %v5732
        %5734 = vmatmul.f32.gmra.mxu0 %v5669
        %v5735 = vpop.f32.mrf.mxu0
        %v5736 = vadd.f32 0.0, %v5735
        %5737 = vmatmul.f32.gmra.mxu0 %v5671
        %v5738 = vpop.f32.mrf.mxu0
        %v5739 = vadd.f32 0.0, %v5738
        %5740 = vdwg.mxu0
        %v5741 = vadd.f32 %v5479, %v5694
        %v5742 = vadd.f32 %v5480, %v5697
        %v5743 = vadd.f32 %v5481, %v5700
        %v5744 = vadd.f32 %v5482, %v5703
        %v5745 = vadd.f32 %v5483, %v5706
        %v5746 = vadd.f32 %v5484, %v5709
        %v5747 = vadd.f32 %v5485, %v5712
        %v5748 = vadd.f32 %v5486, %v5715
        %v5749 = vadd.f32 %v5487, %v5718
        %v5750 = vadd.f32 %v5488, %v5721
        %v5751 = vadd.f32 %v5489, %v5724
        %v5752 = vadd.f32 %v5490, %v5727
        %v5753 = vadd.f32 %v5491, %v5730
        %v5754 = vadd.f32 %v5492, %v5733
        %v5755 = vadd.f32 %v5493, %v5736
        %v5756 = vadd.f32 %v5494, %v5739
        %v5757 = vld [vmem:[%s5328] sm:$0xe]
        %v5758 = vld [vmem:[%s5328 + $0x8] sm:$0xe]
        %v5759 = vld [vmem:[%s5328 + $0x10] sm:$0xe]
        %v5760 = vld [vmem:[%s5328 + $0x18] sm:$0xe]
        %v5761 = vld [vmem:[%s5328 + $0x20] sm:$0xe]
        %v5762 = vld [vmem:[%s5328 + $0x28] sm:$0xe]
        %v5763 = vld [vmem:[%s5328 + $0x30] sm:$0xe]
        %v5764 = vld [vmem:[%s5328 + $0x38] sm:$0xe]
        %v5765 = vld [vmem:[%s5328 + $0x50] sm:$0xe]
        %v5766 = vld [vmem:[%s5328 + $0x58] sm:$0xe]
        %v5767 = vld [vmem:[%s5328 + $0x60] sm:$0xe]
        %v5768 = vld [vmem:[%s5328 + $0x68] sm:$0xe]
        %v5769 = vld [vmem:[%s5328 + $0x70] sm:$0xe]
        %v5770 = vld [vmem:[%s5328 + $0x78] sm:$0xe]
        %v5771 = vld [vmem:[%s5328 + $0x80] sm:$0xe]
        %v5772 = vld [vmem:[%s5328 + $0x88] sm:$0xe]
        %v5773 = vunpack.c.l.bf16 %v5757
        %v5774 = vunpack.c.l.bf16 %v5758
        %v5775 = vunpack.c.l.bf16 %v5759
        %v5776 = vunpack.c.l.bf16 %v5760
        %v5777 = vunpack.c.l.bf16 %v5761
        %v5778 = vunpack.c.l.bf16 %v5762
        %v5779 = vunpack.c.l.bf16 %v5763
        %v5780 = vunpack.c.l.bf16 %v5764
        %v5781 = vunpack.c.l.bf16 %v5765
        %v5782 = vunpack.c.l.bf16 %v5766
        %v5783 = vunpack.c.l.bf16 %v5767
        %v5784 = vunpack.c.l.bf16 %v5768
        %v5785 = vunpack.c.l.bf16 %v5769
        %v5786 = vunpack.c.l.bf16 %v5770
        %v5787 = vunpack.c.l.bf16 %v5771
        %v5788 = vunpack.c.l.bf16 %v5772
        %v5805 = vrot.slane %v5773, 2
        %v5806 = vrot.slane %v5528, 2
        %v5807 = vsel %vm642, %v5805, %v5806
        %v5808 = vrot.slane %v5774, 2
        %v5809 = vrot.slane %v5530, 2
        %v5810 = vsel %vm642, %v5808, %v5809
        %v5811 = vrot.slane %v5775, 2
        %v5812 = vrot.slane %v5532, 2
        %v5813 = vsel %vm642, %v5811, %v5812
        %v5814 = vrot.slane %v5776, 2
        %v5815 = vrot.slane %v5534, 2
        %v5816 = vsel %vm642, %v5814, %v5815
        %v5817 = vrot.slane %v5777, 2
        %v5818 = vrot.slane %v5536, 2
        %v5819 = vsel %vm642, %v5817, %v5818
        %v5820 = vrot.slane %v5778, 2
        %v5821 = vrot.slane %v5538, 2
        %v5822 = vsel %vm642, %v5820, %v5821
        %v5823 = vrot.slane %v5779, 2
        %v5824 = vrot.slane %v5540, 2
        %v5825 = vsel %vm642, %v5823, %v5824
        %v5826 = vrot.slane %v5780, 2
        %v5827 = vrot.slane %v5542, 2
        %v5828 = vsel %vm642, %v5826, %v5827
        %v5829 = vrot.slane %v5781, 2
        %v5830 = vrot.slane %v5544, 2
        %v5831 = vsel %vm642, %v5829, %v5830
        %v5832 = vrot.slane %v5782, 2
        %v5833 = vrot.slane %v5546, 2
        %v5834 = vsel %vm642, %v5832, %v5833
        %v5835 = vrot.slane %v5783, 2
        %v5836 = vrot.slane %v5548, 2
        %v5837 = vsel %vm642, %v5835, %v5836
        %v5838 = vrot.slane %v5784, 2
        %v5839 = vrot.slane %v5550, 2
        %v5840 = vsel %vm642, %v5838, %v5839
        %v5841 = vrot.slane %v5785, 2
        %v5842 = vrot.slane %v5552, 2
        %v5843 = vsel %vm642, %v5841, %v5842
        %v5844 = vrot.slane %v5786, 2
        %v5845 = vrot.slane %v5554, 2
        %v5846 = vsel %vm642, %v5844, %v5845
        %v5847 = vrot.slane %v5787, 2
        %v5848 = vrot.slane %v5556, 2
        %v5849 = vsel %vm642, %v5847, %v5848
        %v5850 = vrot.slane %v5788, 2
        %v5851 = vrot.slane %v5558, 2
        %v5852 = vsel %vm642, %v5850, %v5851
        %s5853 = scalar_lea.vmem %s233, 104
        %v5854 = vld [vmem:[%s5853] sm:$0xf]
        %v5855 = vsel %vm392, %v5807, 0
        %v5857 = vsel %vm392, %v5810, 0
        %v5859 = vsel %vm392, %v5813, 0
        %v5861 = vsel %vm392, %v5816, 0
        %v5863 = vsel %vm392, %v5819, 0
        %v5865 = vsel %vm392, %v5822, 0
        %v5867 = vsel %vm392, %v5825, 0
        %v5869 = vsel %vm392, %v5828, 0
        %v5871 = vsel %vm392, %v5831, 0
        %v5873 = vsel %vm392, %v5834, 0
        %v5875 = vsel %vm392, %v5837, 0
        %v5877 = vsel %vm392, %v5840, 0
        %v5879 = vsel %vm392, %v5843, 0
        %v5881 = vsel %vm392, %v5846, 0
        %v5883 = vsel %vm392, %v5849, 0
        %v5885 = vsel %vm392, %v5852, 0
        %v5888 = vsel %vm425, %v5854, 0
        %5890 = vmatpush.msra.mxu0 0.0
        %5891 = vmatpush.msra.mxu0 0.0
        %5892 = vmatpush.msra.mxu0 0.0
        %5893 = vmatpush.msra.mxu0 0.0
        %5894 = vmatpush.msra.mxu0 0.0
        %5895 = vmatpush.msra.mxu0 0.0
        %5896 = vmatpush.msra.mxu0 0.0
        %5897 = vmatpush.msra.mxu0 0.0
        %5898 = vmatpush.msra.mxu0 0.0
        %5899 = vmatpush.msra.mxu0 0.0
        %5900 = vmatpush.msra.mxu0 0.0
        %5901 = vmatpush.msra.mxu0 0.0
        %5902 = vmatpush.msra.mxu0 0.0
        %5903 = vmatpush.msra.mxu0 0.0
        %5904 = vmatpush.msra.mxu0 0.0
        %5905 = vmatpush.msra.mxu0 %v5888
        %5906 = vmatmul.f32.gmra.mxu0 %v5855
        %v5907 = vpop.f32.mrf.mxu0
        %v5908 = vadd.f32 0.0, %v5907
        %5909 = vmatmul.f32.gmra.mxu0 %v5857
        %v5910 = vpop.f32.mrf.mxu0
        %v5911 = vadd.f32 0.0, %v5910
        %5912 = vmatmul.f32.gmra.mxu0 %v5859
        %v5913 = vpop.f32.mrf.mxu0
        %v5914 = vadd.f32 0.0, %v5913
        %5915 = vmatmul.f32.gmra.mxu0 %v5861
        %v5916 = vpop.f32.mrf.mxu0
        %v5917 = vadd.f32 0.0, %v5916
        %5918 = vmatmul.f32.gmra.mxu0 %v5863
        %v5919 = vpop.f32.mrf.mxu0
        %v5920 = vadd.f32 0.0, %v5919
        %5921 = vmatmul.f32.gmra.mxu0 %v5865
        %v5922 = vpop.f32.mrf.mxu0
        %v5923 = vadd.f32 0.0, %v5922
        %5924 = vmatmul.f32.gmra.mxu0 %v5867
        %v5925 = vpop.f32.mrf.mxu0
        %v5926 = vadd.f32 0.0, %v5925
        %5927 = vmatmul.f32.gmra.mxu0 %v5869
        %v5928 = vpop.f32.mrf.mxu0
        %v5929 = vadd.f32 0.0, %v5928
        %5930 = vmatmul.f32.gmra.mxu0 %v5871
        %v5931 = vpop.f32.mrf.mxu0
        %v5932 = vadd.f32 0.0, %v5931
        %5933 = vmatmul.f32.gmra.mxu0 %v5873
        %v5934 = vpop.f32.mrf.mxu0
        %v5935 = vadd.f32 0.0, %v5934
        %5936 = vmatmul.f32.gmra.mxu0 %v5875
        %v5937 = vpop.f32.mrf.mxu0
        %v5938 = vadd.f32 0.0, %v5937
        %5939 = vmatmul.f32.gmra.mxu0 %v5877
        %v5940 = vpop.f32.mrf.mxu0
        %v5941 = vadd.f32 0.0, %v5940
        %5942 = vmatmul.f32.gmra.mxu0 %v5879
        %v5943 = vpop.f32.mrf.mxu0
        %v5944 = vadd.f32 0.0, %v5943
        %5945 = vmatmul.f32.gmra.mxu0 %v5881
        %v5946 = vpop.f32.mrf.mxu0
        %v5947 = vadd.f32 0.0, %v5946
        %5948 = vmatmul.f32.gmra.mxu0 %v5883
        %v5949 = vpop.f32.mrf.mxu0
        %v5950 = vadd.f32 0.0, %v5949
        %5951 = vmatmul.f32.gmra.mxu0 %v5885
        %v5952 = vpop.f32.mrf.mxu0
        %v5953 = vadd.f32 0.0, %v5952
        %5954 = vdwg.mxu0
        %v5955 = vadd.f32 %v5741, %v5908
        %v5956 = vadd.f32 %v5742, %v5911
        %v5957 = vadd.f32 %v5743, %v5914
        %v5958 = vadd.f32 %v5744, %v5917
        %v5959 = vadd.f32 %v5745, %v5920
        %v5960 = vadd.f32 %v5746, %v5923
        %v5961 = vadd.f32 %v5747, %v5926
        %v5962 = vadd.f32 %v5748, %v5929
        %v5963 = vadd.f32 %v5749, %v5932
        %v5964 = vadd.f32 %v5750, %v5935
        %v5965 = vadd.f32 %v5751, %v5938
        %v5966 = vadd.f32 %v5752, %v5941
        %v5967 = vadd.f32 %v5753, %v5944
        %v5968 = vadd.f32 %v5754, %v5947
        %v5969 = vadd.f32 %v5755, %v5950
        %v5970 = vadd.f32 %v5756, %v5953
        %v5971 = vld [vmem:[%s238] sm:$0x1]
        %v5973 = vperm.slane %v5971, 0
        %v5975 = vadd.f32 %v5955, %v5973
        %v5976 = vadd.f32 %v5956, %v5973
        %v5977 = vadd.f32 %v5957, %v5973
        %v5978 = vadd.f32 %v5958, %v5973
        %v5979 = vadd.f32 %v5959, %v5973
        %v5980 = vadd.f32 %v5960, %v5973
        %v5981 = vadd.f32 %v5961, %v5973
        %v5982 = vadd.f32 %v5962, %v5973
        %v5983 = vadd.f32 %v5963, %v5973
        %v5984 = vadd.f32 %v5964, %v5973
        %v5985 = vadd.f32 %v5965, %v5973
        %v5986 = vadd.f32 %v5966, %v5973
        %v5987 = vadd.f32 %v5967, %v5973
        %v5988 = vadd.f32 %v5968, %v5973
        %v5989 = vadd.f32 %v5969, %v5973
        %v5990 = vadd.f32 %v5970, %v5973
        %5991 = vxpose.xlu0.b32.start [1/16] %v5975, 128
        %5992 = vxpose.xlu0.b32.cont [2/16] %v5976, 128
        %5993 = vxpose.xlu0.b32.cont [3/16] %v5977, 128
        %5994 = vxpose.xlu0.b32.cont [4/16] %v5978, 128
        %5995 = vxpose.xlu0.b32.cont [5/16] %v5979, 128
        %5996 = vxpose.xlu0.b32.cont [6/16] %v5980, 128
        %5997 = vxpose.xlu0.b32.cont [7/16] %v5981, 128
        %5998 = vxpose.xlu0.b32.cont [8/16] %v5982, 128
        %5999 = vxpose.xlu0.b32.cont [9/16] %v5983, 128
        %6000 = vxpose.xlu0.b32.cont [10/16] %v5984, 128
        %6001 = vxpose.xlu0.b32.cont [11/16] %v5985, 128
        %6002 = vxpose.xlu0.b32.cont [12/16] %v5986, 128
        %6003 = vxpose.xlu0.b32.cont [13/16] %v5987, 128
        %6004 = vxpose.xlu0.b32.cont [14/16] %v5988, 128
        %6005 = vxpose.xlu0.b32.cont [15/16] %v5989, 128
        %6006 = vxpose.xlu0.b32.end [16/16] %v5990, 128
        %v6007 = vpop.trf.xlu0
        %v6008 = vpop.trf.xlu0
        %v6009 = vpop.trf.xlu0
        %v6010 = vpop.trf.xlu0
        %v6011 = vpop.trf.xlu0
        %v6012 = vpop.trf.xlu0
        %v6013 = vpop.trf.xlu0
        %v6014 = vpop.trf.xlu0
        %v6015 = vpop.trf.xlu0
        %v6016 = vpop.trf.xlu0
        %v6017 = vpop.trf.xlu0
        %v6018 = vpop.trf.xlu0
        %v6019 = vpop.trf.xlu0
        %v6020 = vpop.trf.xlu0
        %v6021 = vpop.trf.xlu0
        %v6022 = vpop.trf.xlu0
        %6023 = vst [vmem:[%s222] sm:$0xff] %v6007
        %s6024 = sand.u32 %s130, 1
        %s6025 = scalar_lea.sflag [#allocation5], %s6024
        %s6026 = sand.u32 %s130, 1
        %s6027 = smul.addr %s6026, 8
        %s6028 = scalar_lea.vmem [#allocation4], %s6027
        // Predicated region
        $region33: #{tpu_custom_call.1} parent=31 // pred_check
          %p6029 = pneg %p140
        $region34: #{tpu_custom_call.1} parent=31 // pred_check_branch
          %6031 = sbr.rel (%p6029) target = $region36
        $region35: #{tpu_custom_call.1} parent=31 // pred_region
          %6033 = vsyncadd %s6025, 0
          %s6034 = smul.addr %s30, 4
          %s6035 = sadd.s32 %s31, %s6034
          %s6036 = smul.addr %s6035, 8
          %s6037 = scalar_lea.hbm %s4, %s6036
          %s6039 = sshll.u32 %s6028, 4
          %s6040 = int_to_ptr.vmem [resolvable:$true] %s6039
          %s6041 = sshll.u32 %s6037, 4
          %s6042 = int_to_ptr.hbm [resolvable:$true] %s6041
          %6044 = dma.vmem_to_hbm [thread:$0]  %s6040, 128, %s6042, %s6025
        $region36: #{tpu_custom_call.1} parent=31 // pred_fallthru
          _
      $region32: #{tpu_custom_call.1} parent=5 // pred_fallthru
        _
      %p6045 = scmp.le.s32.totalorder 2, %s21
      // Predicated region
      $region37: #{tpu_custom_call.1} parent=5 // pred_check
        %p6046 = pneg %p6045
      $region38: #{tpu_custom_call.1} parent=5 // pred_check_branch
        %6048 = sbr.rel (%p6046) target = $region40
      $region39: #{tpu_custom_call.1} parent=5 // pred_region
        %s6049 = ssub.s32 %s21, 2
        // Predicated region
        $region41: #{tpu_custom_call.1} parent=39 // pred_check
          %p6050 = pneg %p146
        $region42: #{tpu_custom_call.1} parent=39 // pred_check_branch
          %6052 = sbr.rel (%p6050) target = $region44
        $region43: #{tpu_custom_call.1} parent=39 // pred_region
          %s6053 = sand.u32 %s131, 1
          %s6054 = scalar_lea.sflag [#allocation5], %s6053
          %s6055 = sand.u32 %s131, 1
          %s6056 = smul.addr %s6055, 8
          %s6057 = scalar_lea.vmem [#allocation4], %s6056
          %6059 = dma.done %s6054, 128
        $region44: #{tpu_custom_call.1} parent=39 // pred_fallthru
          _
      $region40: #{tpu_custom_call.1} parent=5 // pred_fallthru
        _
    $region6: #{tpu_custom_call.1} parent=1 // loop_footer
      %s25 = sadd.s32 1, %s21
    $region7: #{tpu_custom_call.1} parent=1 // loop_footer_branch
      %20 = sbr.rel target = $region3
    $region8: #{tpu_custom_call.1} parent=1 // loop_exit
      _
    %6060 = vsyncpa [#allocation5], 1
    %s6061 = scalar_lea.sflag [#allocation5], 1
    %6062 = vsyncpa %s6061, 1

</llo_original>
